<compile_context>
chip_gen: v5e
topology: v5e:2x2
jax: 0.10.0
libtpu: 0.0.40
codegen_flags: <defaults>
</compile_context>

<pallas_src>
import math

import jax
import jax.numpy as jnp
from jax.experimental import pallas as pl
from jax.experimental.pallas import tpu as pltpu


_LPAD = 8                      # interior column offset in the scratch window
_MXU_DTYPE = jnp.bfloat16      # operand dtype for the two pointwise matmuls


def _gelu_exact(x):
    # PyTorch nn.GELU() default: exact erf-based GELU.
    return 0.5 * x * (1.0 + jax.lax.erf(x * (1.0 / math.sqrt(2.0))))


def convnext_block_kernel(x_ref, halo_ref, dw_w_ref, dw_b_ref, ln_w_ref,
                          ln_b_ref, w1_ref, b1_ref, w2_ref, b2_ref, gamma_ref,
                          out_ref, win_ref, xn_ref):
    # x_ref    : (TH, W, C)   this tile's input rows (also the residual)
    # halo_ref : (6, W, C)    rows above (0:3) and below (3:6) this tile
    # dw_w_ref : (49, C)      depthwise weights, row k = kh*7 + kw
    # dw_b/ln_w/ln_b/b2/gamma: (1, C);  b1: (1, 4C)
    # w1_ref   : (C, 4C) bf16,  w2_ref : (4C, C) bf16
    # out_ref  : (TH, W, C)
    # win_ref  : (TH+6, _LPAD+W+8, C) f32 scratch (halo window)
    # xn_ref   : (TH, W, C) bf16 scratch (LayerNorm output / MXU input)
    TH, W, C = out_ref.shape
    WWIN = win_ref.shape[1]

    # ---- assemble the halo window in VMEM ----------------------------------
    # Zero column borders (covers the 3-column conv padding; interior starts at
    # the sublane-aligned offset _LPAD so the big store below is unmasked).
    win_ref[:, 0:_LPAD, :] = jnp.zeros((TH + 6, _LPAD, C), jnp.float32)
    win_ref[:, _LPAD + W:, :] = jnp.zeros((TH + 6, WWIN - _LPAD - W, C),
                                          jnp.float32)
    # Rows: 3 halo rows above, the TH tile rows, 3 halo rows below.
    win_ref[0:3, _LPAD:_LPAD + W, :] = halo_ref[0:3, :, :]
    win_ref[3:3 + TH, _LPAD:_LPAD + W, :] = x_ref[...]
    win_ref[3 + TH:, _LPAD:_LPAD + W, :] = halo_ref[3:6, :, :]

    # Small per-channel params, loaded once (stay VMEM/vreg resident).
    w_taps = dw_w_ref[...]      # (49, C)
    dw_b = dw_b_ref[...]        # (1, C)
    ln_w = ln_w_ref[...]        # (1, C)
    ln_b = ln_b_ref[...]        # (1, C)

    # ---- depthwise 7x7 conv + LayerNorm, one output row at a time ----------
    # The (W, C) row accumulator stays vreg-resident across the 49 taps (no
    # partial-accumulator VMEM round-trips), per the perf review.
    def row_body(t, carry):
        acc = jnp.zeros((W, C), jnp.float32)
        for kh in range(7):
            row = win_ref[t + kh]                         # (WWIN, C)
            for kw in range(7):
                k = kh * 7 + kw
                tap = row[_LPAD - 3 + kw:_LPAD - 3 + kw + W, :]   # (W, C)
                acc = acc + tap * w_taps[k:k + 1, :]
        acc = acc + dw_b

        # LayerNorm over channels (channels_last), eps=1e-6, biased variance.
        mean = jnp.mean(acc, axis=-1, keepdims=True)
        cen = acc - mean
        var = jnp.mean(cen * cen, axis=-1, keepdims=True)
        xn = cen * jax.lax.rsqrt(var + 1e-6)
        xn = xn * ln_w + ln_b
        xn_ref[t] = xn.astype(_MXU_DTYPE)
        return carry

    jax.lax.fori_loop(0, TH, row_body, 0)

    # ---- pointwise MLP on the MXU (bf16 operands, f32 accumulation) --------
    xf = xn_ref[...].reshape(TH * W, C)
    h = jnp.dot(xf, w1_ref[...], preferred_element_type=jnp.float32)
    h = h + b1_ref[...]
    h = _gelu_exact(h)                       # exact erf GELU (nn.GELU default)
    y = jnp.dot(h.astype(_MXU_DTYPE), w2_ref[...],
                preferred_element_type=jnp.float32)
    y = y + b2_ref[...]

    # Layer scale + residual (residual is this tile's own input rows).
    y = y * gamma_ref[...]
    out_ref[...] = x_ref[...] + y.reshape(TH, W, C)


def _vmem_limits():
    """Returns (vmem_limit_bytes or None, tile-chooser budget in bytes)."""
    try:
        cap = int(pltpu.get_tpu_info().vmem_capacity_bytes)
    except Exception:
        # Unknown generation: don't override the compiler's scoped default,
        # and size tiles conservatively.
        return None, 12 * 1024 * 1024
    # ~108 MiB on the 128 MiB generations (v5e/v6e), ~54 MiB on v7x (64 MiB).
    limit = min(int(cap * 0.85), cap - 4 * 1024 * 1024)
    return limit, int(limit * 0.9)


def _pick_tile_rows(N, H, W, C, budget):
    """Largest row-tile TH (a divisor of H, >= 3) whose per-step VMEM working
    set fits `budget`, preferring MXU-friendly and megacore-friendly tiles."""
    wwin = _LPAD + W + 8

    def vmem_bytes(th):
        mid_in = 2 * th * W * C * 4             # double-buffered input tile
        halo_in = 2 * 6 * W * C * 4             # double-buffered halo block
        out_b = 2 * th * W * C * 4              # double-buffered output tile
        weights = 2 * (49 * C * 4 + 5 * C * 4 + 4 * C * 4   # dw_w + (1,C)x5 + b1
                       + 16 * C * C)                        # w1 + w2 in bf16
        win = (th + 6) * wwin * C * 4           # halo window scratch
        xn = th * W * C * 2                     # bf16 MXU-input scratch
        temps = th * W * 4 * C * 4 + th * W * C * 4   # h / y value temporaries
        return mid_in + halo_in + out_b + weights + win + xn + temps

    divisors = [d for d in range(3, H + 1) if H % d == 0]
    if not divisors:
        return H
    fitting = [d for d in divisors if vmem_bytes(d) <= budget]
    if not fitting:
        return divisors[0]      # smallest legal tile; compile fails loudly if too big

    def steps_ok(d):            # keep >= 2 grid steps so both v7x TCs get work
        return N * (H // d) >= 2

    def align_ok(d):            # (TH*W) % 8 == 0 -> free reshape, good MXU M dim
        return (d * W) % 8 == 0

    for pred in ((lambda d: steps_ok(d) and align_ok(d)),
                 (lambda d: align_ok(d)),
                 (lambda d: True)):
        cands = [d for d in fitting if pred(d)]
        if cands:
            return max(cands)
    return max(fitting)


def convnext_block(x_nchw, params, tile_rows=None):
    """x_nchw: (N, C, H, W) float32. Returns (N, C, H, W) float32."""
    N, C, H, W = x_nchw.shape
    x = jnp.transpose(x_nchw, (0, 2, 3, 1)).astype(jnp.float32)   # NHWC

    vmem_limit, budget = _vmem_limits()
    TH = tile_rows if tile_rows is not None else _pick_tile_rows(N, H, W, C, budget)
    assert 3 <= TH <= H and H % TH == 0, (H, TH)
    T = H // TH

    # Precomputed halo tensor: for every row-tile, the 3 rows above and the
    # 3 rows below (zeros at the image top/bottom).  ~6/TH of an activation
    # pass; replaces the old 3x-duplicated input streams and the jnp.pad pass.
    xr = x.reshape(N, T, TH, W, C)
    zero3 = jnp.zeros((N, 1, 3, W, C), jnp.float32)
    above = jnp.concatenate([zero3, xr[:, :-1, TH - 3:, :, :]], axis=1)
    below = jnp.concatenate([xr[:, 1:, :3, :, :], zero3], axis=1)
    halo = jnp.concatenate([above, below], axis=2).reshape(N * T, 6, W, C)

    # bf16 weights for the MXU matmuls (halves their DMA / VMEM footprint);
    # accumulation stays f32 inside the kernel.
    w1 = params["w1"].astype(_MXU_DTYPE)
    w2 = params["w2"].astype(_MXU_DTYPE)

    def const_spec(shape):
        # Grid-invariant weights/biases: constant index map, so Pallas never
        # re-streams them across grid steps.
        return pl.BlockSpec(shape, lambda n, i: (0, 0))

    cp_kwargs = dict(dimension_semantics=("parallel", "parallel"))
    if vmem_limit is not None:
        cp_kwargs["vmem_limit_bytes"] = vmem_limit

    # TODO(synk): if xprof on v5e still shows exposed input DMA, add
    # pipeline_mode=pl.Buffered(3) to the activation BlockSpec below.
    out_nhwc = pl.pallas_call(
        convnext_block_kernel,
        out_shape=jax.ShapeDtypeStruct((N, H, W, C), jnp.float32),
        grid=(N, T),
        in_specs=[
            pl.BlockSpec((None, TH, W, C), lambda n, i: (n, i, 0, 0)),        # x tile
            pl.BlockSpec((None, 6, W, C), lambda n, i: (n * T + i, 0, 0, 0)), # halo
            const_spec((49, C)),        # dw_w
            const_spec((1, C)),         # dw_b
            const_spec((1, C)),         # ln_w
            const_spec((1, C)),         # ln_b
            const_spec((C, 4 * C)),     # w1 (bf16)
            const_spec((1, 4 * C)),     # b1
            const_spec((4 * C, C)),     # w2 (bf16)
            const_spec((1, C)),         # b2
            const_spec((1, C)),         # gamma (layer scale)
        ],
        out_specs=pl.BlockSpec((None, TH, W, C), lambda n, i: (n, i, 0, 0)),
        scratch_shapes=[
            pltpu.VMEM((TH + 6, _LPAD + W + 8, C), jnp.float32),  # halo window
            pltpu.VMEM((TH, W, C), _MXU_DTYPE),                   # LN output
        ],
        compiler_params=pltpu.CompilerParams(**cp_kwargs),
    )(x, halo,
      params["dw_w"], params["dw_b"],
      params["ln_w"], params["ln_b"],
      w1, params["b1"],
      w2, params["b2"],
      params["gamma"])

    return jnp.transpose(out_nhwc, (0, 3, 1, 2))


def reference_forward(x_nchw, params):
    """Pure-JAX f32 reference mirroring the PyTorch forward (verification)."""
    N, C, H, W = x_nchw.shape
    x = x_nchw.astype(jnp.float32)
    dw = params["dw_w"].reshape(7, 7, C)                  # (kh, kw, C)
    w_oihw = jnp.transpose(dw, (2, 0, 1))[:, None, :, :]  # (C, 1, 7, 7)
    y = jax.lax.conv_general_dilated(
        x, w_oihw, window_strides=(1, 1), padding=((3, 3), (3, 3)),
        dimension_numbers=("NCHW", "OIHW", "NCHW"), feature_group_count=C)
    y = y + params["dw_b"].reshape(1, C, 1, 1)
    y = jnp.transpose(y, (0, 2, 3, 1))                    # NHWC
    mean = y.mean(-1, keepdims=True)
    var = ((y - mean) ** 2).mean(-1, keepdims=True)
    y = (y - mean) / jnp.sqrt(var + 1e-6)
    y = y * params["ln_w"].reshape(-1) + params["ln_b"].reshape(-1)
    y = y @ params["w1"] + params["b1"].reshape(-1)
    y = _gelu_exact(y)
    y = y @ params["w2"] + params["b2"].reshape(-1)
    y = y * params["gamma"].reshape(-1)
    y = jnp.transpose(y, (0, 3, 1, 2))                    # back to NCHW
    return x + y


def init_params(key, dim):
    ks = jax.random.split(key, 6)
    params = {
        # depthwise conv weight: PyTorch (dim, 1, 7, 7) -> stored as (49, dim)
        "dw_w": (0.1 * jax.random.normal(ks[0], (7, 7, dim), jnp.float32)
                 ).reshape(49, dim),
        "dw_b": 0.1 * jax.random.normal(ks[1], (1, dim), jnp.float32),
        # LayerNorm affine params
        "ln_w": jnp.ones((1, dim), jnp.float32),
        "ln_b": jnp.zeros((1, dim), jnp.float32),
        # pwconv1: nn.Linear(dim, 4*dim); stored transposed for x @ W
        "w1": 0.1 * jax.random.normal(ks[2], (dim, 4 * dim), jnp.float32),
        "b1": 0.1 * jax.random.normal(ks[3], (1, 4 * dim), jnp.float32),
        # pwconv2: nn.Linear(4*dim, dim)
        "w2": 0.1 * jax.random.normal(ks[4], (4 * dim, dim), jnp.float32),
        "b2": 0.1 * jax.random.normal(ks[5], (1, dim), jnp.float32),
        # layer scale init 1e-6 (module default)
        "gamma": 1e-6 * jnp.ones((1, dim), jnp.float32),
    }
    return params


if __name__ == "__main__":
    key = jax.random.PRNGKey(0)
    k_x, k_p = jax.random.split(key)

    N, dim, H, W = 2, 8, 16, 16
    x = jax.random.normal(k_x, (N, dim, H, W), jnp.float32)   # NCHW like PyTorch
    params = init_params(k_p, dim)

    # 1) Default config (gamma=1e-6, auto tile chooser -> TH=16, grid (2, 1)).
    out = jax.block_until_ready(convnext_block(x, params))
    ref = jax.block_until_ready(reference_forward(x, params))
    assert out.shape == (N, dim, H, W)
    assert jnp.allclose(out, ref, atol=1e-4, rtol=1e-4), (
        float(jnp.max(jnp.abs(out - ref))))

    # 2) Stronger check: gamma=1 so the MLP branch is not scaled down to 1e-6
    #    (bf16-matmul error would otherwise be invisible), and a different row
    #    tiling (TH=4 -> 4 row tiles) to exercise halo stitching.  Tolerance is
    #    loosened for the intentional bf16 MXU matmuls (f32 accumulation).
    params_g1 = dict(params)
    params_g1["gamma"] = jnp.ones((1, dim), jnp.float32)
    out1 = jax.block_until_ready(convnext_block(x, params_g1, tile_rows=4))
    ref1 = jax.block_until_ready(reference_forward(x, params_g1))
    assert jnp.allclose(out1, ref1, atol=2e-2, rtol=2e-2), (
        float(jnp.max(jnp.abs(out1 - ref1))))

    print("KERNEL_OK")
</pallas_src>

<mosaic_0001>
module attributes {stable_mosaic.version = 11 : i64} {
  func.func @convnext_block_kernel(%arg0: i32, %arg1: i32, %arg2: memref<1x16x16x8xf32, #tpu.memory_space<vmem>>, %arg3: memref<1x6x16x8xf32, #tpu.memory_space<vmem>>, %arg4: memref<49x8xf32, #tpu.memory_space<vmem>>, %arg5: memref<1x8xf32, #tpu.memory_space<vmem>>, %arg6: memref<1x8xf32, #tpu.memory_space<vmem>>, %arg7: memref<1x8xf32, #tpu.memory_space<vmem>>, %arg8: memref<8x32xbf16, #tpu.memory_space<vmem>>, %arg9: memref<1x32xf32, #tpu.memory_space<vmem>>, %arg10: memref<32x8xbf16, #tpu.memory_space<vmem>>, %arg11: memref<1x8xf32, #tpu.memory_space<vmem>>, %arg12: memref<1x8xf32, #tpu.memory_space<vmem>>, %arg13: memref<1x16x16x8xf32, #tpu.memory_space<vmem>>, %arg14: memref<22x32x8xf32, #tpu.memory_space<vmem>>, %arg15: memref<16x16x8xbf16, #tpu.memory_space<vmem>>) attributes {dimension_semantics = [#tpu.dimension_semantics<parallel>, #tpu.dimension_semantics<parallel>], iteration_bounds = array<i64: 2, 1>, scalar_prefetch = 0 : i64, scratch_operands = 2 : i64, tpu.core_type = #tpu.core_type<tc>, window_params = [{transform_indices = @transform_0, window_bounds = array<i64: 1, 16, 16, 8>}, {transform_indices = @transform_1, window_bounds = array<i64: 1, 6, 16, 8>}, {pipeline_mode = #tpu.pipeline_mode<synchronous>, transform_indices = @transform_2, window_bounds = array<i64: 49, 8>}, {pipeline_mode = #tpu.pipeline_mode<synchronous>, transform_indices = @transform_3, window_bounds = array<i64: 1, 8>}, {pipeline_mode = #tpu.pipeline_mode<synchronous>, transform_indices = @transform_4, window_bounds = array<i64: 1, 8>}, {pipeline_mode = #tpu.pipeline_mode<synchronous>, transform_indices = @transform_5, window_bounds = array<i64: 1, 8>}, {pipeline_mode = #tpu.pipeline_mode<synchronous>, transform_indices = @transform_6, window_bounds = array<i64: 8, 32>}, {pipeline_mode = #tpu.pipeline_mode<synchronous>, transform_indices = @transform_7, window_bounds = array<i64: 1, 32>}, {pipeline_mode = #tpu.pipeline_mode<synchronous>, transform_indices = @transform_8, window_bounds = array<i64: 32, 8>}, {pipeline_mode = #tpu.pipeline_mode<synchronous>, transform_indices = @transform_9, window_bounds = array<i64: 1, 8>}, {pipeline_mode = #tpu.pipeline_mode<synchronous>, transform_indices = @transform_10, window_bounds = array<i64: 1, 8>}, {transform_indices = @transform_11, window_bounds = array<i64: 1, 16, 16, 8>}]} {
    %cst = arith.constant 0.000000e+00 : f32
    %0 = vector.broadcast %cst : f32 to vector<22x8x8xf32>
    %c0 = arith.constant 0 : index
    %c0_0 = arith.constant 0 : index
    %c0_1 = arith.constant 0 : index
    %1 = vector.load %arg14[%c0, %c0_0, %c0_1] : memref<22x32x8xf32, #tpu.memory_space<vmem>>, vector<22x8x8xf32>
    tpu.vector_store %arg14[%c0, %c0_0, %c0_1], %0 {strides = array<i32>} : memref<22x32x8xf32, #tpu.memory_space<vmem>>, vector<22x8x8xf32>,
    %cst_2 = arith.constant 0.000000e+00 : f32
    %2 = vector.broadcast %cst_2 : f32 to vector<22x8x8xf32>
    %c0_3 = arith.constant 0 : index
    %c24 = arith.constant 24 : index
    %c0_4 = arith.constant 0 : index
    %3 = vector.load %arg14[%c0_3, %c24, %c0_4] : memref<22x32x8xf32, #tpu.memory_space<vmem>>, vector<22x8x8xf32>
    tpu.vector_store %arg14[%c0_3, %c24, %c0_4], %2 {strides = array<i32>} : memref<22x32x8xf32, #tpu.memory_space<vmem>>, vector<22x8x8xf32>,
    %c0_5 = arith.constant 0 : index
    %c0_6 = arith.constant 0 : index
    %c0_7 = arith.constant 0 : index
    %c0_8 = arith.constant 0 : index
    %4 = vector.load %arg3[%c0_5, %c0_6, %c0_7, %c0_8] : memref<1x6x16x8xf32, #tpu.memory_space<vmem>>, vector<1x3x16x8xf32>
    %5 = vector.shape_cast %4 : vector<1x3x16x8xf32> to vector<3x16x8xf32>
    %c0_9 = arith.constant 0 : index
    %c8 = arith.constant 8 : index
    %c0_10 = arith.constant 0 : index
    %6 = vector.load %arg14[%c0_9, %c8, %c0_10] : memref<22x32x8xf32, #tpu.memory_space<vmem>>, vector<3x16x8xf32>
    tpu.vector_store %arg14[%c0_9, %c8, %c0_10], %5 {strides = array<i32>} : memref<22x32x8xf32, #tpu.memory_space<vmem>>, vector<3x16x8xf32>,
    %c0_11 = arith.constant 0 : index
    %c0_12 = arith.constant 0 : index
    %c0_13 = arith.constant 0 : index
    %c0_14 = arith.constant 0 : index
    %7 = vector.load %arg2[%c0_11, %c0_12, %c0_13, %c0_14] : memref<1x16x16x8xf32, #tpu.memory_space<vmem>>, vector<1x16x16x8xf32>
    %8 = vector.shape_cast %7 : vector<1x16x16x8xf32> to vector<16x16x8xf32>
    %c3 = arith.constant 3 : index
    %c8_15 = arith.constant 8 : index
    %c0_16 = arith.constant 0 : index
    %9 = vector.load %arg14[%c3, %c8_15, %c0_16] : memref<22x32x8xf32, #tpu.memory_space<vmem>>, vector<16x16x8xf32>
    tpu.vector_store %arg14[%c3, %c8_15, %c0_16], %8 {strides = array<i32>} : memref<22x32x8xf32, #tpu.memory_space<vmem>>, vector<16x16x8xf32>,
    %c0_17 = arith.constant 0 : index
    %c3_18 = arith.constant 3 : index
    %c0_19 = arith.constant 0 : index
    %c0_20 = arith.constant 0 : index
    %10 = vector.load %arg3[%c0_17, %c3_18, %c0_19, %c0_20] : memref<1x6x16x8xf32, #tpu.memory_space<vmem>>, vector<1x3x16x8xf32>
    %11 = vector.shape_cast %10 : vector<1x3x16x8xf32> to vector<3x16x8xf32>
    %c19 = arith.constant 19 : index
    %c8_21 = arith.constant 8 : index
    %c0_22 = arith.constant 0 : index
    %12 = vector.load %arg14[%c19, %c8_21, %c0_22] : memref<22x32x8xf32, #tpu.memory_space<vmem>>, vector<3x16x8xf32>
    tpu.vector_store %arg14[%c19, %c8_21, %c0_22], %11 {strides = array<i32>} : memref<22x32x8xf32, #tpu.memory_space<vmem>>, vector<3x16x8xf32>,
    %c0_23 = arith.constant 0 : index
    %c0_24 = arith.constant 0 : index
    %13 = vector.load %arg4[%c0_23, %c0_24] : memref<49x8xf32, #tpu.memory_space<vmem>>, vector<49x8xf32>
    %c0_25 = arith.constant 0 : index
    %c0_26 = arith.constant 0 : index
    %14 = vector.load %arg5[%c0_25, %c0_26] : memref<1x8xf32, #tpu.memory_space<vmem>>, vector<1x8xf32>
    %c0_27 = arith.constant 0 : index
    %c0_28 = arith.constant 0 : index
    %15 = vector.load %arg6[%c0_27, %c0_28] : memref<1x8xf32, #tpu.memory_space<vmem>>, vector<1x8xf32>
    %c0_29 = arith.constant 0 : index
    %c0_30 = arith.constant 0 : index
    %16 = vector.load %arg7[%c0_29, %c0_30] : memref<1x8xf32, #tpu.memory_space<vmem>>, vector<1x8xf32>
    %c0_i32 = arith.constant 0 : i32
    %c16_i32 = arith.constant 16 : i32
    %17 = arith.addi %c0_i32, %c16_i32 : i32
    %c1_i32 = arith.constant 1 : i32
    scf.for %arg16 = %c0_i32 to %17 step %c1_i32  : i32 {
      %cst_58 = arith.constant 0.000000e+00 : f32
      %49 = vector.broadcast %cst_58 : f32 to vector<16x8xf32>
      %c0_i32_59 = arith.constant 0 : i32
      %50 = arith.addi %arg16, %c0_i32_59 : i32
      %51 = arith.index_cast %50 : i32 to index
      %c0_60 = arith.constant 0 : index
      %c0_61 = arith.constant 0 : index
      %52 = vector.load %arg14[%51, %c0_60, %c0_61] : memref<22x32x8xf32, #tpu.memory_space<vmem>>, vector<1x32x8xf32>
      %53 = vector.shape_cast %52 : vector<1x32x8xf32> to vector<32x8xf32>
      %54 = vector.extract_strided_slice %53 {offsets = [5, 0], sizes = [16, 8], strides = [1, 1]} : vector<32x8xf32> to vector<16x8xf32>
      %55 = vector.extract_strided_slice %13 {offsets = [0, 0], sizes = [1, 8], strides = [1, 1]} : vector<49x8xf32> to vector<1x8xf32>
      %56 = vector.broadcast %55 : vector<1x8xf32> to vector<16x8xf32>
      %57 = arith.mulf %54, %56 : vector<16x8xf32>
      %58 = arith.addf %49, %57 : vector<16x8xf32>
      %59 = vector.extract_strided_slice %53 {offsets = [6, 0], sizes = [16, 8], strides = [1, 1]} : vector<32x8xf32> to vector<16x8xf32>
      %60 = vector.extract_strided_slice %13 {offsets = [1, 0], sizes = [1, 8], strides = [1, 1]} : vector<49x8xf32> to vector<1x8xf32>
      %61 = vector.broadcast %60 : vector<1x8xf32> to vector<16x8xf32>
      %62 = arith.mulf %59, %61 : vector<16x8xf32>
      %63 = arith.addf %58, %62 : vector<16x8xf32>
      %64 = vector.extract_strided_slice %53 {offsets = [7, 0], sizes = [16, 8], strides = [1, 1]} : vector<32x8xf32> to vector<16x8xf32>
      %65 = vector.extract_strided_slice %13 {offsets = [2, 0], sizes = [1, 8], strides = [1, 1]} : vector<49x8xf32> to vector<1x8xf32>
      %66 = vector.broadcast %65 : vector<1x8xf32> to vector<16x8xf32>
      %67 = arith.mulf %64, %66 : vector<16x8xf32>
      %68 = arith.addf %63, %67 : vector<16x8xf32>
      %69 = vector.extract_strided_slice %53 {offsets = [8, 0], sizes = [16, 8], strides = [1, 1]} : vector<32x8xf32> to vector<16x8xf32>
      %70 = vector.extract_strided_slice %13 {offsets = [3, 0], sizes = [1, 8], strides = [1, 1]} : vector<49x8xf32> to vector<1x8xf32>
      %71 = vector.broadcast %70 : vector<1x8xf32> to vector<16x8xf32>
      %72 = arith.mulf %69, %71 : vector<16x8xf32>
      %73 = arith.addf %68, %72 : vector<16x8xf32>
      %74 = vector.extract_strided_slice %53 {offsets = [9, 0], sizes = [16, 8], strides = [1, 1]} : vector<32x8xf32> to vector<16x8xf32>
      %75 = vector.extract_strided_slice %13 {offsets = [4, 0], sizes = [1, 8], strides = [1, 1]} : vector<49x8xf32> to vector<1x8xf32>
      %76 = vector.broadcast %75 : vector<1x8xf32> to vector<16x8xf32>
      %77 = arith.mulf %74, %76 : vector<16x8xf32>
      %78 = arith.addf %73, %77 : vector<16x8xf32>
      %79 = vector.extract_strided_slice %53 {offsets = [10, 0], sizes = [16, 8], strides = [1, 1]} : vector<32x8xf32> to vector<16x8xf32>
      %80 = vector.extract_strided_slice %13 {offsets = [5, 0], sizes = [1, 8], strides = [1, 1]} : vector<49x8xf32> to vector<1x8xf32>
      %81 = vector.broadcast %80 : vector<1x8xf32> to vector<16x8xf32>
      %82 = arith.mulf %79, %81 : vector<16x8xf32>
      %83 = arith.addf %78, %82 : vector<16x8xf32>
      %84 = vector.extract_strided_slice %53 {offsets = [11, 0], sizes = [16, 8], strides = [1, 1]} : vector<32x8xf32> to vector<16x8xf32>
      %85 = vector.extract_strided_slice %13 {offsets = [6, 0], sizes = [1, 8], strides = [1, 1]} : vector<49x8xf32> to vector<1x8xf32>
      %86 = vector.broadcast %85 : vector<1x8xf32> to vector<16x8xf32>
      %87 = arith.mulf %84, %86 : vector<16x8xf32>
      %88 = arith.addf %83, %87 : vector<16x8xf32>
      %c1_i32_62 = arith.constant 1 : i32
      %89 = arith.addi %arg16, %c1_i32_62 : i32
      %90 = arith.index_cast %89 : i32 to index
      %c0_63 = arith.constant 0 : index
      %c0_64 = arith.constant 0 : index
      %91 = vector.load %arg14[%90, %c0_63, %c0_64] : memref<22x32x8xf32, #tpu.memory_space<vmem>>, vector<1x32x8xf32>
      %92 = vector.shape_cast %91 : vector<1x32x8xf32> to vector<32x8xf32>
      %93 = vector.extract_strided_slice %92 {offsets = [5, 0], sizes = [16, 8], strides = [1, 1]} : vector<32x8xf32> to vector<16x8xf32>
      %94 = vector.extract_strided_slice %13 {offsets = [7, 0], sizes = [1, 8], strides = [1, 1]} : vector<49x8xf32> to vector<1x8xf32>
      %95 = vector.broadcast %94 : vector<1x8xf32> to vector<16x8xf32>
      %96 = arith.mulf %93, %95 : vector<16x8xf32>
      %97 = arith.addf %88, %96 : vector<16x8xf32>
      %98 = vector.extract_strided_slice %92 {offsets = [6, 0], sizes = [16, 8], strides = [1, 1]} : vector<32x8xf32> to vector<16x8xf32>
      %99 = vector.extract_strided_slice %13 {offsets = [8, 0], sizes = [1, 8], strides = [1, 1]} : vector<49x8xf32> to vector<1x8xf32>
      %100 = vector.broadcast %99 : vector<1x8xf32> to vector<16x8xf32>
      %101 = arith.mulf %98, %100 : vector<16x8xf32>
      %102 = arith.addf %97, %101 : vector<16x8xf32>
      %103 = vector.extract_strided_slice %92 {offsets = [7, 0], sizes = [16, 8], strides = [1, 1]} : vector<32x8xf32> to vector<16x8xf32>
      %104 = vector.extract_strided_slice %13 {offsets = [9, 0], sizes = [1, 8], strides = [1, 1]} : vector<49x8xf32> to vector<1x8xf32>
      %105 = vector.broadcast %104 : vector<1x8xf32> to vector<16x8xf32>
      %106 = arith.mulf %103, %105 : vector<16x8xf32>
      %107 = arith.addf %102, %106 : vector<16x8xf32>
      %108 = vector.extract_strided_slice %92 {offsets = [8, 0], sizes = [16, 8], strides = [1, 1]} : vector<32x8xf32> to vector<16x8xf32>
      %109 = vector.extract_strided_slice %13 {offsets = [10, 0], sizes = [1, 8], strides = [1, 1]} : vector<49x8xf32> to vector<1x8xf32>
      %110 = vector.broadcast %109 : vector<1x8xf32> to vector<16x8xf32>
      %111 = arith.mulf %108, %110 : vector<16x8xf32>
      %112 = arith.addf %107, %111 : vector<16x8xf32>
      %113 = vector.extract_strided_slice %92 {offsets = [9, 0], sizes = [16, 8], strides = [1, 1]} : vector<32x8xf32> to vector<16x8xf32>
      %114 = vector.extract_strided_slice %13 {offsets = [11, 0], sizes = [1, 8], strides = [1, 1]} : vector<49x8xf32> to vector<1x8xf32>
      %115 = vector.broadcast %114 : vector<1x8xf32> to vector<16x8xf32>
      %116 = arith.mulf %113, %115 : vector<16x8xf32>
      %117 = arith.addf %112, %116 : vector<16x8xf32>
      %118 = vector.extract_strided_slice %92 {offsets = [10, 0], sizes = [16, 8], strides = [1, 1]} : vector<32x8xf32> to vector<16x8xf32>
      %119 = vector.extract_strided_slice %13 {offsets = [12, 0], sizes = [1, 8], strides = [1, 1]} : vector<49x8xf32> to vector<1x8xf32>
      %120 = vector.broadcast %119 : vector<1x8xf32> to vector<16x8xf32>
      %121 = arith.mulf %118, %120 : vector<16x8xf32>
      %122 = arith.addf %117, %121 : vector<16x8xf32>
      %123 = vector.extract_strided_slice %92 {offsets = [11, 0], sizes = [16, 8], strides = [1, 1]} : vector<32x8xf32> to vector<16x8xf32>
      %124 = vector.extract_strided_slice %13 {offsets = [13, 0], sizes = [1, 8], strides = [1, 1]} : vector<49x8xf32> to vector<1x8xf32>
      %125 = vector.broadcast %124 : vector<1x8xf32> to vector<16x8xf32>
      %126 = arith.mulf %123, %125 : vector<16x8xf32>
      %127 = arith.addf %122, %126 : vector<16x8xf32>
      %c2_i32 = arith.constant 2 : i32
      %128 = arith.addi %arg16, %c2_i32 : i32
      %129 = arith.index_cast %128 : i32 to index
      %c0_65 = arith.constant 0 : index
      %c0_66 = arith.constant 0 : index
      %130 = vector.load %arg14[%129, %c0_65, %c0_66] : memref<22x32x8xf32, #tpu.memory_space<vmem>>, vector<1x32x8xf32>
      %131 = vector.shape_cast %130 : vector<1x32x8xf32> to vector<32x8xf32>
      %132 = vector.extract_strided_slice %131 {offsets = [5, 0], sizes = [16, 8], strides = [1, 1]} : vector<32x8xf32> to vector<16x8xf32>
      %133 = vector.extract_strided_slice %13 {offsets = [14, 0], sizes = [1, 8], strides = [1, 1]} : vector<49x8xf32> to vector<1x8xf32>
      %134 = vector.broadcast %133 : vector<1x8xf32> to vector<16x8xf32>
      %135 = arith.mulf %132, %134 : vector<16x8xf32>
      %136 = arith.addf %127, %135 : vector<16x8xf32>
      %137 = vector.extract_strided_slice %131 {offsets = [6, 0], sizes = [16, 8], strides = [1, 1]} : vector<32x8xf32> to vector<16x8xf32>
      %138 = vector.extract_strided_slice %13 {offsets = [15, 0], sizes = [1, 8], strides = [1, 1]} : vector<49x8xf32> to vector<1x8xf32>
      %139 = vector.broadcast %138 : vector<1x8xf32> to vector<16x8xf32>
      %140 = arith.mulf %137, %139 : vector<16x8xf32>
      %141 = arith.addf %136, %140 : vector<16x8xf32>
      %142 = vector.extract_strided_slice %131 {offsets = [7, 0], sizes = [16, 8], strides = [1, 1]} : vector<32x8xf32> to vector<16x8xf32>
      %143 = vector.extract_strided_slice %13 {offsets = [16, 0], sizes = [1, 8], strides = [1, 1]} : vector<49x8xf32> to vector<1x8xf32>
      %144 = vector.broadcast %143 : vector<1x8xf32> to vector<16x8xf32>
      %145 = arith.mulf %142, %144 : vector<16x8xf32>
      %146 = arith.addf %141, %145 : vector<16x8xf32>
      %147 = vector.extract_strided_slice %131 {offsets = [8, 0], sizes = [16, 8], strides = [1, 1]} : vector<32x8xf32> to vector<16x8xf32>
      %148 = vector.extract_strided_slice %13 {offsets = [17, 0], sizes = [1, 8], strides = [1, 1]} : vector<49x8xf32> to vector<1x8xf32>
      %149 = vector.broadcast %148 : vector<1x8xf32> to vector<16x8xf32>
      %150 = arith.mulf %147, %149 : vector<16x8xf32>
      %151 = arith.addf %146, %150 : vector<16x8xf32>
      %152 = vector.extract_strided_slice %131 {offsets = [9, 0], sizes = [16, 8], strides = [1, 1]} : vector<32x8xf32> to vector<16x8xf32>
      %153 = vector.extract_strided_slice %13 {offsets = [18, 0], sizes = [1, 8], strides = [1, 1]} : vector<49x8xf32> to vector<1x8xf32>
      %154 = vector.broadcast %153 : vector<1x8xf32> to vector<16x8xf32>
      %155 = arith.mulf %152, %154 : vector<16x8xf32>
      %156 = arith.addf %151, %155 : vector<16x8xf32>
      %157 = vector.extract_strided_slice %131 {offsets = [10, 0], sizes = [16, 8], strides = [1, 1]} : vector<32x8xf32> to vector<16x8xf32>
      %158 = vector.extract_strided_slice %13 {offsets = [19, 0], sizes = [1, 8], strides = [1, 1]} : vector<49x8xf32> to vector<1x8xf32>
      %159 = vector.broadcast %158 : vector<1x8xf32> to vector<16x8xf32>
      %160 = arith.mulf %157, %159 : vector<16x8xf32>
      %161 = arith.addf %156, %160 : vector<16x8xf32>
      %162 = vector.extract_strided_slice %131 {offsets = [11, 0], sizes = [16, 8], strides = [1, 1]} : vector<32x8xf32> to vector<16x8xf32>
      %163 = vector.extract_strided_slice %13 {offsets = [20, 0], sizes = [1, 8], strides = [1, 1]} : vector<49x8xf32> to vector<1x8xf32>
      %164 = vector.broadcast %163 : vector<1x8xf32> to vector<16x8xf32>
      %165 = arith.mulf %162, %164 : vector<16x8xf32>
      %166 = arith.addf %161, %165 : vector<16x8xf32>
      %c3_i32 = arith.constant 3 : i32
      %167 = arith.addi %arg16, %c3_i32 : i32
      %168 = arith.index_cast %167 : i32 to index
      %c0_67 = arith.constant 0 : index
      %c0_68 = arith.constant 0 : index
      %169 = vector.load %arg14[%168, %c0_67, %c0_68] : memref<22x32x8xf32, #tpu.memory_space<vmem>>, vector<1x32x8xf32>
      %170 = vector.shape_cast %169 : vector<1x32x8xf32> to vector<32x8xf32>
      %171 = vector.extract_strided_slice %170 {offsets = [5, 0], sizes = [16, 8], strides = [1, 1]} : vector<32x8xf32> to vector<16x8xf32>
      %172 = vector.extract_strided_slice %13 {offsets = [21, 0], sizes = [1, 8], strides = [1, 1]} : vector<49x8xf32> to vector<1x8xf32>
      %173 = vector.broadcast %172 : vector<1x8xf32> to vector<16x8xf32>
      %174 = arith.mulf %171, %173 : vector<16x8xf32>
      %175 = arith.addf %166, %174 : vector<16x8xf32>
      %176 = vector.extract_strided_slice %170 {offsets = [6, 0], sizes = [16, 8], strides = [1, 1]} : vector<32x8xf32> to vector<16x8xf32>
      %177 = vector.extract_strided_slice %13 {offsets = [22, 0], sizes = [1, 8], strides = [1, 1]} : vector<49x8xf32> to vector<1x8xf32>
      %178 = vector.broadcast %177 : vector<1x8xf32> to vector<16x8xf32>
      %179 = arith.mulf %176, %178 : vector<16x8xf32>
      %180 = arith.addf %175, %179 : vector<16x8xf32>
      %181 = vector.extract_strided_slice %170 {offsets = [7, 0], sizes = [16, 8], strides = [1, 1]} : vector<32x8xf32> to vector<16x8xf32>
      %182 = vector.extract_strided_slice %13 {offsets = [23, 0], sizes = [1, 8], strides = [1, 1]} : vector<49x8xf32> to vector<1x8xf32>
      %183 = vector.broadcast %182 : vector<1x8xf32> to vector<16x8xf32>
      %184 = arith.mulf %181, %183 : vector<16x8xf32>
      %185 = arith.addf %180, %184 : vector<16x8xf32>
      %186 = vector.extract_strided_slice %170 {offsets = [8, 0], sizes = [16, 8], strides = [1, 1]} : vector<32x8xf32> to vector<16x8xf32>
      %187 = vector.extract_strided_slice %13 {offsets = [24, 0], sizes = [1, 8], strides = [1, 1]} : vector<49x8xf32> to vector<1x8xf32>
      %188 = vector.broadcast %187 : vector<1x8xf32> to vector<16x8xf32>
      %189 = arith.mulf %186, %188 : vector<16x8xf32>
      %190 = arith.addf %185, %189 : vector<16x8xf32>
      %191 = vector.extract_strided_slice %170 {offsets = [9, 0], sizes = [16, 8], strides = [1, 1]} : vector<32x8xf32> to vector<16x8xf32>
      %192 = vector.extract_strided_slice %13 {offsets = [25, 0], sizes = [1, 8], strides = [1, 1]} : vector<49x8xf32> to vector<1x8xf32>
      %193 = vector.broadcast %192 : vector<1x8xf32> to vector<16x8xf32>
      %194 = arith.mulf %191, %193 : vector<16x8xf32>
      %195 = arith.addf %190, %194 : vector<16x8xf32>
      %196 = vector.extract_strided_slice %170 {offsets = [10, 0], sizes = [16, 8], strides = [1, 1]} : vector<32x8xf32> to vector<16x8xf32>
      %197 = vector.extract_strided_slice %13 {offsets = [26, 0], sizes = [1, 8], strides = [1, 1]} : vector<49x8xf32> to vector<1x8xf32>
      %198 = vector.broadcast %197 : vector<1x8xf32> to vector<16x8xf32>
      %199 = arith.mulf %196, %198 : vector<16x8xf32>
      %200 = arith.addf %195, %199 : vector<16x8xf32>
      %201 = vector.extract_strided_slice %170 {offsets = [11, 0], sizes = [16, 8], strides = [1, 1]} : vector<32x8xf32> to vector<16x8xf32>
      %202 = vector.extract_strided_slice %13 {offsets = [27, 0], sizes = [1, 8], strides = [1, 1]} : vector<49x8xf32> to vector<1x8xf32>
      %203 = vector.broadcast %202 : vector<1x8xf32> to vector<16x8xf32>
      %204 = arith.mulf %201, %203 : vector<16x8xf32>
      %205 = arith.addf %200, %204 : vector<16x8xf32>
      %c4_i32 = arith.constant 4 : i32
      %206 = arith.addi %arg16, %c4_i32 : i32
      %207 = arith.index_cast %206 : i32 to index
      %c0_69 = arith.constant 0 : index
      %c0_70 = arith.constant 0 : index
      %208 = vector.load %arg14[%207, %c0_69, %c0_70] : memref<22x32x8xf32, #tpu.memory_space<vmem>>, vector<1x32x8xf32>
      %209 = vector.shape_cast %208 : vector<1x32x8xf32> to vector<32x8xf32>
      %210 = vector.extract_strided_slice %209 {offsets = [5, 0], sizes = [16, 8], strides = [1, 1]} : vector<32x8xf32> to vector<16x8xf32>
      %211 = vector.extract_strided_slice %13 {offsets = [28, 0], sizes = [1, 8], strides = [1, 1]} : vector<49x8xf32> to vector<1x8xf32>
      %212 = vector.broadcast %211 : vector<1x8xf32> to vector<16x8xf32>
      %213 = arith.mulf %210, %212 : vector<16x8xf32>
      %214 = arith.addf %205, %213 : vector<16x8xf32>
      %215 = vector.extract_strided_slice %209 {offsets = [6, 0], sizes = [16, 8], strides = [1, 1]} : vector<32x8xf32> to vector<16x8xf32>
      %216 = vector.extract_strided_slice %13 {offsets = [29, 0], sizes = [1, 8], strides = [1, 1]} : vector<49x8xf32> to vector<1x8xf32>
      %217 = vector.broadcast %216 : vector<1x8xf32> to vector<16x8xf32>
      %218 = arith.mulf %215, %217 : vector<16x8xf32>
      %219 = arith.addf %214, %218 : vector<16x8xf32>
      %220 = vector.extract_strided_slice %209 {offsets = [7, 0], sizes = [16, 8], strides = [1, 1]} : vector<32x8xf32> to vector<16x8xf32>
      %221 = vector.extract_strided_slice %13 {offsets = [30, 0], sizes = [1, 8], strides = [1, 1]} : vector<49x8xf32> to vector<1x8xf32>
      %222 = vector.broadcast %221 : vector<1x8xf32> to vector<16x8xf32>
      %223 = arith.mulf %220, %222 : vector<16x8xf32>
      %224 = arith.addf %219, %223 : vector<16x8xf32>
      %225 = vector.extract_strided_slice %209 {offsets = [8, 0], sizes = [16, 8], strides = [1, 1]} : vector<32x8xf32> to vector<16x8xf32>
      %226 = vector.extract_strided_slice %13 {offsets = [31, 0], sizes = [1, 8], strides = [1, 1]} : vector<49x8xf32> to vector<1x8xf32>
      %227 = vector.broadcast %226 : vector<1x8xf32> to vector<16x8xf32>
      %228 = arith.mulf %225, %227 : vector<16x8xf32>
      %229 = arith.addf %224, %228 : vector<16x8xf32>
      %230 = vector.extract_strided_slice %209 {offsets = [9, 0], sizes = [16, 8], strides = [1, 1]} : vector<32x8xf32> to vector<16x8xf32>
      %231 = vector.extract_strided_slice %13 {offsets = [32, 0], sizes = [1, 8], strides = [1, 1]} : vector<49x8xf32> to vector<1x8xf32>
      %232 = vector.broadcast %231 : vector<1x8xf32> to vector<16x8xf32>
      %233 = arith.mulf %230, %232 : vector<16x8xf32>
      %234 = arith.addf %229, %233 : vector<16x8xf32>
      %235 = vector.extract_strided_slice %209 {offsets = [10, 0], sizes = [16, 8], strides = [1, 1]} : vector<32x8xf32> to vector<16x8xf32>
      %236 = vector.extract_strided_slice %13 {offsets = [33, 0], sizes = [1, 8], strides = [1, 1]} : vector<49x8xf32> to vector<1x8xf32>
      %237 = vector.broadcast %236 : vector<1x8xf32> to vector<16x8xf32>
      %238 = arith.mulf %235, %237 : vector<16x8xf32>
      %239 = arith.addf %234, %238 : vector<16x8xf32>
      %240 = vector.extract_strided_slice %209 {offsets = [11, 0], sizes = [16, 8], strides = [1, 1]} : vector<32x8xf32> to vector<16x8xf32>
      %241 = vector.extract_strided_slice %13 {offsets = [34, 0], sizes = [1, 8], strides = [1, 1]} : vector<49x8xf32> to vector<1x8xf32>
      %242 = vector.broadcast %241 : vector<1x8xf32> to vector<16x8xf32>
      %243 = arith.mulf %240, %242 : vector<16x8xf32>
      %244 = arith.addf %239, %243 : vector<16x8xf32>
      %c5_i32 = arith.constant 5 : i32
      %245 = arith.addi %arg16, %c5_i32 : i32
      %246 = arith.index_cast %245 : i32 to index
      %c0_71 = arith.constant 0 : index
      %c0_72 = arith.constant 0 : index
      %247 = vector.load %arg14[%246, %c0_71, %c0_72] : memref<22x32x8xf32, #tpu.memory_space<vmem>>, vector<1x32x8xf32>
      %248 = vector.shape_cast %247 : vector<1x32x8xf32> to vector<32x8xf32>
      %249 = vector.extract_strided_slice %248 {offsets = [5, 0], sizes = [16, 8], strides = [1, 1]} : vector<32x8xf32> to vector<16x8xf32>
      %250 = vector.extract_strided_slice %13 {offsets = [35, 0], sizes = [1, 8], strides = [1, 1]} : vector<49x8xf32> to vector<1x8xf32>
      %251 = vector.broadcast %250 : vector<1x8xf32> to vector<16x8xf32>
      %252 = arith.mulf %249, %251 : vector<16x8xf32>
      %253 = arith.addf %244, %252 : vector<16x8xf32>
      %254 = vector.extract_strided_slice %248 {offsets = [6, 0], sizes = [16, 8], strides = [1, 1]} : vector<32x8xf32> to vector<16x8xf32>
      %255 = vector.extract_strided_slice %13 {offsets = [36, 0], sizes = [1, 8], strides = [1, 1]} : vector<49x8xf32> to vector<1x8xf32>
      %256 = vector.broadcast %255 : vector<1x8xf32> to vector<16x8xf32>
      %257 = arith.mulf %254, %256 : vector<16x8xf32>
      %258 = arith.addf %253, %257 : vector<16x8xf32>
      %259 = vector.extract_strided_slice %248 {offsets = [7, 0], sizes = [16, 8], strides = [1, 1]} : vector<32x8xf32> to vector<16x8xf32>
      %260 = vector.extract_strided_slice %13 {offsets = [37, 0], sizes = [1, 8], strides = [1, 1]} : vector<49x8xf32> to vector<1x8xf32>
      %261 = vector.broadcast %260 : vector<1x8xf32> to vector<16x8xf32>
      %262 = arith.mulf %259, %261 : vector<16x8xf32>
      %263 = arith.addf %258, %262 : vector<16x8xf32>
      %264 = vector.extract_strided_slice %248 {offsets = [8, 0], sizes = [16, 8], strides = [1, 1]} : vector<32x8xf32> to vector<16x8xf32>
      %265 = vector.extract_strided_slice %13 {offsets = [38, 0], sizes = [1, 8], strides = [1, 1]} : vector<49x8xf32> to vector<1x8xf32>
      %266 = vector.broadcast %265 : vector<1x8xf32> to vector<16x8xf32>
      %267 = arith.mulf %264, %266 : vector<16x8xf32>
      %268 = arith.addf %263, %267 : vector<16x8xf32>
      %269 = vector.extract_strided_slice %248 {offsets = [9, 0], sizes = [16, 8], strides = [1, 1]} : vector<32x8xf32> to vector<16x8xf32>
      %270 = vector.extract_strided_slice %13 {offsets = [39, 0], sizes = [1, 8], strides = [1, 1]} : vector<49x8xf32> to vector<1x8xf32>
      %271 = vector.broadcast %270 : vector<1x8xf32> to vector<16x8xf32>
      %272 = arith.mulf %269, %271 : vector<16x8xf32>
      %273 = arith.addf %268, %272 : vector<16x8xf32>
      %274 = vector.extract_strided_slice %248 {offsets = [10, 0], sizes = [16, 8], strides = [1, 1]} : vector<32x8xf32> to vector<16x8xf32>
      %275 = vector.extract_strided_slice %13 {offsets = [40, 0], sizes = [1, 8], strides = [1, 1]} : vector<49x8xf32> to vector<1x8xf32>
      %276 = vector.broadcast %275 : vector<1x8xf32> to vector<16x8xf32>
      %277 = arith.mulf %274, %276 : vector<16x8xf32>
      %278 = arith.addf %273, %277 : vector<16x8xf32>
      %279 = vector.extract_strided_slice %248 {offsets = [11, 0], sizes = [16, 8], strides = [1, 1]} : vector<32x8xf32> to vector<16x8xf32>
      %280 = vector.extract_strided_slice %13 {offsets = [41, 0], sizes = [1, 8], strides = [1, 1]} : vector<49x8xf32> to vector<1x8xf32>
      %281 = vector.broadcast %280 : vector<1x8xf32> to vector<16x8xf32>
      %282 = arith.mulf %279, %281 : vector<16x8xf32>
      %283 = arith.addf %278, %282 : vector<16x8xf32>
      %c6_i32 = arith.constant 6 : i32
      %284 = arith.addi %arg16, %c6_i32 : i32
      %285 = arith.index_cast %284 : i32 to index
      %c0_73 = arith.constant 0 : index
      %c0_74 = arith.constant 0 : index
      %286 = vector.load %arg14[%285, %c0_73, %c0_74] : memref<22x32x8xf32, #tpu.memory_space<vmem>>, vector<1x32x8xf32>
      %287 = vector.shape_cast %286 : vector<1x32x8xf32> to vector<32x8xf32>
      %288 = vector.extract_strided_slice %287 {offsets = [5, 0], sizes = [16, 8], strides = [1, 1]} : vector<32x8xf32> to vector<16x8xf32>
      %289 = vector.extract_strided_slice %13 {offsets = [42, 0], sizes = [1, 8], strides = [1, 1]} : vector<49x8xf32> to vector<1x8xf32>
      %290 = vector.broadcast %289 : vector<1x8xf32> to vector<16x8xf32>
      %291 = arith.mulf %288, %290 : vector<16x8xf32>
      %292 = arith.addf %283, %291 : vector<16x8xf32>
      %293 = vector.extract_strided_slice %287 {offsets = [6, 0], sizes = [16, 8], strides = [1, 1]} : vector<32x8xf32> to vector<16x8xf32>
      %294 = vector.extract_strided_slice %13 {offsets = [43, 0], sizes = [1, 8], strides = [1, 1]} : vector<49x8xf32> to vector<1x8xf32>
      %295 = vector.broadcast %294 : vector<1x8xf32> to vector<16x8xf32>
      %296 = arith.mulf %293, %295 : vector<16x8xf32>
      %297 = arith.addf %292, %296 : vector<16x8xf32>
      %298 = vector.extract_strided_slice %287 {offsets = [7, 0], sizes = [16, 8], strides = [1, 1]} : vector<32x8xf32> to vector<16x8xf32>
      %299 = vector.extract_strided_slice %13 {offsets = [44, 0], sizes = [1, 8], strides = [1, 1]} : vector<49x8xf32> to vector<1x8xf32>
      %300 = vector.broadcast %299 : vector<1x8xf32> to vector<16x8xf32>
      %301 = arith.mulf %298, %300 : vector<16x8xf32>
      %302 = arith.addf %297, %301 : vector<16x8xf32>
      %303 = vector.extract_strided_slice %287 {offsets = [8, 0], sizes = [16, 8], strides = [1, 1]} : vector<32x8xf32> to vector<16x8xf32>
      %304 = vector.extract_strided_slice %13 {offsets = [45, 0], sizes = [1, 8], strides = [1, 1]} : vector<49x8xf32> to vector<1x8xf32>
      %305 = vector.broadcast %304 : vector<1x8xf32> to vector<16x8xf32>
      %306 = arith.mulf %303, %305 : vector<16x8xf32>
      %307 = arith.addf %302, %306 : vector<16x8xf32>
      %308 = vector.extract_strided_slice %287 {offsets = [9, 0], sizes = [16, 8], strides = [1, 1]} : vector<32x8xf32> to vector<16x8xf32>
      %309 = vector.extract_strided_slice %13 {offsets = [46, 0], sizes = [1, 8], strides = [1, 1]} : vector<49x8xf32> to vector<1x8xf32>
      %310 = vector.broadcast %309 : vector<1x8xf32> to vector<16x8xf32>
      %311 = arith.mulf %308, %310 : vector<16x8xf32>
      %312 = arith.addf %307, %311 : vector<16x8xf32>
      %313 = vector.extract_strided_slice %287 {offsets = [10, 0], sizes = [16, 8], strides = [1, 1]} : vector<32x8xf32> to vector<16x8xf32>
      %314 = vector.extract_strided_slice %13 {offsets = [47, 0], sizes = [1, 8], strides = [1, 1]} : vector<49x8xf32> to vector<1x8xf32>
      %315 = vector.broadcast %314 : vector<1x8xf32> to vector<16x8xf32>
      %316 = arith.mulf %313, %315 : vector<16x8xf32>
      %317 = arith.addf %312, %316 : vector<16x8xf32>
      %318 = vector.extract_strided_slice %287 {offsets = [11, 0], sizes = [16, 8], strides = [1, 1]} : vector<32x8xf32> to vector<16x8xf32>
      %319 = vector.extract_strided_slice %13 {offsets = [48, 0], sizes = [1, 8], strides = [1, 1]} : vector<49x8xf32> to vector<1x8xf32>
      %320 = vector.broadcast %319 : vector<1x8xf32> to vector<16x8xf32>
      %321 = arith.mulf %318, %320 : vector<16x8xf32>
      %322 = arith.addf %317, %321 : vector<16x8xf32>
      %323 = vector.broadcast %14 : vector<1x8xf32> to vector<16x8xf32>
      %324 = arith.addf %322, %323 : vector<16x8xf32>
      %cst_75 = arith.constant dense<0.000000e+00> : vector<16xf32>
      %325 = vector.multi_reduction <add>, %324, %cst_75 [1] : vector<16x8xf32> to vector<16xf32>
      %326 = vector.shape_cast %325 : vector<16xf32> to vector<16x1xf32>
      %cst_76 = arith.constant 8.000000e+00 : f32
      %327 = vector.broadcast %cst_76 : f32 to vector<16x1xf32>
      %328 = arith.divf %326, %327 : vector<16x1xf32>
      %329 = vector.broadcast %328 : vector<16x1xf32> to vector<16x8xf32>
      %330 = arith.subf %324, %329 : vector<16x8xf32>
      %331 = arith.mulf %330, %330 : vector<16x8xf32>
      %cst_77 = arith.constant dense<0.000000e+00> : vector<16xf32>
      %332 = vector.multi_reduction <add>, %331, %cst_77 [1] : vector<16x8xf32> to vector<16xf32>
      %333 = vector.shape_cast %332 : vector<16xf32> to vector<16x1xf32>
      %cst_78 = arith.constant 8.000000e+00 : f32
      %334 = vector.broadcast %cst_78 : f32 to vector<16x1xf32>
      %335 = arith.divf %333, %334 : vector<16x1xf32>
      %cst_79 = arith.constant 9.99999997E-7 : f32
      %336 = vector.broadcast %cst_79 : f32 to vector<16x1xf32>
      %337 = arith.addf %335, %336 : vector<16x1xf32>
      %338 = math.rsqrt %337 : vector<16x1xf32>
      %339 = vector.broadcast %338 : vector<16x1xf32> to vector<16x8xf32>
      %340 = arith.mulf %330, %339 : vector<16x8xf32>
      %341 = vector.broadcast %15 : vector<1x8xf32> to vector<16x8xf32>
      %342 = arith.mulf %340, %341 : vector<16x8xf32>
      %343 = vector.broadcast %16 : vector<1x8xf32> to vector<16x8xf32>
      %344 = arith.addf %342, %343 : vector<16x8xf32>
      %345 = arith.truncf %344 : vector<16x8xf32> to vector<16x8xbf16>
      %346 = arith.index_cast %arg16 : i32 to index
      %c0_80 = arith.constant 0 : index
      %c0_81 = arith.constant 0 : index
      %347 = vector.load %arg15[%346, %c0_80, %c0_81] : memref<16x16x8xbf16, #tpu.memory_space<vmem>>, vector<1x16x8xbf16>
      %348 = vector.shape_cast %347 : vector<1x16x8xbf16> to vector<16x8xbf16>
      %349 = vector.shape_cast %345 : vector<16x8xbf16> to vector<1x16x8xbf16>
      tpu.vector_store %arg15[%346, %c0_80, %c0_81], %349 {strides = array<i32>} : memref<16x16x8xbf16, #tpu.memory_space<vmem>>, vector<1x16x8xbf16>,
    }
    %c16_i32_31 = arith.constant 16 : i32
    %c0_32 = arith.constant 0 : index
    %c0_33 = arith.constant 0 : index
    %c0_34 = arith.constant 0 : index
    %18 = vector.load %arg15[%c0_32, %c0_33, %c0_34] : memref<16x16x8xbf16, #tpu.memory_space<vmem>>, vector<16x16x8xbf16>
    %19 = vector.shape_cast %18 : vector<16x16x8xbf16> to vector<256x8xbf16>
    %c0_35 = arith.constant 0 : index
    %c0_36 = arith.constant 0 : index
    %20 = vector.load %arg8[%c0_35, %c0_36] : memref<8x32xbf16, #tpu.memory_space<vmem>>, vector<8x32xbf16>
    %cst_37 = arith.constant dense<0.000000e+00> : vector<256x32xf32>
    %21 = tpu.matmul %19, %20, %cst_37 {dimension_numbers = #tpu.dot_dimension_numbers<[1], [0], [0], [1], [0, 0, 1, 1], [], []>} : vector<256x8xbf16>, vector<8x32xbf16>, vector<256x32xf32> -> vector<256x32xf32>
    %c0_38 = arith.constant 0 : index
    %c0_39 = arith.constant 0 : index
    %22 = vector.load %arg9[%c0_38, %c0_39] : memref<1x32xf32, #tpu.memory_space<vmem>>, vector<1x32xf32>
    %23 = vector.broadcast %22 : vector<1x32xf32> to vector<256x32xf32>
    %24 = arith.addf %21, %23 : vector<256x32xf32>
    %cst_40 = arith.constant 5.000000e-01 : f32
    %25 = vector.broadcast %cst_40 : f32 to vector<256x32xf32>
    %26 = arith.mulf %25, %24 : vector<256x32xf32>
    %cst_41 = arith.constant 0.707106769 : f32
    %27 = vector.broadcast %cst_41 : f32 to vector<256x32xf32>
    %28 = arith.mulf %24, %27 : vector<256x32xf32>
    %29 = math.erf %28 : vector<256x32xf32>
    %cst_42 = arith.constant 1.000000e+00 : f32
    %30 = vector.broadcast %cst_42 : f32 to vector<256x32xf32>
    %31 = arith.addf %30, %29 : vector<256x32xf32>
    %32 = arith.mulf %26, %31 : vector<256x32xf32>
    %33 = arith.truncf %32 : vector<256x32xf32> to vector<256x32xbf16>
    %c0_43 = arith.constant 0 : index
    %c0_44 = arith.constant 0 : index
    %34 = vector.load %arg10[%c0_43, %c0_44] : memref<32x8xbf16, #tpu.memory_space<vmem>>, vector<32x8xbf16>
    %cst_45 = arith.constant dense<0.000000e+00> : vector<256x8xf32>
    %35 = tpu.matmul %33, %34, %cst_45 {dimension_numbers = #tpu.dot_dimension_numbers<[1], [0], [0], [1], [0, 0, 1, 1], [], []>} : vector<256x32xbf16>, vector<32x8xbf16>, vector<256x8xf32> -> vector<256x8xf32>
    %c0_46 = arith.constant 0 : index
    %c0_47 = arith.constant 0 : index
    %36 = vector.load %arg11[%c0_46, %c0_47] : memref<1x8xf32, #tpu.memory_space<vmem>>, vector<1x8xf32>
    %37 = vector.broadcast %36 : vector<1x8xf32> to vector<256x8xf32>
    %38 = arith.addf %35, %37 : vector<256x8xf32>
    %c0_48 = arith.constant 0 : index
    %c0_49 = arith.constant 0 : index
    %39 = vector.load %arg12[%c0_48, %c0_49] : memref<1x8xf32, #tpu.memory_space<vmem>>, vector<1x8xf32>
    %40 = vector.broadcast %39 : vector<1x8xf32> to vector<256x8xf32>
    %41 = arith.mulf %38, %40 : vector<256x8xf32>
    %c0_50 = arith.constant 0 : index
    %c0_51 = arith.constant 0 : index
    %c0_52 = arith.constant 0 : index
    %c0_53 = arith.constant 0 : index
    %42 = vector.load %arg2[%c0_50, %c0_51, %c0_52, %c0_53] : memref<1x16x16x8xf32, #tpu.memory_space<vmem>>, vector<1x16x16x8xf32>
    %43 = vector.shape_cast %42 : vector<1x16x16x8xf32> to vector<16x16x8xf32>
    %44 = vector.shape_cast %41 : vector<256x8xf32> to vector<16x16x8xf32>
    %45 = arith.addf %43, %44 : vector<16x16x8xf32>
    %c0_54 = arith.constant 0 : index
    %c0_55 = arith.constant 0 : index
    %c0_56 = arith.constant 0 : index
    %c0_57 = arith.constant 0 : index
    %46 = vector.load %arg13[%c0_54, %c0_55, %c0_56, %c0_57] : memref<1x16x16x8xf32, #tpu.memory_space<vmem>>, vector<1x16x16x8xf32>
    %47 = vector.shape_cast %46 : vector<1x16x16x8xf32> to vector<16x16x8xf32>
    %48 = vector.shape_cast %45 : vector<16x16x8xf32> to vector<1x16x16x8xf32>
    tpu.vector_store %arg13[%c0_54, %c0_55, %c0_56, %c0_57], %48 {strides = array<i32>} : memref<1x16x16x8xf32, #tpu.memory_space<vmem>>, vector<1x16x16x8xf32>,
    return
  }
  func.func @transform_0(%arg0: i32, %arg1: i32) -> (i32, i32, i32, i32) {
    %c0_i32 = arith.constant 0 : i32
    %c0_i32_0 = arith.constant 0 : i32
    %c0_i32_1 = arith.constant 0 : i32
    return %arg0, %arg1, %c0_i32, %c0_i32_0 : i32, i32, i32, i32
  }
  func.func @transform_1(%arg0: i32, %arg1: i32) -> (i32, i32, i32, i32) {
    %c1_i32 = arith.constant 1 : i32
    %0 = arith.muli %arg0, %c1_i32 : i32
    %1 = arith.addi %0, %arg1 : i32
    %c0_i32 = arith.constant 0 : i32
    %c0_i32_0 = arith.constant 0 : i32
    %c0_i32_1 = arith.constant 0 : i32
    %c0_i32_2 = arith.constant 0 : i32
    return %1, %c0_i32, %c0_i32_0, %c0_i32_1 : i32, i32, i32, i32
  }
  func.func @transform_2(%arg0: i32, %arg1: i32) -> (i32, i32) {
    %c0_i32 = arith.constant 0 : i32
    %c0_i32_0 = arith.constant 0 : i32
    %c0_i32_1 = arith.constant 0 : i32
    return %c0_i32, %c0_i32_0 : i32, i32
  }
  func.func @transform_3(%arg0: i32, %arg1: i32) -> (i32, i32) {
    %c0_i32 = arith.constant 0 : i32
    %c0_i32_0 = arith.constant 0 : i32
    %c0_i32_1 = arith.constant 0 : i32
    return %c0_i32, %c0_i32_0 : i32, i32
  }
  func.func @transform_4(%arg0: i32, %arg1: i32) -> (i32, i32) {
    %c0_i32 = arith.constant 0 : i32
    %c0_i32_0 = arith.constant 0 : i32
    %c0_i32_1 = arith.constant 0 : i32
    return %c0_i32, %c0_i32_0 : i32, i32
  }
  func.func @transform_5(%arg0: i32, %arg1: i32) -> (i32, i32) {
    %c0_i32 = arith.constant 0 : i32
    %c0_i32_0 = arith.constant 0 : i32
    %c0_i32_1 = arith.constant 0 : i32
    return %c0_i32, %c0_i32_0 : i32, i32
  }
  func.func @transform_6(%arg0: i32, %arg1: i32) -> (i32, i32) {
    %c0_i32 = arith.constant 0 : i32
    %c0_i32_0 = arith.constant 0 : i32
    %c0_i32_1 = arith.constant 0 : i32
    return %c0_i32, %c0_i32_0 : i32, i32
  }
  func.func @transform_7(%arg0: i32, %arg1: i32) -> (i32, i32) {
    %c0_i32 = arith.constant 0 : i32
    %c0_i32_0 = arith.constant 0 : i32
    %c0_i32_1 = arith.constant 0 : i32
    return %c0_i32, %c0_i32_0 : i32, i32
  }
  func.func @transform_8(%arg0: i32, %arg1: i32) -> (i32, i32) {
    %c0_i32 = arith.constant 0 : i32
    %c0_i32_0 = arith.constant 0 : i32
    %c0_i32_1 = arith.constant 0 : i32
    return %c0_i32, %c0_i32_0 : i32, i32
  }
  func.func @transform_9(%arg0: i32, %arg1: i32) -> (i32, i32) {
    %c0_i32 = arith.constant 0 : i32
    %c0_i32_0 = arith.constant 0 : i32
    %c0_i32_1 = arith.constant 0 : i32
    return %c0_i32, %c0_i32_0 : i32, i32
  }
  func.func @transform_10(%arg0: i32, %arg1: i32) -> (i32, i32) {
    %c0_i32 = arith.constant 0 : i32
    %c0_i32_0 = arith.constant 0 : i32
    %c0_i32_1 = arith.constant 0 : i32
    return %c0_i32, %c0_i32_0 : i32, i32
  }
  func.func @transform_11(%arg0: i32, %arg1: i32) -> (i32, i32, i32, i32) {
    %c0_i32 = arith.constant 0 : i32
    %c0_i32_0 = arith.constant 0 : i32
    %c0_i32_1 = arith.constant 0 : i32
    return %arg0, %arg1, %c0_i32, %c0_i32_0 : i32, i32, i32, i32
  }
}

</mosaic_0001>

<llo_original>
// kernel: tpu_custom_call.1
$region0: #{tpu_custom_call.1}
  #allocation0 [shape = 'u32[]', space=smem, size = 0x4, offset = 0x4, fixed_abs, tag = 'smem constant byte address 0x4 - core index']
  #allocation1 [shape = 'u32[72,128]{1,0:T(1,128)}', space=vmem, size = 0x9000, scoped, tag = 'internal scratch']
  #allocation2 [shape = 'f32[22,32,8]{2,1,0:T(8,128)}', space=vmem, size = 0x58000, scoped, tag = 'scratch operand']
  #allocation3 [shape = 'bf16[16,16,8]{2,1,0:T(8,128)(2,1)}', space=vmem, size = 0x10000, scoped, tag = 'scratch operand']
  %s0 = inlined_call_operand.vmem [shape: f32[2,16,16,8], index: 0, kind: input, shape index: {}]
  %s1 = inlined_call_operand.vmem [shape: f32[2,6,16,8], index: 1, kind: input, shape index: {}]
  %s2 = inlined_call_operand.vmem [shape: f32[49,8], index: 2, kind: input, shape index: {}]
  %s3 = inlined_call_operand.vmem [shape: f32[1,8], index: 3, kind: input, shape index: {}]
  %s4 = inlined_call_operand.vmem [shape: f32[1,8], index: 4, kind: input, shape index: {}]
  %s5 = inlined_call_operand.vmem [shape: f32[1,8], index: 5, kind: input, shape index: {}]
  %s6 = inlined_call_operand.vmem [shape: bf16[8,32], index: 6, kind: input, shape index: {}]
  %s7 = inlined_call_operand.vmem [shape: f32[1,32], index: 7, kind: input, shape index: {}]
  %s8 = inlined_call_operand.vmem [shape: bf16[32,8], index: 8, kind: input, shape index: {}]
  %s9 = inlined_call_operand.vmem [shape: f32[1,8], index: 9, kind: input, shape index: {}]
  %s10 = inlined_call_operand.vmem [shape: f32[1,8], index: 10, kind: input, shape index: {}]
  %s11 = inlined_call_operand.vmem [shape: f32[2,16,16,8], index: 11, kind: output, shape index: {}]
  %s12 = sld [smem:[#allocation0]]
  $region84: #{tpu_custom_call.1} parent=0
    _
  %s14 = ssub.s32 1, %s12
  %s15 = scalar_select 0, %s14, %s12
  loop: start=0, step=1, limit=4
  $region2: #{tpu_custom_call.1} parent=0 // loop_pre_header
    _
  $region3: #{tpu_custom_call.1} parent=0 // loop_header
    %s17 = sphi 0, %s21
    %p18 = scmp.ge.s32.totalorder %s17, 4
    %s24 = sphi 0, %s36
    %s25 = sphi 0, %s32
    %s26 = sphi 0, %s24
    %s27 = sphi 0, %s25
    %s28 = sphi 0, %s26
    %s29 = sphi 0, %s27
    %s41 = sphi 0, %s43
    %s44 = sphi 0, %s41
    %s45 = sphi 0, %s44
    %s61 = sphi 0, %s45
    %s69 = sphi 0, %s71
    %s72 = sphi 0, %s69
    %s73 = sphi 0, %s72
    %s89 = sphi 0, %s73
    %s93 = sphi 0, %s93
    %s95 = sphi 0, %s93
    %s96 = sphi 0, %s95
    %s110 = sphi 0, %s96
    %s114 = sphi 0, %s114
    %s116 = sphi 0, %s114
    %s117 = sphi 0, %s116
    %s131 = sphi 0, %s117
    %s135 = sphi 0, %s135
    %s137 = sphi 0, %s135
    %s138 = sphi 0, %s137
    %s152 = sphi 0, %s138
    %s156 = sphi 0, %s156
    %s158 = sphi 0, %s156
    %s159 = sphi 0, %s158
    %s173 = sphi 0, %s159
    %s177 = sphi 0, %s177
    %s179 = sphi 0, %s177
    %s180 = sphi 0, %s179
    %s194 = sphi 0, %s180
    %s198 = sphi 0, %s198
    %s200 = sphi 0, %s198
    %s201 = sphi 0, %s200
    %s215 = sphi 0, %s201
    %s219 = sphi 0, %s219
    %s221 = sphi 0, %s219
    %s222 = sphi 0, %s221
    %s236 = sphi 0, %s222
    %s240 = sphi 0, %s240
    %s242 = sphi 0, %s240
    %s243 = sphi 0, %s242
    %s257 = sphi 0, %s243
    %s261 = sphi 0, %s261
    %s263 = sphi 0, %s261
    %s264 = sphi 0, %s263
    %s278 = sphi 0, %s264
    %s286 = sphi 0, %s288
    %s289 = sphi 0, %s286
    %s290 = sphi 0, %s289
    %s306 = sphi 0, %s290
  $region4: #{tpu_custom_call.1} parent=0 // loop_header_branch
    %20 = sbr.rel (%p18) target = $region8
  $region5: #{tpu_custom_call.1} parent=0 // loop_body
    %s22 = ssub.s32 %s17, 1
    %s23 = ssub.s32 %s17, 2
    %s30 = sadd.s32 1, %s25
    %p31 = scmp.ge.s32.totalorder %s30, 1
    %s32 = scalar_select %p31, 0, %s30
    %s33 = sadd.s32 1, %s24
    %s34 = scalar_select %p31, %s33, %s24
    %p35 = scmp.ge.s32.totalorder %s34, 2
    %s36 = scalar_select %p35, 0, %s34
    %s37 = ssub.s32 %s24, %s36
    %s38 = ssub.s32 %s25, %s32
    %s39 = sor.u32 %s37, %s38
    %p40 = scmp.eq.s32.totalorder %s39, 0
    %s42 = sadd.s32 %s41, 1
    %s43 = scalar_select %p40, %s41, %s42
    %p46 = pneg %p40
    %p47 = scmp.eq.s32.totalorder %s17, 1
    %p48 = por %p46, %p47
    %p49 = scmp.ne.s32.totalorder %s41, %s44
    %p50 = scmp.eq.s32.totalorder %s17, 0
    %p51 = por %p49, %p50
    %p52 = scmp.ne.s32.totalorder %s41, %s44
    %p53 = scmp.eq.s32.totalorder %s22, 1
    %p54 = por %p52, %p53
    %p55 = scmp.ne.s32.totalorder %s44, %s45
    %p56 = scmp.eq.s32.totalorder %s22, 0
    %p57 = por %p55, %p56
    %p58 = scmp.ne.s32.totalorder %s44, %s45
    %p59 = scmp.eq.s32.totalorder %s23, 1
    %p60 = por %p58, %p59
    %p62 = scmp.ne.s32.totalorder %s45, %s61
    %p63 = scmp.eq.s32.totalorder %s23, 0
    %p64 = por %p62, %p63
    %s65 = sadd.s32 %s24, %s25
    %s66 = sadd.s32 %s36, %s32
    %s67 = ssub.s32 %s65, %s66
    %p68 = scmp.eq.s32.totalorder %s67, 0
    %s70 = sadd.s32 %s69, 1
    %s71 = scalar_select %p68, %s69, %s70
    %p74 = pneg %p68
    %p75 = scmp.eq.s32.totalorder %s17, 1
    %p76 = por %p74, %p75
    %p77 = scmp.ne.s32.totalorder %s69, %s72
    %p78 = scmp.eq.s32.totalorder %s17, 0
    %p79 = por %p77, %p78
    %p80 = scmp.ne.s32.totalorder %s69, %s72
    %p81 = scmp.eq.s32.totalorder %s22, 1
    %p82 = por %p80, %p81
    %p83 = scmp.ne.s32.totalorder %s72, %s73
    %p84 = scmp.eq.s32.totalorder %s22, 0
    %p85 = por %p83, %p84
    %p86 = scmp.ne.s32.totalorder %s72, %s73
    %p87 = scmp.eq.s32.totalorder %s23, 1
    %p88 = por %p86, %p87
    %p90 = scmp.ne.s32.totalorder %s73, %s89
    %p91 = scmp.eq.s32.totalorder %s23, 0
    %p92 = por %p90, %p91
    %s94 = sadd.s32 %s93, 1
    %p97 = scmp.eq.s32.totalorder %s17, 1
    %p98 = scmp.ne.s32.totalorder %s93, %s95
    %p99 = scmp.eq.s32.totalorder %s17, 0
    %p100 = por %p98, %p99
    %p101 = scmp.ne.s32.totalorder %s93, %s95
    %p102 = scmp.eq.s32.totalorder %s22, 1
    %p103 = por %p101, %p102
    %p104 = scmp.ne.s32.totalorder %s95, %s96
    %p105 = scmp.eq.s32.totalorder %s22, 0
    %p106 = por %p104, %p105
    %p107 = scmp.ne.s32.totalorder %s95, %s96
    %p108 = scmp.eq.s32.totalorder %s23, 1
    %p109 = por %p107, %p108
    %p111 = scmp.ne.s32.totalorder %s96, %s110
    %p112 = scmp.eq.s32.totalorder %s23, 0
    %p113 = por %p111, %p112
    %s115 = sadd.s32 %s114, 1
    %p118 = scmp.eq.s32.totalorder %s17, 1
    %p119 = scmp.ne.s32.totalorder %s114, %s116
    %p120 = scmp.eq.s32.totalorder %s17, 0
    %p121 = por %p119, %p120
    %p122 = scmp.ne.s32.totalorder %s114, %s116
    %p123 = scmp.eq.s32.totalorder %s22, 1
    %p124 = por %p122, %p123
    %p125 = scmp.ne.s32.totalorder %s116, %s117
    %p126 = scmp.eq.s32.totalorder %s22, 0
    %p127 = por %p125, %p126
    %p128 = scmp.ne.s32.totalorder %s116, %s117
    %p129 = scmp.eq.s32.totalorder %s23, 1
    %p130 = por %p128, %p129
    %p132 = scmp.ne.s32.totalorder %s117, %s131
    %p133 = scmp.eq.s32.totalorder %s23, 0
    %p134 = por %p132, %p133
    %s136 = sadd.s32 %s135, 1
    %p139 = scmp.eq.s32.totalorder %s17, 1
    %p140 = scmp.ne.s32.totalorder %s135, %s137
    %p141 = scmp.eq.s32.totalorder %s17, 0
    %p142 = por %p140, %p141
    %p143 = scmp.ne.s32.totalorder %s135, %s137
    %p144 = scmp.eq.s32.totalorder %s22, 1
    %p145 = por %p143, %p144
    %p146 = scmp.ne.s32.totalorder %s137, %s138
    %p147 = scmp.eq.s32.totalorder %s22, 0
    %p148 = por %p146, %p147
    %p149 = scmp.ne.s32.totalorder %s137, %s138
    %p150 = scmp.eq.s32.totalorder %s23, 1
    %p151 = por %p149, %p150
    %p153 = scmp.ne.s32.totalorder %s138, %s152
    %p154 = scmp.eq.s32.totalorder %s23, 0
    %p155 = por %p153, %p154
    %s157 = sadd.s32 %s156, 1
    %p160 = scmp.eq.s32.totalorder %s17, 1
    %p161 = scmp.ne.s32.totalorder %s156, %s158
    %p162 = scmp.eq.s32.totalorder %s17, 0
    %p163 = por %p161, %p162
    %p164 = scmp.ne.s32.totalorder %s156, %s158
    %p165 = scmp.eq.s32.totalorder %s22, 1
    %p166 = por %p164, %p165
    %p167 = scmp.ne.s32.totalorder %s158, %s159
    %p168 = scmp.eq.s32.totalorder %s22, 0
    %p169 = por %p167, %p168
    %p170 = scmp.ne.s32.totalorder %s158, %s159
    %p171 = scmp.eq.s32.totalorder %s23, 1
    %p172 = por %p170, %p171
    %p174 = scmp.ne.s32.totalorder %s159, %s173
    %p175 = scmp.eq.s32.totalorder %s23, 0
    %p176 = por %p174, %p175
    %s178 = sadd.s32 %s177, 1
    %p181 = scmp.eq.s32.totalorder %s17, 1
    %p182 = scmp.ne.s32.totalorder %s177, %s179
    %p183 = scmp.eq.s32.totalorder %s17, 0
    %p184 = por %p182, %p183
    %p185 = scmp.ne.s32.totalorder %s177, %s179
    %p186 = scmp.eq.s32.totalorder %s22, 1
    %p187 = por %p185, %p186
    %p188 = scmp.ne.s32.totalorder %s179, %s180
    %p189 = scmp.eq.s32.totalorder %s22, 0
    %p190 = por %p188, %p189
    %p191 = scmp.ne.s32.totalorder %s179, %s180
    %p192 = scmp.eq.s32.totalorder %s23, 1
    %p193 = por %p191, %p192
    %p195 = scmp.ne.s32.totalorder %s180, %s194
    %p196 = scmp.eq.s32.totalorder %s23, 0
    %p197 = por %p195, %p196
    %s199 = sadd.s32 %s198, 1
    %p202 = scmp.eq.s32.totalorder %s17, 1
    %p203 = scmp.ne.s32.totalorder %s198, %s200
    %p204 = scmp.eq.s32.totalorder %s17, 0
    %p205 = por %p203, %p204
    %p206 = scmp.ne.s32.totalorder %s198, %s200
    %p207 = scmp.eq.s32.totalorder %s22, 1
    %p208 = por %p206, %p207
    %p209 = scmp.ne.s32.totalorder %s200, %s201
    %p210 = scmp.eq.s32.totalorder %s22, 0
    %p211 = por %p209, %p210
    %p212 = scmp.ne.s32.totalorder %s200, %s201
    %p213 = scmp.eq.s32.totalorder %s23, 1
    %p214 = por %p212, %p213
    %p216 = scmp.ne.s32.totalorder %s201, %s215
    %p217 = scmp.eq.s32.totalorder %s23, 0
    %p218 = por %p216, %p217
    %s220 = sadd.s32 %s219, 1
    %p223 = scmp.eq.s32.totalorder %s17, 1
    %p224 = scmp.ne.s32.totalorder %s219, %s221
    %p225 = scmp.eq.s32.totalorder %s17, 0
    %p226 = por %p224, %p225
    %p227 = scmp.ne.s32.totalorder %s219, %s221
    %p228 = scmp.eq.s32.totalorder %s22, 1
    %p229 = por %p227, %p228
    %p230 = scmp.ne.s32.totalorder %s221, %s222
    %p231 = scmp.eq.s32.totalorder %s22, 0
    %p232 = por %p230, %p231
    %p233 = scmp.ne.s32.totalorder %s221, %s222
    %p234 = scmp.eq.s32.totalorder %s23, 1
    %p235 = por %p233, %p234
    %p237 = scmp.ne.s32.totalorder %s222, %s236
    %p238 = scmp.eq.s32.totalorder %s23, 0
    %p239 = por %p237, %p238
    %s241 = sadd.s32 %s240, 1
    %p244 = scmp.eq.s32.totalorder %s17, 1
    %p245 = scmp.ne.s32.totalorder %s240, %s242
    %p246 = scmp.eq.s32.totalorder %s17, 0
    %p247 = por %p245, %p246
    %p248 = scmp.ne.s32.totalorder %s240, %s242
    %p249 = scmp.eq.s32.totalorder %s22, 1
    %p250 = por %p248, %p249
    %p251 = scmp.ne.s32.totalorder %s242, %s243
    %p252 = scmp.eq.s32.totalorder %s22, 0
    %p253 = por %p251, %p252
    %p254 = scmp.ne.s32.totalorder %s242, %s243
    %p255 = scmp.eq.s32.totalorder %s23, 1
    %p256 = por %p254, %p255
    %p258 = scmp.ne.s32.totalorder %s243, %s257
    %p259 = scmp.eq.s32.totalorder %s23, 0
    %p260 = por %p258, %p259
    %s262 = sadd.s32 %s261, 1
    %p265 = scmp.eq.s32.totalorder %s17, 1
    %p266 = scmp.ne.s32.totalorder %s261, %s263
    %p267 = scmp.eq.s32.totalorder %s17, 0
    %p268 = por %p266, %p267
    %p269 = scmp.ne.s32.totalorder %s261, %s263
    %p270 = scmp.eq.s32.totalorder %s22, 1
    %p271 = por %p269, %p270
    %p272 = scmp.ne.s32.totalorder %s263, %s264
    %p273 = scmp.eq.s32.totalorder %s22, 0
    %p274 = por %p272, %p273
    %p275 = scmp.ne.s32.totalorder %s263, %s264
    %p276 = scmp.eq.s32.totalorder %s23, 1
    %p277 = por %p275, %p276
    %p279 = scmp.ne.s32.totalorder %s264, %s278
    %p280 = scmp.eq.s32.totalorder %s23, 0
    %p281 = por %p279, %p280
    %s282 = ssub.s32 %s24, %s36
    %s283 = ssub.s32 %s25, %s32
    %s284 = sor.u32 %s282, %s283
    %p285 = scmp.eq.s32.totalorder %s284, 0
    %s287 = sadd.s32 %s286, 1
    %s288 = scalar_select %p285, %s286, %s287
    %p291 = pneg %p285
    %p292 = scmp.eq.s32.totalorder %s17, 1
    %p293 = por %p291, %p292
    %p294 = scmp.ne.s32.totalorder %s286, %s289
    %p295 = scmp.eq.s32.totalorder %s17, 0
    %p296 = por %p294, %p295
    %p297 = scmp.ne.s32.totalorder %s286, %s289
    %p298 = scmp.eq.s32.totalorder %s22, 1
    %p299 = por %p297, %p298
    %p300 = scmp.ne.s32.totalorder %s289, %s290
    %p301 = scmp.eq.s32.totalorder %s22, 0
    %p302 = por %p300, %p301
    %p303 = scmp.ne.s32.totalorder %s289, %s290
    %p304 = scmp.eq.s32.totalorder %s23, 1
    %p305 = por %p303, %p304
    %p307 = scmp.ne.s32.totalorder %s290, %s306
    %p308 = scmp.eq.s32.totalorder %s23, 0
    %p309 = por %p307, %p308
    %p310 = scmp.le.s32.totalorder 1, %s17
    %p311 = scmp.lt.s32.totalorder %s17, 3
    %p312 = pnand %p310, %p311
    %p313 = pneg %p312
    // Predicated region
    $region9: #{tpu_custom_call.1} parent=5 // pred_check
      _
    $region10: #{tpu_custom_call.1} parent=5 // pred_check_branch
      %315 = sbr.rel (%p312) target = $region12
    $region11: #{tpu_custom_call.1} parent=5 // pred_region
      %s316 = ssub.s32 %s17, 1
      // Predicated region
      $region13: #{tpu_custom_call.1} parent=11 // pred_check
        %p317 = pneg %p106
      $region14: #{tpu_custom_call.1} parent=11 // pred_check_branch
        %319 = sbr.rel (%p317) target = $region16
      $region15: #{tpu_custom_call.1} parent=11 // pred_region
        _
      $region16: #{tpu_custom_call.1} parent=11 // pred_fallthru
        _
      // Predicated region
      $region17: #{tpu_custom_call.1} parent=11 // pred_check
        %p320 = pneg %p127
      $region18: #{tpu_custom_call.1} parent=11 // pred_check_branch
        %322 = sbr.rel (%p320) target = $region20
      $region19: #{tpu_custom_call.1} parent=11 // pred_region
        _
      $region20: #{tpu_custom_call.1} parent=11 // pred_fallthru
        _
      // Predicated region
      $region21: #{tpu_custom_call.1} parent=11 // pred_check
        %p323 = pneg %p148
      $region22: #{tpu_custom_call.1} parent=11 // pred_check_branch
        %325 = sbr.rel (%p323) target = $region24
      $region23: #{tpu_custom_call.1} parent=11 // pred_region
        _
      $region24: #{tpu_custom_call.1} parent=11 // pred_fallthru
        _
      // Predicated region
      $region25: #{tpu_custom_call.1} parent=11 // pred_check
        %p326 = pneg %p169
      $region26: #{tpu_custom_call.1} parent=11 // pred_check_branch
        %328 = sbr.rel (%p326) target = $region28
      $region27: #{tpu_custom_call.1} parent=11 // pred_region
        _
      $region28: #{tpu_custom_call.1} parent=11 // pred_fallthru
        _
      // Predicated region
      $region29: #{tpu_custom_call.1} parent=11 // pred_check
        %p329 = pneg %p190
      $region30: #{tpu_custom_call.1} parent=11 // pred_check_branch
        %331 = sbr.rel (%p329) target = $region32
      $region31: #{tpu_custom_call.1} parent=11 // pred_region
        _
      $region32: #{tpu_custom_call.1} parent=11 // pred_fallthru
        _
      // Predicated region
      $region33: #{tpu_custom_call.1} parent=11 // pred_check
        %p332 = pneg %p211
      $region34: #{tpu_custom_call.1} parent=11 // pred_check_branch
        %334 = sbr.rel (%p332) target = $region36
      $region35: #{tpu_custom_call.1} parent=11 // pred_region
        _
      $region36: #{tpu_custom_call.1} parent=11 // pred_fallthru
        _
      // Predicated region
      $region37: #{tpu_custom_call.1} parent=11 // pred_check
        %p335 = pneg %p232
      $region38: #{tpu_custom_call.1} parent=11 // pred_check_branch
        %337 = sbr.rel (%p335) target = $region40
      $region39: #{tpu_custom_call.1} parent=11 // pred_region
        _
      $region40: #{tpu_custom_call.1} parent=11 // pred_fallthru
        _
      // Predicated region
      $region41: #{tpu_custom_call.1} parent=11 // pred_check
        %p338 = pneg %p253
      $region42: #{tpu_custom_call.1} parent=11 // pred_check_branch
        %340 = sbr.rel (%p338) target = $region44
      $region43: #{tpu_custom_call.1} parent=11 // pred_region
        _
      $region44: #{tpu_custom_call.1} parent=11 // pred_fallthru
        _
      // Predicated region
      $region45: #{tpu_custom_call.1} parent=11 // pred_check
        %p341 = pneg %p274
      $region46: #{tpu_custom_call.1} parent=11 // pred_check_branch
        %343 = sbr.rel (%p341) target = $region48
      $region47: #{tpu_custom_call.1} parent=11 // pred_region
        _
      $region48: #{tpu_custom_call.1} parent=11 // pred_fallthru
        _
    $region12: #{tpu_custom_call.1} parent=5 // pred_fallthru
      _
    %p344 = scmp.lt.s32.totalorder %s17, 2
    // Predicated region
    $region49: #{tpu_custom_call.1} parent=5 // pred_check
      %p345 = pneg %p344
    $region50: #{tpu_custom_call.1} parent=5 // pred_check_branch
      %347 = sbr.rel (%p345) target = $region52
    $region51: #{tpu_custom_call.1} parent=5 // pred_region
      // Predicated region
      $region53: #{tpu_custom_call.1} parent=51 // pred_check
        %p348 = pneg %p51
      $region54: #{tpu_custom_call.1} parent=51 // pred_check_branch
        %350 = sbr.rel (%p348) target = $region56
      $region55: #{tpu_custom_call.1} parent=51 // pred_region
        %s351 = smul.u32 16, %s25
        %p352 = scmp.lt.s32.totalorder %s24, 1
        %s353 = scalar_select %p352, %s24, 1
        %p354 = scmp.lt.s32.totalorder %s351, 15
        %s355 = scalar_select %p354, %s351, 15
        %s356 = smul.addr %s355, 2
        %s357 = smul.addr %s353, 32
        %s358 = sadd.s32 %s356, %s357
        %s359 = smul.addr %s358, 8
        %s360 = scalar_lea.vmem %s0, %s359
        %s361 = smul.u32 16, %s25
      $region56: #{tpu_custom_call.1} parent=51 // pred_fallthru
        _
      // Predicated region
      $region57: #{tpu_custom_call.1} parent=51 // pred_check
        %p362 = pneg %p79
      $region58: #{tpu_custom_call.1} parent=51 // pred_check_branch
        %364 = sbr.rel (%p362) target = $region60
      $region59: #{tpu_custom_call.1} parent=51 // pred_region
        %s365 = sadd.s32 %s24, %s25
        %p366 = scmp.lt.s32.totalorder %s365, 1
        %s367 = scalar_select %p366, %s365, 1
        %s368 = smul.addr %s367, 12
        %s369 = smul.addr %s368, 8
        %s370 = scalar_lea.vmem %s1, %s369
        %s371 = sadd.s32 %s24, %s25
      $region60: #{tpu_custom_call.1} parent=51 // pred_fallthru
        _
    $region52: #{tpu_custom_call.1} parent=5 // pred_fallthru
      _
    %p372 = scmp.le.s32.totalorder 1, %s17
    %p373 = scmp.lt.s32.totalorder %s17, 3
    %p374 = pnand %p372, %p373
    %p375 = pneg %p374
    // Predicated region
    $region61: #{tpu_custom_call.1} parent=5 // pred_check
      _
    $region62: #{tpu_custom_call.1} parent=5 // pred_check_branch
      %377 = sbr.rel (%p374) target = $region64
    $region63: #{tpu_custom_call.1} parent=5 // pred_region
      %s378 = ssub.s32 %s17, 1
      %s379 = smul.u32 16, %s27
      %p380 = scmp.lt.s32.totalorder %s26, 1
      %s381 = scalar_select %p380, %s26, 1
      %p382 = scmp.lt.s32.totalorder %s379, 15
      %s383 = scalar_select %p382, %s379, 15
      %s384 = smul.addr %s383, 2
      %s385 = smul.addr %s381, 32
      %s386 = sadd.s32 %s384, %s385
      %s387 = smul.addr %s386, 8
      %s388 = scalar_lea.vmem %s0, %s387
      %p389 = pneg %p57
      %p390 = pneg %p54
      %s391 = sadd.s32 %s26, %s27
      %p392 = scmp.lt.s32.totalorder %s391, 1
      %s393 = scalar_select %p392, %s391, 1
      %s394 = smul.addr %s393, 12
      %s395 = smul.addr %s394, 8
      %s396 = scalar_lea.vmem %s1, %s395
      %p397 = pneg %p85
      %p398 = pneg %p82
      %p399 = pneg %p106
      %p400 = pneg %p103
      %p401 = pneg %p127
      %p402 = pneg %p124
      %p403 = pneg %p148
      %p404 = pneg %p145
      %p405 = pneg %p169
      %p406 = pneg %p166
      %p407 = pneg %p190
      %p408 = pneg %p187
      %p409 = pneg %p211
      %p410 = pneg %p208
      %p411 = pneg %p232
      %p412 = pneg %p229
      %p413 = pneg %p253
      %p414 = pneg %p250
      %p415 = pneg %p274
      %p416 = pneg %p271
      %p417 = pneg %p302
      %p418 = pneg %p299
      %s419 = smul.u32 16, %s27
      %p420 = scmp.lt.s32.totalorder %s26, 1
      %s421 = scalar_select %p420, %s26, 1
      %p422 = scmp.lt.s32.totalorder %s419, 15
      %s423 = scalar_select %p422, %s419, 15
      %s424 = smul.addr %s423, 2
      %s425 = smul.addr %s421, 32
      %s426 = sadd.s32 %s424, %s425
      %s427 = smul.addr %s426, 8
      %s428 = scalar_lea.vmem %s11, %s427
      %s429 = smul.u32 16, %s27
      %p430 = scmp.lt.s32.totalorder %s26, 1
      %s431 = scalar_select %p430, %s26, 1
      %p432 = scmp.lt.s32.totalorder %s429, 15
      %s433 = scalar_select %p432, %s429, 15
      %s434 = smul.addr %s433, 2
      %s435 = smul.addr %s431, 32
      %s436 = sadd.s32 %s434, %s435
      %s437 = smul.addr %s436, 8
      %s438 = scalar_lea.vmem %s0, %s437
      %s439 = smul.u32 16, %s27
      %s440 = sadd.s32 %s26, %s27
      %p441 = scmp.lt.s32.totalorder %s440, 1
      %s442 = scalar_select %p441, %s440, 1
      %s443 = smul.addr %s442, 12
      %s444 = smul.addr %s443, 8
      %s445 = scalar_lea.vmem %s1, %s444
      %s446 = sadd.s32 %s26, %s27
      %s447 = smul.u32 16, %s27
      %p448 = scmp.lt.s32.totalorder %s26, 1
      %s449 = scalar_select %p448, %s26, 1
      %p450 = scmp.lt.s32.totalorder %s447, 15
      %s451 = scalar_select %p450, %s447, 15
      %s452 = smul.addr %s451, 2
      %s453 = smul.addr %s449, 32
      %s454 = sadd.s32 %s452, %s453
      %s455 = smul.addr %s454, 8
      %s456 = scalar_lea.vmem %s11, %s455
      %s457 = smul.u32 16, %s27
      %vm459 = vcmask 64512
      %460 = vst.msk [vmem:[#allocation2] sm:$0xff] %vm459, 0.0
      %461 = vst.msk [vmem:[#allocation2 + $0x20] sm:$0xff] %vm459, 0.0
      %462 = vst.msk [vmem:[#allocation2 + $0x40] sm:$0xff] %vm459, 0.0
      %463 = vst.msk [vmem:[#allocation2 + $0x60] sm:$0xff] %vm459, 0.0
      %464 = vst.msk [vmem:[#allocation2 + $0x80] sm:$0xff] %vm459, 0.0
      %465 = vst.msk [vmem:[#allocation2 + $0xa0] sm:$0xff] %vm459, 0.0
      %466 = vst.msk [vmem:[#allocation2 + $0xc0] sm:$0xff] %vm459, 0.0
      %467 = vst.msk [vmem:[#allocation2 + $0xe0] sm:$0xff] %vm459, 0.0
      %468 = vst.msk [vmem:[#allocation2 + $0x100] sm:$0xff] %vm459, 0.0
      %469 = vst.msk [vmem:[#allocation2 + $0x120] sm:$0xff] %vm459, 0.0
      %470 = vst.msk [vmem:[#allocation2 + $0x140] sm:$0xff] %vm459, 0.0
      %471 = vst.msk [vmem:[#allocation2 + $0x160] sm:$0xff] %vm459, 0.0
      %472 = vst.msk [vmem:[#allocation2 + $0x180] sm:$0xff] %vm459, 0.0
      %473 = vst.msk [vmem:[#allocation2 + $0x1a0] sm:$0xff] %vm459, 0.0
      %474 = vst.msk [vmem:[#allocation2 + $0x1c0] sm:$0xff] %vm459, 0.0
      %475 = vst.msk [vmem:[#allocation2 + $0x1e0] sm:$0xff] %vm459, 0.0
      %476 = vst.msk [vmem:[#allocation2 + $0x200] sm:$0xff] %vm459, 0.0
      %477 = vst.msk [vmem:[#allocation2 + $0x220] sm:$0xff] %vm459, 0.0
      %478 = vst.msk [vmem:[#allocation2 + $0x240] sm:$0xff] %vm459, 0.0
      %479 = vst.msk [vmem:[#allocation2 + $0x260] sm:$0xff] %vm459, 0.0
      %480 = vst.msk [vmem:[#allocation2 + $0x280] sm:$0xff] %vm459, 0.0
      %481 = vst.msk [vmem:[#allocation2 + $0x2a0] sm:$0xff] %vm459, 0.0
      %482 = vst.msk [vmem:[#allocation2 + $0x18] sm:$0xff] %vm459, 0.0
      %483 = vst.msk [vmem:[#allocation2 + $0x38] sm:$0xff] %vm459, 0.0
      %484 = vst.msk [vmem:[#allocation2 + $0x58] sm:$0xff] %vm459, 0.0
      %485 = vst.msk [vmem:[#allocation2 + $0x78] sm:$0xff] %vm459, 0.0
      %486 = vst.msk [vmem:[#allocation2 + $0x98] sm:$0xff] %vm459, 0.0
      %487 = vst.msk [vmem:[#allocation2 + $0xb8] sm:$0xff] %vm459, 0.0
      %488 = vst.msk [vmem:[#allocation2 + $0xd8] sm:$0xff] %vm459, 0.0
      %489 = vst.msk [vmem:[#allocation2 + $0xf8] sm:$0xff] %vm459, 0.0
      %490 = vst.msk [vmem:[#allocation2 + $0x118] sm:$0xff] %vm459, 0.0
      %491 = vst.msk [vmem:[#allocation2 + $0x138] sm:$0xff] %vm459, 0.0
      %492 = vst.msk [vmem:[#allocation2 + $0x158] sm:$0xff] %vm459, 0.0
      %493 = vst.msk [vmem:[#allocation2 + $0x178] sm:$0xff] %vm459, 0.0
      %494 = vst.msk [vmem:[#allocation2 + $0x198] sm:$0xff] %vm459, 0.0
      %495 = vst.msk [vmem:[#allocation2 + $0x1b8] sm:$0xff] %vm459, 0.0
      %496 = vst.msk [vmem:[#allocation2 + $0x1d8] sm:$0xff] %vm459, 0.0
      %497 = vst.msk [vmem:[#allocation2 + $0x1f8] sm:$0xff] %vm459, 0.0
      %498 = vst.msk [vmem:[#allocation2 + $0x218] sm:$0xff] %vm459, 0.0
      %499 = vst.msk [vmem:[#allocation2 + $0x238] sm:$0xff] %vm459, 0.0
      %500 = vst.msk [vmem:[#allocation2 + $0x258] sm:$0xff] %vm459, 0.0
      %501 = vst.msk [vmem:[#allocation2 + $0x278] sm:$0xff] %vm459, 0.0
      %502 = vst.msk [vmem:[#allocation2 + $0x298] sm:$0xff] %vm459, 0.0
      %503 = vst.msk [vmem:[#allocation2 + $0x2b8] sm:$0xff] %vm459, 0.0
      %v504 = vld [vmem:[%s445] sm:$0xff]
      %v505 = vld [vmem:[%s445 + $0x8] sm:$0xff]
      %v506 = vld [vmem:[%s445 + $0x10] sm:$0xff]
      %v507 = vld [vmem:[%s445 + $0x18] sm:$0xff]
      %v508 = vld [vmem:[%s445 + $0x20] sm:$0xff]
      %v509 = vld [vmem:[%s445 + $0x28] sm:$0xff]
      %510 = vst.msk [vmem:[#allocation2 + $0x8] sm:$0xff] %vm459, %v504
      %511 = vst.msk [vmem:[#allocation2 + $0x10] sm:$0xff] %vm459, %v505
      %512 = vst.msk [vmem:[#allocation2 + $0x28] sm:$0xff] %vm459, %v506
      %513 = vst.msk [vmem:[#allocation2 + $0x30] sm:$0xff] %vm459, %v507
      %514 = vst.msk [vmem:[#allocation2 + $0x48] sm:$0xff] %vm459, %v508
      %515 = vst.msk [vmem:[#allocation2 + $0x50] sm:$0xff] %vm459, %v509
      %v516 = vld [vmem:[%s438] sm:$0xff]
      %v517 = vld [vmem:[%s438 + $0x8] sm:$0xff]
      %v518 = vld [vmem:[%s438 + $0x10] sm:$0xff]
      %v519 = vld [vmem:[%s438 + $0x18] sm:$0xff]
      %v520 = vld [vmem:[%s438 + $0x20] sm:$0xff]
      %v521 = vld [vmem:[%s438 + $0x28] sm:$0xff]
      %v522 = vld [vmem:[%s438 + $0x30] sm:$0xff]
      %v523 = vld [vmem:[%s438 + $0x38] sm:$0xff]
      %v524 = vld [vmem:[%s438 + $0x40] sm:$0xff]
      %v525 = vld [vmem:[%s438 + $0x48] sm:$0xff]
      %v526 = vld [vmem:[%s438 + $0x50] sm:$0xff]
      %v527 = vld [vmem:[%s438 + $0x58] sm:$0xff]
      %v528 = vld [vmem:[%s438 + $0x60] sm:$0xff]
      %v529 = vld [vmem:[%s438 + $0x68] sm:$0xff]
      %v530 = vld [vmem:[%s438 + $0x70] sm:$0xff]
      %v531 = vld [vmem:[%s438 + $0x78] sm:$0xff]
      %v532 = vld [vmem:[%s438 + $0x80] sm:$0xff]
      %v533 = vld [vmem:[%s438 + $0x88] sm:$0xff]
      %v534 = vld [vmem:[%s438 + $0x90] sm:$0xff]
      %v535 = vld [vmem:[%s438 + $0x98] sm:$0xff]
      %v536 = vld [vmem:[%s438 + $0xa0] sm:$0xff]
      %v537 = vld [vmem:[%s438 + $0xa8] sm:$0xff]
      %v538 = vld [vmem:[%s438 + $0xb0] sm:$0xff]
      %v539 = vld [vmem:[%s438 + $0xb8] sm:$0xff]
      %v540 = vld [vmem:[%s438 + $0xc0] sm:$0xff]
      %v541 = vld [vmem:[%s438 + $0xc8] sm:$0xff]
      %v542 = vld [vmem:[%s438 + $0xd0] sm:$0xff]
      %v543 = vld [vmem:[%s438 + $0xd8] sm:$0xff]
      %v544 = vld [vmem:[%s438 + $0xe0] sm:$0xff]
      %v545 = vld [vmem:[%s438 + $0xe8] sm:$0xff]
      %v546 = vld [vmem:[%s438 + $0xf0] sm:$0xff]
      %v547 = vld [vmem:[%s438 + $0xf8] sm:$0xff]
      %s548 = scalar_lea.vmem [#allocation2], 96
      %549 = vst.msk [vmem:[%s548 + $0x8] sm:$0xff] %vm459, %v516
      %550 = vst.msk [vmem:[%s548 + $0x10] sm:$0xff] %vm459, %v517
      %551 = vst.msk [vmem:[%s548 + $0x28] sm:$0xff] %vm459, %v518
      %552 = vst.msk [vmem:[%s548 + $0x30] sm:$0xff] %vm459, %v519
      %553 = vst.msk [vmem:[%s548 + $0x48] sm:$0xff] %vm459, %v520
      %554 = vst.msk [vmem:[%s548 + $0x50] sm:$0xff] %vm459, %v521
      %555 = vst.msk [vmem:[%s548 + $0x68] sm:$0xff] %vm459, %v522
      %556 = vst.msk [vmem:[%s548 + $0x70] sm:$0xff] %vm459, %v523
      %557 = vst.msk [vmem:[%s548 + $0x88] sm:$0xff] %vm459, %v524
      %558 = vst.msk [vmem:[%s548 + $0x90] sm:$0xff] %vm459, %v525
      %559 = vst.msk [vmem:[%s548 + $0xa8] sm:$0xff] %vm459, %v526
      %560 = vst.msk [vmem:[%s548 + $0xb0] sm:$0xff] %vm459, %v527
      %561 = vst.msk [vmem:[%s548 + $0xc8] sm:$0xff] %vm459, %v528
      %562 = vst.msk [vmem:[%s548 + $0xd0] sm:$0xff] %vm459, %v529
      %563 = vst.msk [vmem:[%s548 + $0xe8] sm:$0xff] %vm459, %v530
      %564 = vst.msk [vmem:[%s548 + $0xf0] sm:$0xff] %vm459, %v531
      %565 = vst.msk [vmem:[%s548 + $0x108] sm:$0xff] %vm459, %v532
      %566 = vst.msk [vmem:[%s548 + $0x110] sm:$0xff] %vm459, %v533
      %567 = vst.msk [vmem:[%s548 + $0x128] sm:$0xff] %vm459, %v534
      %568 = vst.msk [vmem:[%s548 + $0x130] sm:$0xff] %vm459, %v535
      %569 = vst.msk [vmem:[%s548 + $0x148] sm:$0xff] %vm459, %v536
      %570 = vst.msk [vmem:[%s548 + $0x150] sm:$0xff] %vm459, %v537
      %571 = vst.msk [vmem:[%s548 + $0x168] sm:$0xff] %vm459, %v538
      %572 = vst.msk [vmem:[%s548 + $0x170] sm:$0xff] %vm459, %v539
      %573 = vst.msk [vmem:[%s548 + $0x188] sm:$0xff] %vm459, %v540
      %574 = vst.msk [vmem:[%s548 + $0x190] sm:$0xff] %vm459, %v541
      %575 = vst.msk [vmem:[%s548 + $0x1a8] sm:$0xff] %vm459, %v542
      %576 = vst.msk [vmem:[%s548 + $0x1b0] sm:$0xff] %vm459, %v543
      %577 = vst.msk [vmem:[%s548 + $0x1c8] sm:$0xff] %vm459, %v544
      %578 = vst.msk [vmem:[%s548 + $0x1d0] sm:$0xff] %vm459, %v545
      %579 = vst.msk [vmem:[%s548 + $0x1e8] sm:$0xff] %vm459, %v546
      %580 = vst.msk [vmem:[%s548 + $0x1f0] sm:$0xff] %vm459, %v547
      %s581 = scalar_lea.vmem %s445, 48
      %v582 = vld [vmem:[%s581] sm:$0xff]
      %v583 = vld [vmem:[%s581 + $0x8] sm:$0xff]
      %v584 = vld [vmem:[%s581 + $0x10] sm:$0xff]
      %v585 = vld [vmem:[%s581 + $0x18] sm:$0xff]
      %v586 = vld [vmem:[%s581 + $0x20] sm:$0xff]
      %v587 = vld [vmem:[%s581 + $0x28] sm:$0xff]
      %s588 = scalar_lea.vmem [#allocation2], 608
      %589 = vst.msk [vmem:[%s588 + $0x8] sm:$0xff] %vm459, %v582
      %590 = vst.msk [vmem:[%s588 + $0x10] sm:$0xff] %vm459, %v583
      %591 = vst.msk [vmem:[%s588 + $0x28] sm:$0xff] %vm459, %v584
      %592 = vst.msk [vmem:[%s588 + $0x30] sm:$0xff] %vm459, %v585
      %593 = vst.msk [vmem:[%s588 + $0x48] sm:$0xff] %vm459, %v586
      %594 = vst.msk [vmem:[%s588 + $0x50] sm:$0xff] %vm459, %v587
      %v595 = vld [vmem:[%s2] sm:$0xff]
      %v596 = vld [vmem:[%s2 + $0x8] sm:$0xff]
      %v597 = vld [vmem:[%s2 + $0x10] sm:$0xff]
      %v598 = vld [vmem:[%s2 + $0x18] sm:$0xff]
      %v599 = vld [vmem:[%s2 + $0x20] sm:$0xff]
      %v600 = vld [vmem:[%s2 + $0x28] sm:$0xff]
      %v601 = vld [vmem:[%s2 + $0x30] sm:$0x1]
      %v602 = vld [vmem:[%s3] sm:$0x1]
      %v603 = vld [vmem:[%s4] sm:$0x1]
      %v604 = vld [vmem:[%s5] sm:$0x1]
      loop: start=0, step=1, limit=16
      $region65: #{tpu_custom_call.1} parent=63 // loop_pre_header
        _
      $region66: #{tpu_custom_call.1} parent=63 // loop_header
        %s606 = sphi 0, %s610
        %p607 = scmp.ge.s32.totalorder %s606, 16
      $region67: #{tpu_custom_call.1} parent=63 // loop_header_branch
        %609 = sbr.rel (%p607) target = $region71
      $region68: #{tpu_custom_call.1} parent=63 // loop_body
        %s611 = smul.u32 %s606, 32
        %s612 = scalar_lea.vmem [#allocation2], %s611
        %v613 = vld [vmem:[%s612] sm:$0xff]
        %v614 = vld [vmem:[%s612 + $0x8] sm:$0xff]
        %v615 = vld [vmem:[%s612 + $0x10] sm:$0xff]
        %v616 = vld [vmem:[%s612 + $0x18] sm:$0xff]
        %v617 = vperm.slane %v595, 0
        %v618 = vmul.f32 %v613, %v617
        %v619 = vmul.f32 %v614, %v617
        %v620 = vmul.f32 %v615, %v617
        %v621 = vadd.f32 %v618, 0.0
        %v622 = vadd.f32 %v619, 0.0
        %v623 = vadd.f32 %v620, 0.0
        %v624 = vperm.slane %v595, 1
        %v625 = vmul.f32 %v613, %v624
        %v626 = vmul.f32 %v614, %v624
        %v627 = vmul.f32 %v615, %v624
        %vm631 = vcmask 1046528
        %v632 = vrot.slane %v625, 1
        %v633 = vrot.slane %v626, 1
        %v634 = vsel %vm631, %v632, %v633
        %v635 = vrot.slane %v627, 1
        %v636 = vsel %vm631, %v633, %v635
        %v640 = vadd.f32 %v621, %v634
        %v641 = vadd.f32 %v622, %v636
        %v642 = vadd.f32 %v623, %v635
        %v643 = vperm.slane %v595, 2
        %v644 = vmul.f32 %v613, %v643
        %v645 = vmul.f32 %v614, %v643
        %v646 = vmul.f32 %v615, %v643
        %vm650 = vcmask 1045504
        %v651 = vrot.slane %v644, 2
        %v652 = vrot.slane %v645, 2
        %v653 = vsel %vm650, %v651, %v652
        %v654 = vrot.slane %v646, 2
        %v655 = vsel %vm650, %v652, %v654
        %v659 = vadd.f32 %v640, %v653
        %v660 = vadd.f32 %v641, %v655
        %v661 = vadd.f32 %v642, %v654
        %v662 = vperm.slane %v595, 3
        %v663 = vmul.f32 %v614, %v662
        %v664 = vmul.f32 %v615, %v662
        %vm667 = vcmask 1044480
        %v668 = vrot.slane %v663, 3
        %v669 = vrot.slane %v664, 3
        %v670 = vsel %vm667, %v668, %v669
        %v674 = vadd.f32 %v659, %v668
        %v675 = vadd.f32 %v660, %v670
        %v676 = vadd.f32 %v661, %v669
        %v677 = vperm.slane %v595, 4
        %v678 = vmul.f32 %v614, %v677
        %v679 = vmul.f32 %v615, %v677
        %v680 = vmul.f32 %v616, %v677
        %vm684 = vcmask 1043456
        %v685 = vrot.slane %v678, 4
        %v686 = vrot.slane %v679, 4
        %v687 = vsel %vm684, %v685, %v686
        %v688 = vrot.slane %v680, 4
        %v689 = vsel %vm684, %v686, %v688
        %v693 = vadd.f32 %v674, %v685
        %v694 = vadd.f32 %v675, %v687
        %v695 = vadd.f32 %v676, %v689
        %v696 = vperm.slane %v595, 5
        %v697 = vmul.f32 %v614, %v696
        %v698 = vmul.f32 %v615, %v696
        %v699 = vmul.f32 %v616, %v696
        %vm703 = vcmask 1042432
        %v704 = vrot.slane %v697, 5
        %v705 = vrot.slane %v698, 5
        %v706 = vsel %vm703, %v704, %v705
        %v707 = vrot.slane %v699, 5
        %v708 = vsel %vm703, %v705, %v707
        %v712 = vadd.f32 %v693, %v704
        %v713 = vadd.f32 %v694, %v706
        %v714 = vadd.f32 %v695, %v708
        %v715 = vperm.slane %v595, 6
        %v716 = vmul.f32 %v614, %v715
        %v717 = vmul.f32 %v615, %v715
        %v718 = vmul.f32 %v616, %v715
        %vm722 = vcmask 1041408
        %v723 = vrot.slane %v716, 6
        %v724 = vrot.slane %v717, 6
        %v725 = vsel %vm722, %v723, %v724
        %v726 = vrot.slane %v718, 6
        %v727 = vsel %vm722, %v724, %v726
        %v731 = vadd.f32 %v712, %v723
        %v732 = vadd.f32 %v713, %v725
        %v733 = vadd.f32 %v714, %v727
        %s734 = sadd.s32 %s606, 1
        %s735 = smul.u32 %s734, 32
        %s736 = scalar_lea.vmem [#allocation2], %s735
        %v737 = vld [vmem:[%s736] sm:$0xff]
        %v738 = vld [vmem:[%s736 + $0x8] sm:$0xff]
        %v739 = vld [vmem:[%s736 + $0x10] sm:$0xff]
        %v740 = vld [vmem:[%s736 + $0x18] sm:$0xff]
        %v741 = vperm.slane %v595, 7
        %v742 = vmul.f32 %v737, %v741
        %v743 = vmul.f32 %v738, %v741
        %v744 = vmul.f32 %v739, %v741
        %v745 = vadd.f32 %v731, %v742
        %v746 = vadd.f32 %v732, %v743
        %v747 = vadd.f32 %v733, %v744
        %v748 = vperm.slane %v596, 0
        %v749 = vmul.f32 %v737, %v748
        %v750 = vmul.f32 %v738, %v748
        %v751 = vmul.f32 %v739, %v748
        %v755 = vrot.slane %v749, 1
        %v756 = vrot.slane %v750, 1
        %v757 = vsel %vm631, %v755, %v756
        %v758 = vrot.slane %v751, 1
        %v759 = vsel %vm631, %v756, %v758
        %v763 = vadd.f32 %v745, %v757
        %v764 = vadd.f32 %v746, %v759
        %v765 = vadd.f32 %v747, %v758
        %v766 = vperm.slane %v596, 1
        %v767 = vmul.f32 %v737, %v766
        %v768 = vmul.f32 %v738, %v766
        %v769 = vmul.f32 %v739, %v766
        %v773 = vrot.slane %v767, 2
        %v774 = vrot.slane %v768, 2
        %v775 = vsel %vm650, %v773, %v774
        %v776 = vrot.slane %v769, 2
        %v777 = vsel %vm650, %v774, %v776
        %v781 = vadd.f32 %v763, %v775
        %v782 = vadd.f32 %v764, %v777
        %v783 = vadd.f32 %v765, %v776
        %v784 = vperm.slane %v596, 2
        %v785 = vmul.f32 %v738, %v784
        %v786 = vmul.f32 %v739, %v784
        %v789 = vrot.slane %v785, 3
        %v790 = vrot.slane %v786, 3
        %v791 = vsel %vm667, %v789, %v790
        %v795 = vadd.f32 %v781, %v789
        %v796 = vadd.f32 %v782, %v791
        %v797 = vadd.f32 %v783, %v790
        %v798 = vperm.slane %v596, 3
        %v799 = vmul.f32 %v738, %v798
        %v800 = vmul.f32 %v739, %v798
        %v801 = vmul.f32 %v740, %v798
        %v805 = vrot.slane %v799, 4
        %v806 = vrot.slane %v800, 4
        %v807 = vsel %vm684, %v805, %v806
        %v808 = vrot.slane %v801, 4
        %v809 = vsel %vm684, %v806, %v808
        %v813 = vadd.f32 %v795, %v805
        %v814 = vadd.f32 %v796, %v807
        %v815 = vadd.f32 %v797, %v809
        %v816 = vperm.slane %v596, 4
        %v817 = vmul.f32 %v738, %v816
        %v818 = vmul.f32 %v739, %v816
        %v819 = vmul.f32 %v740, %v816
        %v823 = vrot.slane %v817, 5
        %v824 = vrot.slane %v818, 5
        %v825 = vsel %vm703, %v823, %v824
        %v826 = vrot.slane %v819, 5
        %v827 = vsel %vm703, %v824, %v826
        %v831 = vadd.f32 %v813, %v823
        %v832 = vadd.f32 %v814, %v825
        %v833 = vadd.f32 %v815, %v827
        %v834 = vperm.slane %v596, 5
        %v835 = vmul.f32 %v738, %v834
        %v836 = vmul.f32 %v739, %v834
        %v837 = vmul.f32 %v740, %v834
        %v841 = vrot.slane %v835, 6
        %v842 = vrot.slane %v836, 6
        %v843 = vsel %vm722, %v841, %v842
        %v844 = vrot.slane %v837, 6
        %v845 = vsel %vm722, %v842, %v844
        %v849 = vadd.f32 %v831, %v841
        %v850 = vadd.f32 %v832, %v843
        %v851 = vadd.f32 %v833, %v845
        %s852 = sadd.s32 %s606, 2
        %s853 = smul.u32 %s852, 32
        %s854 = scalar_lea.vmem [#allocation2], %s853
        %v855 = vld [vmem:[%s854] sm:$0xff]
        %v856 = vld [vmem:[%s854 + $0x8] sm:$0xff]
        %v857 = vld [vmem:[%s854 + $0x10] sm:$0xff]
        %v858 = vld [vmem:[%s854 + $0x18] sm:$0xff]
        %v859 = vperm.slane %v596, 6
        %v860 = vmul.f32 %v855, %v859
        %v861 = vmul.f32 %v856, %v859
        %v862 = vmul.f32 %v857, %v859
        %v863 = vadd.f32 %v849, %v860
        %v864 = vadd.f32 %v850, %v861
        %v865 = vadd.f32 %v851, %v862
        %v866 = vperm.slane %v596, 7
        %v867 = vmul.f32 %v855, %v866
        %v868 = vmul.f32 %v856, %v866
        %v869 = vmul.f32 %v857, %v866
        %v873 = vrot.slane %v867, 1
        %v874 = vrot.slane %v868, 1
        %v875 = vsel %vm631, %v873, %v874
        %v876 = vrot.slane %v869, 1
        %v877 = vsel %vm631, %v874, %v876
        %v881 = vadd.f32 %v863, %v875
        %v882 = vadd.f32 %v864, %v877
        %v883 = vadd.f32 %v865, %v876
        %v884 = vperm.slane %v597, 0
        %v885 = vmul.f32 %v855, %v884
        %v886 = vmul.f32 %v856, %v884
        %v887 = vmul.f32 %v857, %v884
        %v891 = vrot.slane %v885, 2
        %v892 = vrot.slane %v886, 2
        %v893 = vsel %vm650, %v891, %v892
        %v894 = vrot.slane %v887, 2
        %v895 = vsel %vm650, %v892, %v894
        %v899 = vadd.f32 %v881, %v893
        %v900 = vadd.f32 %v882, %v895
        %v901 = vadd.f32 %v883, %v894
        %v902 = vperm.slane %v597, 1
        %v903 = vmul.f32 %v856, %v902
        %v904 = vmul.f32 %v857, %v902
        %v907 = vrot.slane %v903, 3
        %v908 = vrot.slane %v904, 3
        %v909 = vsel %vm667, %v907, %v908
        %v913 = vadd.f32 %v899, %v907
        %v914 = vadd.f32 %v900, %v909
        %v915 = vadd.f32 %v901, %v908
        %v916 = vperm.slane %v597, 2
        %v917 = vmul.f32 %v856, %v916
        %v918 = vmul.f32 %v857, %v916
        %v919 = vmul.f32 %v858, %v916
        %v923 = vrot.slane %v917, 4
        %v924 = vrot.slane %v918, 4
        %v925 = vsel %vm684, %v923, %v924
        %v926 = vrot.slane %v919, 4
        %v927 = vsel %vm684, %v924, %v926
        %v931 = vadd.f32 %v913, %v923
        %v932 = vadd.f32 %v914, %v925
        %v933 = vadd.f32 %v915, %v927
        %v934 = vperm.slane %v597, 3
        %v935 = vmul.f32 %v856, %v934
        %v936 = vmul.f32 %v857, %v934
        %v937 = vmul.f32 %v858, %v934
        %v941 = vrot.slane %v935, 5
        %v942 = vrot.slane %v936, 5
        %v943 = vsel %vm703, %v941, %v942
        %v944 = vrot.slane %v937, 5
        %v945 = vsel %vm703, %v942, %v944
        %v949 = vadd.f32 %v931, %v941
        %v950 = vadd.f32 %v932, %v943
        %v951 = vadd.f32 %v933, %v945
        %v952 = vperm.slane %v597, 4
        %v953 = vmul.f32 %v856, %v952
        %v954 = vmul.f32 %v857, %v952
        %v955 = vmul.f32 %v858, %v952
        %v959 = vrot.slane %v953, 6
        %v960 = vrot.slane %v954, 6
        %v961 = vsel %vm722, %v959, %v960
        %v962 = vrot.slane %v955, 6
        %v963 = vsel %vm722, %v960, %v962
        %v967 = vadd.f32 %v949, %v959
        %v968 = vadd.f32 %v950, %v961
        %v969 = vadd.f32 %v951, %v963
        %s970 = sadd.s32 %s606, 3
        %s971 = smul.u32 %s970, 32
        %s972 = scalar_lea.vmem [#allocation2], %s971
        %v973 = vld [vmem:[%s972] sm:$0xff]
        %v974 = vld [vmem:[%s972 + $0x8] sm:$0xff]
        %v975 = vld [vmem:[%s972 + $0x10] sm:$0xff]
        %v976 = vld [vmem:[%s972 + $0x18] sm:$0xff]
        %v977 = vperm.slane %v597, 5
        %v978 = vmul.f32 %v973, %v977
        %v979 = vmul.f32 %v974, %v977
        %v980 = vmul.f32 %v975, %v977
        %v981 = vadd.f32 %v967, %v978
        %v982 = vadd.f32 %v968, %v979
        %v983 = vadd.f32 %v969, %v980
        %v984 = vperm.slane %v597, 6
        %v985 = vmul.f32 %v973, %v984
        %v986 = vmul.f32 %v974, %v984
        %v987 = vmul.f32 %v975, %v984
        %v991 = vrot.slane %v985, 1
        %v992 = vrot.slane %v986, 1
        %v993 = vsel %vm631, %v991, %v992
        %v994 = vrot.slane %v987, 1
        %v995 = vsel %vm631, %v992, %v994
        %v999 = vadd.f32 %v981, %v993
        %v1000 = vadd.f32 %v982, %v995
        %v1001 = vadd.f32 %v983, %v994
        %v1002 = vperm.slane %v597, 7
        %v1003 = vmul.f32 %v973, %v1002
        %v1004 = vmul.f32 %v974, %v1002
        %v1005 = vmul.f32 %v975, %v1002
        %v1009 = vrot.slane %v1003, 2
        %v1010 = vrot.slane %v1004, 2
        %v1011 = vsel %vm650, %v1009, %v1010
        %v1012 = vrot.slane %v1005, 2
        %v1013 = vsel %vm650, %v1010, %v1012
        %v1017 = vadd.f32 %v999, %v1011
        %v1018 = vadd.f32 %v1000, %v1013
        %v1019 = vadd.f32 %v1001, %v1012
        %v1020 = vperm.slane %v598, 0
        %v1021 = vmul.f32 %v974, %v1020
        %v1022 = vmul.f32 %v975, %v1020
        %v1025 = vrot.slane %v1021, 3
        %v1026 = vrot.slane %v1022, 3
        %v1027 = vsel %vm667, %v1025, %v1026
        %v1031 = vadd.f32 %v1017, %v1025
        %v1032 = vadd.f32 %v1018, %v1027
        %v1033 = vadd.f32 %v1019, %v1026
        %v1034 = vperm.slane %v598, 1
        %v1035 = vmul.f32 %v974, %v1034
        %v1036 = vmul.f32 %v975, %v1034
        %v1037 = vmul.f32 %v976, %v1034
        %v1041 = vrot.slane %v1035, 4
        %v1042 = vrot.slane %v1036, 4
        %v1043 = vsel %vm684, %v1041, %v1042
        %v1044 = vrot.slane %v1037, 4
        %v1045 = vsel %vm684, %v1042, %v1044
        %v1049 = vadd.f32 %v1031, %v1041
        %v1050 = vadd.f32 %v1032, %v1043
        %v1051 = vadd.f32 %v1033, %v1045
        %v1052 = vperm.slane %v598, 2
        %v1053 = vmul.f32 %v974, %v1052
        %v1054 = vmul.f32 %v975, %v1052
        %v1055 = vmul.f32 %v976, %v1052
        %v1059 = vrot.slane %v1053, 5
        %v1060 = vrot.slane %v1054, 5
        %v1061 = vsel %vm703, %v1059, %v1060
        %v1062 = vrot.slane %v1055, 5
        %v1063 = vsel %vm703, %v1060, %v1062
        %v1067 = vadd.f32 %v1049, %v1059
        %v1068 = vadd.f32 %v1050, %v1061
        %v1069 = vadd.f32 %v1051, %v1063
        %v1070 = vperm.slane %v598, 3
        %v1071 = vmul.f32 %v974, %v1070
        %v1072 = vmul.f32 %v975, %v1070
        %v1073 = vmul.f32 %v976, %v1070
        %v1077 = vrot.slane %v1071, 6
        %v1078 = vrot.slane %v1072, 6
        %v1079 = vsel %vm722, %v1077, %v1078
        %v1080 = vrot.slane %v1073, 6
        %v1081 = vsel %vm722, %v1078, %v1080
        %v1085 = vadd.f32 %v1067, %v1077
        %v1086 = vadd.f32 %v1068, %v1079
        %v1087 = vadd.f32 %v1069, %v1081
        %s1088 = sadd.s32 %s606, 4
        %s1089 = smul.u32 %s1088, 32
        %s1090 = scalar_lea.vmem [#allocation2], %s1089
        %v1091 = vld [vmem:[%s1090] sm:$0xff]
        %v1092 = vld [vmem:[%s1090 + $0x8] sm:$0xff]
        %v1093 = vld [vmem:[%s1090 + $0x10] sm:$0xff]
        %v1094 = vld [vmem:[%s1090 + $0x18] sm:$0xff]
        %v1095 = vperm.slane %v598, 4
        %v1096 = vmul.f32 %v1091, %v1095
        %v1097 = vmul.f32 %v1092, %v1095
        %v1098 = vmul.f32 %v1093, %v1095
        %v1099 = vadd.f32 %v1085, %v1096
        %v1100 = vadd.f32 %v1086, %v1097
        %v1101 = vadd.f32 %v1087, %v1098
        %v1102 = vperm.slane %v598, 5
        %v1103 = vmul.f32 %v1091, %v1102
        %v1104 = vmul.f32 %v1092, %v1102
        %v1105 = vmul.f32 %v1093, %v1102
        %v1109 = vrot.slane %v1103, 1
        %v1110 = vrot.slane %v1104, 1
        %v1111 = vsel %vm631, %v1109, %v1110
        %v1112 = vrot.slane %v1105, 1
        %v1113 = vsel %vm631, %v1110, %v1112
        %v1117 = vadd.f32 %v1099, %v1111
        %v1118 = vadd.f32 %v1100, %v1113
        %v1119 = vadd.f32 %v1101, %v1112
        %v1120 = vperm.slane %v598, 6
        %v1121 = vmul.f32 %v1091, %v1120
        %v1122 = vmul.f32 %v1092, %v1120
        %v1123 = vmul.f32 %v1093, %v1120
        %v1127 = vrot.slane %v1121, 2
        %v1128 = vrot.slane %v1122, 2
        %v1129 = vsel %vm650, %v1127, %v1128
        %v1130 = vrot.slane %v1123, 2
        %v1131 = vsel %vm650, %v1128, %v1130
        %v1135 = vadd.f32 %v1117, %v1129
        %v1136 = vadd.f32 %v1118, %v1131
        %v1137 = vadd.f32 %v1119, %v1130
        %v1138 = vperm.slane %v598, 7
        %v1139 = vmul.f32 %v1092, %v1138
        %v1140 = vmul.f32 %v1093, %v1138
        %v1143 = vrot.slane %v1139, 3
        %v1144 = vrot.slane %v1140, 3
        %v1145 = vsel %vm667, %v1143, %v1144
        %v1149 = vadd.f32 %v1135, %v1143
        %v1150 = vadd.f32 %v1136, %v1145
        %v1151 = vadd.f32 %v1137, %v1144
        %v1152 = vperm.slane %v599, 0
        %v1153 = vmul.f32 %v1092, %v1152
        %v1154 = vmul.f32 %v1093, %v1152
        %v1155 = vmul.f32 %v1094, %v1152
        %v1159 = vrot.slane %v1153, 4
        %v1160 = vrot.slane %v1154, 4
        %v1161 = vsel %vm684, %v1159, %v1160
        %v1162 = vrot.slane %v1155, 4
        %v1163 = vsel %vm684, %v1160, %v1162
        %v1167 = vadd.f32 %v1149, %v1159
        %v1168 = vadd.f32 %v1150, %v1161
        %v1169 = vadd.f32 %v1151, %v1163
        %v1170 = vperm.slane %v599, 1
        %v1171 = vmul.f32 %v1092, %v1170
        %v1172 = vmul.f32 %v1093, %v1170
        %v1173 = vmul.f32 %v1094, %v1170
        %v1177 = vrot.slane %v1171, 5
        %v1178 = vrot.slane %v1172, 5
        %v1179 = vsel %vm703, %v1177, %v1178
        %v1180 = vrot.slane %v1173, 5
        %v1181 = vsel %vm703, %v1178, %v1180
        %v1185 = vadd.f32 %v1167, %v1177
        %v1186 = vadd.f32 %v1168, %v1179
        %v1187 = vadd.f32 %v1169, %v1181
        %v1188 = vperm.slane %v599, 2
        %v1189 = vmul.f32 %v1092, %v1188
        %v1190 = vmul.f32 %v1093, %v1188
        %v1191 = vmul.f32 %v1094, %v1188
        %v1195 = vrot.slane %v1189, 6
        %v1196 = vrot.slane %v1190, 6
        %v1197 = vsel %vm722, %v1195, %v1196
        %v1198 = vrot.slane %v1191, 6
        %v1199 = vsel %vm722, %v1196, %v1198
        %v1203 = vadd.f32 %v1185, %v1195
        %v1204 = vadd.f32 %v1186, %v1197
        %v1205 = vadd.f32 %v1187, %v1199
        %s1206 = sadd.s32 %s606, 5
        %s1207 = smul.u32 %s1206, 32
        %s1208 = scalar_lea.vmem [#allocation2], %s1207
        %v1209 = vld [vmem:[%s1208] sm:$0xff]
        %v1210 = vld [vmem:[%s1208 + $0x8] sm:$0xff]
        %v1211 = vld [vmem:[%s1208 + $0x10] sm:$0xff]
        %v1212 = vld [vmem:[%s1208 + $0x18] sm:$0xff]
        %v1213 = vperm.slane %v599, 3
        %v1214 = vmul.f32 %v1209, %v1213
        %v1215 = vmul.f32 %v1210, %v1213
        %v1216 = vmul.f32 %v1211, %v1213
        %v1217 = vadd.f32 %v1203, %v1214
        %v1218 = vadd.f32 %v1204, %v1215
        %v1219 = vadd.f32 %v1205, %v1216
        %v1220 = vperm.slane %v599, 4
        %v1221 = vmul.f32 %v1209, %v1220
        %v1222 = vmul.f32 %v1210, %v1220
        %v1223 = vmul.f32 %v1211, %v1220
        %v1227 = vrot.slane %v1221, 1
        %v1228 = vrot.slane %v1222, 1
        %v1229 = vsel %vm631, %v1227, %v1228
        %v1230 = vrot.slane %v1223, 1
        %v1231 = vsel %vm631, %v1228, %v1230
        %v1235 = vadd.f32 %v1217, %v1229
        %v1236 = vadd.f32 %v1218, %v1231
        %v1237 = vadd.f32 %v1219, %v1230
        %v1238 = vperm.slane %v599, 5
        %v1239 = vmul.f32 %v1209, %v1238
        %v1240 = vmul.f32 %v1210, %v1238
        %v1241 = vmul.f32 %v1211, %v1238
        %v1245 = vrot.slane %v1239, 2
        %v1246 = vrot.slane %v1240, 2
        %v1247 = vsel %vm650, %v1245, %v1246
        %v1248 = vrot.slane %v1241, 2
        %v1249 = vsel %vm650, %v1246, %v1248
        %v1253 = vadd.f32 %v1235, %v1247
        %v1254 = vadd.f32 %v1236, %v1249
        %v1255 = vadd.f32 %v1237, %v1248
        %v1256 = vperm.slane %v599, 6
        %v1257 = vmul.f32 %v1210, %v1256
        %v1258 = vmul.f32 %v1211, %v1256
        %v1261 = vrot.slane %v1257, 3
        %v1262 = vrot.slane %v1258, 3
        %v1263 = vsel %vm667, %v1261, %v1262
        %v1267 = vadd.f32 %v1253, %v1261
        %v1268 = vadd.f32 %v1254, %v1263
        %v1269 = vadd.f32 %v1255, %v1262
        %v1270 = vperm.slane %v599, 7
        %v1271 = vmul.f32 %v1210, %v1270
        %v1272 = vmul.f32 %v1211, %v1270
        %v1273 = vmul.f32 %v1212, %v1270
        %v1277 = vrot.slane %v1271, 4
        %v1278 = vrot.slane %v1272, 4
        %v1279 = vsel %vm684, %v1277, %v1278
        %v1280 = vrot.slane %v1273, 4
        %v1281 = vsel %vm684, %v1278, %v1280
        %v1285 = vadd.f32 %v1267, %v1277
        %v1286 = vadd.f32 %v1268, %v1279
        %v1287 = vadd.f32 %v1269, %v1281
        %v1288 = vperm.slane %v600, 0
        %v1289 = vmul.f32 %v1210, %v1288
        %v1290 = vmul.f32 %v1211, %v1288
        %v1291 = vmul.f32 %v1212, %v1288
        %v1295 = vrot.slane %v1289, 5
        %v1296 = vrot.slane %v1290, 5
        %v1297 = vsel %vm703, %v1295, %v1296
        %v1298 = vrot.slane %v1291, 5
        %v1299 = vsel %vm703, %v1296, %v1298
        %v1303 = vadd.f32 %v1285, %v1295
        %v1304 = vadd.f32 %v1286, %v1297
        %v1305 = vadd.f32 %v1287, %v1299
        %v1306 = vperm.slane %v600, 1
        %v1307 = vmul.f32 %v1210, %v1306
        %v1308 = vmul.f32 %v1211, %v1306
        %v1309 = vmul.f32 %v1212, %v1306
        %v1313 = vrot.slane %v1307, 6
        %v1314 = vrot.slane %v1308, 6
        %v1315 = vsel %vm722, %v1313, %v1314
        %v1316 = vrot.slane %v1309, 6
        %v1317 = vsel %vm722, %v1314, %v1316
        %v1321 = vadd.f32 %v1303, %v1313
        %v1322 = vadd.f32 %v1304, %v1315
        %v1323 = vadd.f32 %v1305, %v1317
        %s1324 = sadd.s32 %s606, 6
        %s1325 = smul.u32 %s1324, 32
        %s1326 = scalar_lea.vmem [#allocation2], %s1325
        %v1327 = vld [vmem:[%s1326] sm:$0xff]
        %v1328 = vld [vmem:[%s1326 + $0x8] sm:$0xff]
        %v1329 = vld [vmem:[%s1326 + $0x10] sm:$0xff]
        %v1330 = vld [vmem:[%s1326 + $0x18] sm:$0xff]
        %v1331 = vperm.slane %v600, 2
        %v1332 = vmul.f32 %v1327, %v1331
        %v1333 = vmul.f32 %v1328, %v1331
        %v1334 = vmul.f32 %v1329, %v1331
        %v1335 = vadd.f32 %v1321, %v1332
        %v1336 = vadd.f32 %v1322, %v1333
        %v1337 = vadd.f32 %v1323, %v1334
        %v1338 = vperm.slane %v600, 3
        %v1339 = vmul.f32 %v1327, %v1338
        %v1340 = vmul.f32 %v1328, %v1338
        %v1341 = vmul.f32 %v1329, %v1338
        %v1345 = vrot.slane %v1339, 1
        %v1346 = vrot.slane %v1340, 1
        %v1347 = vsel %vm631, %v1345, %v1346
        %v1348 = vrot.slane %v1341, 1
        %v1349 = vsel %vm631, %v1346, %v1348
        %v1353 = vadd.f32 %v1335, %v1347
        %v1354 = vadd.f32 %v1336, %v1349
        %v1355 = vadd.f32 %v1337, %v1348
        %v1356 = vperm.slane %v600, 4
        %v1357 = vmul.f32 %v1327, %v1356
        %v1358 = vmul.f32 %v1328, %v1356
        %v1359 = vmul.f32 %v1329, %v1356
        %v1363 = vrot.slane %v1357, 2
        %v1364 = vrot.slane %v1358, 2
        %v1365 = vsel %vm650, %v1363, %v1364
        %v1366 = vrot.slane %v1359, 2
        %v1367 = vsel %vm650, %v1364, %v1366
        %v1371 = vadd.f32 %v1353, %v1365
        %v1372 = vadd.f32 %v1354, %v1367
        %v1373 = vadd.f32 %v1355, %v1366
        %v1374 = vperm.slane %v600, 5
        %v1375 = vmul.f32 %v1328, %v1374
        %v1376 = vmul.f32 %v1329, %v1374
        %v1379 = vrot.slane %v1375, 3
        %v1380 = vrot.slane %v1376, 3
        %v1381 = vsel %vm667, %v1379, %v1380
        %v1385 = vadd.f32 %v1371, %v1379
        %v1386 = vadd.f32 %v1372, %v1381
        %v1387 = vadd.f32 %v1373, %v1380
        %v1388 = vperm.slane %v600, 6
        %v1389 = vmul.f32 %v1328, %v1388
        %v1390 = vmul.f32 %v1329, %v1388
        %v1391 = vmul.f32 %v1330, %v1388
        %v1395 = vrot.slane %v1389, 4
        %v1396 = vrot.slane %v1390, 4
        %v1397 = vsel %vm684, %v1395, %v1396
        %v1398 = vrot.slane %v1391, 4
        %v1399 = vsel %vm684, %v1396, %v1398
        %v1403 = vadd.f32 %v1385, %v1395
        %v1404 = vadd.f32 %v1386, %v1397
        %v1405 = vadd.f32 %v1387, %v1399
        %v1406 = vperm.slane %v600, 7
        %v1407 = vmul.f32 %v1328, %v1406
        %v1408 = vmul.f32 %v1329, %v1406
        %v1409 = vmul.f32 %v1330, %v1406
        %v1413 = vrot.slane %v1407, 5
        %v1414 = vrot.slane %v1408, 5
        %v1415 = vsel %vm703, %v1413, %v1414
        %v1416 = vrot.slane %v1409, 5
        %v1417 = vsel %vm703, %v1414, %v1416
        %v1421 = vadd.f32 %v1403, %v1413
        %v1422 = vadd.f32 %v1404, %v1415
        %v1423 = vadd.f32 %v1405, %v1417
        %v1424 = vperm.slane %v601, 0
        %v1425 = vmul.f32 %v1328, %v1424
        %v1426 = vmul.f32 %v1329, %v1424
        %v1427 = vmul.f32 %v1330, %v1424
        %v1431 = vrot.slane %v1425, 6
        %v1432 = vrot.slane %v1426, 6
        %v1433 = vsel %vm722, %v1431, %v1432
        %v1434 = vrot.slane %v1427, 6
        %v1435 = vsel %vm722, %v1432, %v1434
        %v1439 = vadd.f32 %v1421, %v1431
        %v1440 = vadd.f32 %v1422, %v1433
        %v1441 = vadd.f32 %v1423, %v1435
        %v1443 = vperm.slane %v602, 0
        %v1445 = vadd.f32 %v1439, %v1443
        %v1446 = vadd.f32 %v1440, %v1443
        %v1447 = vadd.f32 %v1441, %v1443
        %vm1448 = vcmask 64517
        %v1449 = vsel %vm1448, %v1445, 0.0
        %1450 = vadd.xlane.f32.xlu0 %v1449
        %v1451 = vpop.xlane.xlu0 %1450
        %v1452 = vsel %vm459, %v1446, 0.0
        %1453 = vadd.xlane.f32.xlu0 %v1452
        %v1454 = vpop.xlane.xlu0 %1453
        %vm1455 = vcmask 61440
        %v1456 = vsel %vm1455, %v1447, 0.0
        %1457 = vadd.xlane.f32.xlu0 %v1456
        %v1458 = vpop.xlane.xlu0 %1457
        %v1459 = vrcp.pop 8.0
        %v1460 = vmul.f32 8.0, %v1459
        %v1461 = vsub.f32 1.0, %v1460
        %v1462 = vmul.f32 %v1459, %v1461
        %v1463 = vadd.f32 %v1459, %v1462
        %vm1464 = vweird.f32 %v1459
        %v1465 = vsel %vm1464, %v1459, %v1463
        %v1466 = vmul.f32 %v1451, %v1465
        %v1467 = vmul.f32 %v1454, %v1465
        %v1468 = vmul.f32 %v1458, %v1465
        %v1469 = vsub.f32 %v1445, %v1466
        %v1470 = vsub.f32 %v1446, %v1467
        %v1471 = vsub.f32 %v1447, %v1468
        %v1472 = vmul.f32 %v1469, %v1469
        %v1473 = vmul.f32 %v1470, %v1470
        %v1474 = vmul.f32 %v1471, %v1471
        %v1475 = vsel %vm1448, %v1472, 0.0
        %1476 = vadd.xlane.f32.xlu0 %v1475
        %v1477 = vpop.xlane.xlu0 %1476
        %v1478 = vsel %vm459, %v1473, 0.0
        %1479 = vadd.xlane.f32.xlu0 %v1478
        %v1480 = vpop.xlane.xlu0 %1479
        %v1481 = vsel %vm1455, %v1474, 0.0
        %1482 = vadd.xlane.f32.xlu0 %v1481
        %v1483 = vpop.xlane.xlu0 %1482
        %v1484 = vmul.f32 %v1477, %v1465
        %v1485 = vmul.f32 %v1480, %v1465
        %v1486 = vmul.f32 %v1483, %v1465
        %v1487 = vadd.f32 %v1484, 1e-06
        %v1488 = vadd.f32 %v1485, 1e-06
        %v1489 = vadd.f32 %v1486, 1e-06
        %v1490 = vrsqrt.pop %v1487
        %v1491 = vmul.f32 %v1490, %v1487
        %v1492 = vmul.f32 %v1491, %v1490
        %v1493 = vmul.f32 0.5, %v1492
        %v1494 = vsub.f32 1.5, %v1493
        %v1495 = vmul.f32 %v1490, %v1494
        %vm1496 = vweird.f32 %v1487
        %vm1497 = vweird.f32 %v1490
        %vm1498 = vmor %vm1496, %vm1497
        %v1499 = vsel %vm1498, %v1490, %v1495
        %v1500 = vrsqrt.pop %v1488
        %v1501 = vmul.f32 %v1500, %v1488
        %v1502 = vmul.f32 %v1501, %v1500
        %v1503 = vmul.f32 0.5, %v1502
        %v1504 = vsub.f32 1.5, %v1503
        %v1505 = vmul.f32 %v1500, %v1504
        %vm1506 = vweird.f32 %v1488
        %vm1507 = vweird.f32 %v1500
        %vm1508 = vmor %vm1506, %vm1507
        %v1509 = vsel %vm1508, %v1500, %v1505
        %v1510 = vrsqrt.pop %v1489
        %v1511 = vmul.f32 %v1510, %v1489
        %v1512 = vmul.f32 %v1511, %v1510
        %v1513 = vmul.f32 0.5, %v1512
        %v1514 = vsub.f32 1.5, %v1513
        %v1515 = vmul.f32 %v1510, %v1514
        %vm1516 = vweird.f32 %v1489
        %vm1517 = vweird.f32 %v1510
        %vm1518 = vmor %vm1516, %vm1517
        %v1519 = vsel %vm1518, %v1510, %v1515
        %v1520 = vmul.f32 %v1469, %v1499
        %v1521 = vmul.f32 %v1470, %v1509
        %v1522 = vmul.f32 %v1471, %v1519
        %v1524 = vperm.slane %v603, 0
        %v1526 = vmul.f32 %v1520, %v1524
        %v1527 = vmul.f32 %v1521, %v1524
        %v1528 = vmul.f32 %v1522, %v1524
        %v1530 = vperm.slane %v604, 0
        %v1532 = vadd.f32 %v1526, %v1530
        %v1533 = vadd.f32 %v1527, %v1530
        %v1534 = vadd.f32 %v1528, %v1530
        %v1535 = vpack.c.bf16 %v1532, %v1532
        %v1536 = vpack.c.bf16 %v1533, %v1533
        %v1537 = vpack.c.bf16 %v1534, %v1534
        %vm1538 = vsmask.f32 1280
        %vm1539 = vsmask.f32 5392
        %vm1540 = vmor %vm1538, %vm1539
        %v1542 = vshrl.u32 %v1535, 16
        %v1544 = vrot.slane %v1542, 6
        %v1545 = vshll.u32 %v1535, 16
        %v1547 = vrot.slane %v1545, 7
        %v1548 = vor.u32 %v1544, %v1547
        %v1549 = vrot.slane %v1548, 4
        %v1551 = vshrl.u32 %v1536, 16
        %v1553 = vrot.slane %v1551, 6
        %v1554 = vshll.u32 %v1536, 16
        %v1556 = vrot.slane %v1554, 7
        %v1557 = vor.u32 %v1553, %v1556
        %v1558 = vsel %vm1540, %v1549, %v1557
        %v1559 = vrot.slane %v1557, 4
        %v1561 = vshrl.u32 %v1537, 16
        %v1563 = vrot.slane %v1561, 6
        %v1564 = vshll.u32 %v1537, 16
        %v1566 = vrot.slane %v1564, 7
        %v1567 = vor.u32 %v1563, %v1566
        %v1568 = vsel %vm1540, %v1559, %v1567
        %s1571 = smul.u32 %s606, 2
        %s1572 = smul.addr %s1571, 4
        %s1573 = scalar_lea.vmem [#allocation3], %s1572
        %vm1574 = vcmask 60416
        %1575 = vst.msk [vmem:[%s1573] sm:$0xf] %vm1574, %v1558
        %1576 = vst.msk [vmem:[%s1573 + $0x4] sm:$0xf] %vm1574, %v1568
      $region69: #{tpu_custom_call.1} parent=63 // loop_footer
        %s610 = sadd.s32 1, %s606
      $region70: #{tpu_custom_call.1} parent=63 // loop_footer_branch
        %605 = sbr.rel target = $region66
      $region71: #{tpu_custom_call.1} parent=63 // loop_exit
        _
      %v1577 = vld [vmem:[#allocation3] sm:$0xf]
      %v1578 = vld [vmem:[#allocation3 + $0x4] sm:$0xf]
      %v1579 = vld [vmem:[#allocation3 + $0x8] sm:$0xf]
      %v1580 = vld [vmem:[#allocation3 + $0xc] sm:$0xf]
      %v1581 = vld [vmem:[#allocation3 + $0x10] sm:$0xf]
      %v1582 = vld [vmem:[#allocation3 + $0x14] sm:$0xf]
      %v1583 = vld [vmem:[#allocation3 + $0x18] sm:$0xf]
      %v1584 = vld [vmem:[#allocation3 + $0x1c] sm:$0xf]
      %v1585 = vld [vmem:[#allocation3 + $0x20] sm:$0xf]
      %v1586 = vld [vmem:[#allocation3 + $0x24] sm:$0xf]
      %v1587 = vld [vmem:[#allocation3 + $0x28] sm:$0xf]
      %v1588 = vld [vmem:[#allocation3 + $0x2c] sm:$0xf]
      %v1589 = vld [vmem:[#allocation3 + $0x30] sm:$0xf]
      %v1590 = vld [vmem:[#allocation3 + $0x34] sm:$0xf]
      %v1591 = vld [vmem:[#allocation3 + $0x38] sm:$0xf]
      %v1592 = vld [vmem:[#allocation3 + $0x3c] sm:$0xf]
      %v1593 = vld [vmem:[#allocation3 + $0x40] sm:$0xf]
      %v1594 = vld [vmem:[#allocation3 + $0x44] sm:$0xf]
      %v1595 = vld [vmem:[#allocation3 + $0x48] sm:$0xf]
      %v1596 = vld [vmem:[#allocation3 + $0x4c] sm:$0xf]
      %v1597 = vld [vmem:[#allocation3 + $0x50] sm:$0xf]
      %v1598 = vld [vmem:[#allocation3 + $0x54] sm:$0xf]
      %v1599 = vld [vmem:[#allocation3 + $0x58] sm:$0xf]
      %v1600 = vld [vmem:[#allocation3 + $0x5c] sm:$0xf]
      %v1601 = vld [vmem:[#allocation3 + $0x60] sm:$0xf]
      %v1602 = vld [vmem:[#allocation3 + $0x64] sm:$0xf]
      %v1603 = vld [vmem:[#allocation3 + $0x68] sm:$0xf]
      %v1604 = vld [vmem:[#allocation3 + $0x6c] sm:$0xf]
      %v1605 = vld [vmem:[#allocation3 + $0x70] sm:$0xf]
      %v1606 = vld [vmem:[#allocation3 + $0x74] sm:$0xf]
      %v1607 = vld [vmem:[#allocation3 + $0x78] sm:$0xf]
      %v1608 = vld [vmem:[#allocation3 + $0x7c] sm:$0xf]
      %v1609 = vld [vmem:[%s6] sm:$0xf]
      %v1610 = vld [vmem:[%s7] sm:$0x1]
      %v1612 = vperm.slane %v1610, 0
      %v1646 = vunpack.c.l.b16 %v1577
      %v1647 = vunpack.c.l.b16 %v1578
      %v1648 = vunpack.c.l.b16 %v1579
      %v1649 = vunpack.c.l.b16 %v1580
      %v1650 = vunpack.c.l.b16 %v1581
      %v1651 = vunpack.c.l.b16 %v1582
      %v1652 = vunpack.c.l.b16 %v1583
      %v1653 = vunpack.c.l.b16 %v1584
      %v1654 = vunpack.c.l.b16 %v1585
      %v1655 = vunpack.c.l.b16 %v1586
      %v1656 = vunpack.c.l.b16 %v1587
      %v1657 = vunpack.c.l.b16 %v1588
      %v1658 = vunpack.c.l.b16 %v1589
      %v1659 = vunpack.c.l.b16 %v1590
      %v1660 = vunpack.c.l.b16 %v1591
      %v1661 = vunpack.c.l.b16 %v1592
      %v1662 = vunpack.c.l.b16 %v1593
      %v1663 = vunpack.c.l.b16 %v1594
      %v1664 = vunpack.c.l.b16 %v1595
      %v1665 = vunpack.c.l.b16 %v1596
      %v1666 = vunpack.c.l.b16 %v1597
      %v1667 = vunpack.c.l.b16 %v1598
      %v1668 = vunpack.c.l.b16 %v1599
      %v1669 = vunpack.c.l.b16 %v1600
      %v1670 = vunpack.c.l.b16 %v1601
      %v1671 = vunpack.c.l.b16 %v1602
      %v1672 = vunpack.c.l.b16 %v1603
      %v1673 = vunpack.c.l.b16 %v1604
      %v1674 = vunpack.c.l.b16 %v1605
      %v1675 = vunpack.c.l.b16 %v1606
      %v1676 = vunpack.c.l.b16 %v1607
      %v1677 = vunpack.c.l.b16 %v1608
      %v1678 = vpack.c.b16 %v1647, %v1646
      %v1679 = vpack.c.b16 %v1649, %v1648
      %v1680 = vpack.c.b16 %v1651, %v1650
      %v1681 = vpack.c.b16 %v1653, %v1652
      %v1682 = vpack.c.b16 %v1655, %v1654
      %v1683 = vpack.c.b16 %v1657, %v1656
      %v1684 = vpack.c.b16 %v1659, %v1658
      %v1685 = vpack.c.b16 %v1661, %v1660
      %v1686 = vpack.c.b16 %v1663, %v1662
      %v1687 = vpack.c.b16 %v1665, %v1664
      %v1688 = vpack.c.b16 %v1667, %v1666
      %v1689 = vpack.c.b16 %v1669, %v1668
      %v1690 = vpack.c.b16 %v1671, %v1670
      %v1691 = vpack.c.b16 %v1673, %v1672
      %v1692 = vpack.c.b16 %v1675, %v1674
      %v1693 = vpack.c.b16 %v1677, %v1676
      %v1695 = vsel %vm459, %v1678, 0
      %v1698 = vsel %vm459, %v1679, 0
      %v1701 = vsel %vm459, %v1680, 0
      %v1704 = vsel %vm459, %v1681, 0
      %v1707 = vsel %vm459, %v1682, 0
      %v1710 = vsel %vm459, %v1683, 0
      %v1713 = vsel %vm459, %v1684, 0
      %v1716 = vsel %vm459, %v1685, 0
      %v1719 = vsel %vm459, %v1686, 0
      %v1722 = vsel %vm459, %v1687, 0
      %v1725 = vsel %vm459, %v1688, 0
      %v1728 = vsel %vm459, %v1689, 0
      %v1731 = vsel %vm459, %v1690, 0
      %v1734 = vsel %vm459, %v1691, 0
      %v1737 = vsel %vm459, %v1692, 0
      %v1740 = vsel %vm459, %v1693, 0
      %vm1742 = vcmask 1043456
      %v1744 = vsel %vm1742, %v1609, 0
      %1746 = vmatpush.bf16.msra.mxu0 0
      %1747 = vmatpush.bf16.msra.mxu0 0
      %1748 = vmatpush.bf16.msra.mxu0 0
      %1749 = vmatpush.bf16.msra.mxu0 0
      %1750 = vmatpush.bf16.msra.mxu0 0
      %1751 = vmatpush.bf16.msra.mxu0 0
      %1752 = vmatpush.bf16.msra.mxu0 0
      %1753 = vmatpush.bf16.msra.mxu0 %v1744
      %1754 = vmatmul.bf16.gmra.mxu0 %v1695
      %v1755 = vpop.f32.mrf.mxu0
      %v1756 = vadd.f32 %v1612, %v1755
      %v1757 = vpop.f32.mrf.mxu0
      %v1758 = vadd.f32 %v1612, %v1757
      %1759 = vmatmul.bf16.gmra.mxu0 %v1698
      %v1760 = vpop.f32.mrf.mxu0
      %v1761 = vadd.f32 %v1612, %v1760
      %v1762 = vpop.f32.mrf.mxu0
      %v1763 = vadd.f32 %v1612, %v1762
      %1764 = vmatmul.bf16.gmra.mxu0 %v1701
      %v1765 = vpop.f32.mrf.mxu0
      %v1766 = vadd.f32 %v1612, %v1765
      %v1767 = vpop.f32.mrf.mxu0
      %v1768 = vadd.f32 %v1612, %v1767
      %1769 = vmatmul.bf16.gmra.mxu0 %v1704
      %v1770 = vpop.f32.mrf.mxu0
      %v1771 = vadd.f32 %v1612, %v1770
      %v1772 = vpop.f32.mrf.mxu0
      %v1773 = vadd.f32 %v1612, %v1772
      %1774 = vmatmul.bf16.gmra.mxu0 %v1707
      %v1775 = vpop.f32.mrf.mxu0
      %v1776 = vadd.f32 %v1612, %v1775
      %v1777 = vpop.f32.mrf.mxu0
      %v1778 = vadd.f32 %v1612, %v1777
      %1779 = vmatmul.bf16.gmra.mxu0 %v1710
      %v1780 = vpop.f32.mrf.mxu0
      %v1781 = vadd.f32 %v1612, %v1780
      %v1782 = vpop.f32.mrf.mxu0
      %v1783 = vadd.f32 %v1612, %v1782
      %1784 = vmatmul.bf16.gmra.mxu0 %v1713
      %v1785 = vpop.f32.mrf.mxu0
      %v1786 = vadd.f32 %v1612, %v1785
      %v1787 = vpop.f32.mrf.mxu0
      %v1788 = vadd.f32 %v1612, %v1787
      %1789 = vmatmul.bf16.gmra.mxu0 %v1716
      %v1790 = vpop.f32.mrf.mxu0
      %v1791 = vadd.f32 %v1612, %v1790
      %v1792 = vpop.f32.mrf.mxu0
      %v1793 = vadd.f32 %v1612, %v1792
      %1794 = vmatmul.bf16.gmra.mxu0 %v1719
      %v1795 = vpop.f32.mrf.mxu0
      %v1796 = vadd.f32 %v1612, %v1795
      %v1797 = vpop.f32.mrf.mxu0
      %v1798 = vadd.f32 %v1612, %v1797
      %1799 = vmatmul.bf16.gmra.mxu0 %v1722
      %v1800 = vpop.f32.mrf.mxu0
      %v1801 = vadd.f32 %v1612, %v1800
      %v1802 = vpop.f32.mrf.mxu0
      %v1803 = vadd.f32 %v1612, %v1802
      %1804 = vmatmul.bf16.gmra.mxu0 %v1725
      %v1805 = vpop.f32.mrf.mxu0
      %v1806 = vadd.f32 %v1612, %v1805
      %v1807 = vpop.f32.mrf.mxu0
      %v1808 = vadd.f32 %v1612, %v1807
      %1809 = vmatmul.bf16.gmra.mxu0 %v1728
      %v1810 = vpop.f32.mrf.mxu0
      %v1811 = vadd.f32 %v1612, %v1810
      %v1812 = vpop.f32.mrf.mxu0
      %v1813 = vadd.f32 %v1612, %v1812
      %1814 = vmatmul.bf16.gmra.mxu0 %v1731
      %v1815 = vpop.f32.mrf.mxu0
      %v1816 = vadd.f32 %v1612, %v1815
      %v1817 = vpop.f32.mrf.mxu0
      %v1818 = vadd.f32 %v1612, %v1817
      %1819 = vmatmul.bf16.gmra.mxu0 %v1734
      %v1820 = vpop.f32.mrf.mxu0
      %v1821 = vadd.f32 %v1612, %v1820
      %v1822 = vpop.f32.mrf.mxu0
      %v1823 = vadd.f32 %v1612, %v1822
      %1824 = vmatmul.bf16.gmra.mxu0 %v1737
      %v1825 = vpop.f32.mrf.mxu0
      %v1826 = vadd.f32 %v1612, %v1825
      %v1827 = vpop.f32.mrf.mxu0
      %v1828 = vadd.f32 %v1612, %v1827
      %1829 = vmatmul.bf16.gmra.mxu0 %v1740
      %v1830 = vpop.f32.mrf.mxu0
      %v1831 = vadd.f32 %v1612, %v1830
      %v1832 = vpop.f32.mrf.mxu0
      %v1833 = vadd.f32 %v1612, %v1832
      %1834 = vdwg.mxu0
      %v1835 = vmul.f32 %v1756, 0.5
      %v1836 = vmul.f32 %v1758, 0.5
      %v1837 = vmul.f32 %v1761, 0.5
      %v1838 = vmul.f32 %v1763, 0.5
      %v1839 = vmul.f32 %v1766, 0.5
      %v1840 = vmul.f32 %v1768, 0.5
      %v1841 = vmul.f32 %v1771, 0.5
      %v1842 = vmul.f32 %v1773, 0.5
      %v1843 = vmul.f32 %v1776, 0.5
      %v1844 = vmul.f32 %v1778, 0.5
      %v1845 = vmul.f32 %v1781, 0.5
      %v1846 = vmul.f32 %v1783, 0.5
      %v1847 = vmul.f32 %v1786, 0.5
      %v1848 = vmul.f32 %v1788, 0.5
      %v1849 = vmul.f32 %v1791, 0.5
      %v1850 = vmul.f32 %v1793, 0.5
      %v1851 = vmul.f32 %v1796, 0.5
      %v1852 = vmul.f32 %v1798, 0.5
      %v1853 = vmul.f32 %v1801, 0.5
      %v1854 = vmul.f32 %v1803, 0.5
      %v1855 = vmul.f32 %v1806, 0.5
      %v1856 = vmul.f32 %v1808, 0.5
      %v1857 = vmul.f32 %v1811, 0.5
      %v1858 = vmul.f32 %v1813, 0.5
      %v1859 = vmul.f32 %v1816, 0.5
      %v1860 = vmul.f32 %v1818, 0.5
      %v1861 = vmul.f32 %v1821, 0.5
      %v1862 = vmul.f32 %v1823, 0.5
      %v1863 = vmul.f32 %v1826, 0.5
      %v1864 = vmul.f32 %v1828, 0.5
      %v1865 = vmul.f32 %v1831, 0.5
      %v1866 = vmul.f32 %v1833, 0.5
      %v1867 = vmul.f32 %v1756, 0.70710677
      %v1868 = vmul.f32 %v1758, 0.70710677
      %v1869 = vmul.f32 %v1761, 0.70710677
      %v1870 = vmul.f32 %v1763, 0.70710677
      %v1871 = vmul.f32 %v1766, 0.70710677
      %v1872 = vmul.f32 %v1768, 0.70710677
      %v1873 = vmul.f32 %v1771, 0.70710677
      %v1874 = vmul.f32 %v1773, 0.70710677
      %v1875 = vmul.f32 %v1776, 0.70710677
      %v1876 = vmul.f32 %v1778, 0.70710677
      %v1877 = vmul.f32 %v1781, 0.70710677
      %v1878 = vmul.f32 %v1783, 0.70710677
      %v1879 = vmul.f32 %v1786, 0.70710677
      %v1880 = vmul.f32 %v1788, 0.70710677
      %v1881 = vmul.f32 %v1791, 0.70710677
      %v1882 = vmul.f32 %v1793, 0.70710677
      %v1883 = vmul.f32 %v1796, 0.70710677
      %v1884 = vmul.f32 %v1798, 0.70710677
      %v1885 = vmul.f32 %v1801, 0.70710677
      %v1886 = vmul.f32 %v1803, 0.70710677
      %v1887 = vmul.f32 %v1806, 0.70710677
      %v1888 = vmul.f32 %v1808, 0.70710677
      %v1889 = vmul.f32 %v1811, 0.70710677
      %v1890 = vmul.f32 %v1813, 0.70710677
      %v1891 = vmul.f32 %v1816, 0.70710677
      %v1892 = vmul.f32 %v1818, 0.70710677
      %v1893 = vmul.f32 %v1821, 0.70710677
      %v1894 = vmul.f32 %v1823, 0.70710677
      %v1895 = vmul.f32 %v1826, 0.70710677
      %v1896 = vmul.f32 %v1828, 0.70710677
      %v1897 = vmul.f32 %v1831, 0.70710677
      %v1898 = vmul.f32 %v1833, 0.70710677
      %v1899 = vmul.f32 %v1867, %v1867
      %v1900 = vmin.f32 16.0, %v1899
      %v1901 = vmul.f32 %v1900, 2.1237322e-06
      %v1902 = vadd.f32 %v1901, 0.00028619796
      %v1903 = vmul.f32 %v1900, %v1902
      %v1904 = vadd.f32 %v1903, 0.0036580483
      %v1905 = vmul.f32 %v1900, %v1904
      %v1906 = vadd.f32 %v1905, 0.05243302
      %v1907 = vmul.f32 %v1900, %v1906
      %v1908 = vadd.f32 %v1907, 0.18741608
      %v1909 = vmul.f32 %v1900, %v1908
      %v1910 = vadd.f32 %v1909, 1.1283791
      %v1911 = vmul.f32 %v1867, %v1910
      %v1912 = vmul.f32 %v1900, 3.8918573e-05
      %v1913 = vadd.f32 %v1912, 0.001143296
      %v1914 = vmul.f32 %v1900, %v1913
      %v1915 = vadd.f32 %v1914, 0.014752088
      %v1916 = vmul.f32 %v1900, %v1915
      %v1917 = vadd.f32 %v1916, 0.112945676
      %v1918 = vmul.f32 %v1900, %v1917
      %v1919 = vadd.f32 %v1918, 0.4994258
      %v1920 = vmul.f32 %v1900, %v1919
      %v1921 = vadd.f32 %v1920, 1.0
      %v1922 = vrcp.pop %v1921
      %v1923 = vmul.f32 %v1921, %v1922
      %v1924 = vsub.f32 1.0, %v1923
      %v1925 = vmul.f32 %v1922, %v1924
      %v1926 = vadd.f32 %v1922, %v1925
      %vm1927 = vweird.f32 %v1921
      %vm1928 = vweird.f32 %v1922
      %vm1929 = vmor %vm1927, %vm1928
      %v1930 = vsel %vm1929, %v1922, %v1926
      %v1931 = vand.u32 2147483647, %v1921
      %vm1932 = vcmp.eq.f32.partialorder %v1931, 8.507059e+37
      %v1933 = vand.u32 %v1921, 2147483648
      %v1934 = vor.u32 1.1754944e-38, %v1933
      %v1935 = vsel %vm1932, %v1934, %v1930
      %v1936 = vmul.f32 %v1911, %v1935
      %v1937 = vmin.f32 %v1936, 1.0
      %v1938 = vmax.f32 %v1937, -1.0
      %v1939 = vmul.f32 %v1868, %v1868
      %v1940 = vmin.f32 16.0, %v1939
      %v1941 = vmul.f32 %v1940, 2.1237322e-06
      %v1942 = vadd.f32 %v1941, 0.00028619796
      %v1943 = vmul.f32 %v1940, %v1942
      %v1944 = vadd.f32 %v1943, 0.0036580483
      %v1945 = vmul.f32 %v1940, %v1944
      %v1946 = vadd.f32 %v1945, 0.05243302
      %v1947 = vmul.f32 %v1940, %v1946
      %v1948 = vadd.f32 %v1947, 0.18741608
      %v1949 = vmul.f32 %v1940, %v1948
      %v1950 = vadd.f32 %v1949, 1.1283791
      %v1951 = vmul.f32 %v1868, %v1950
      %v1952 = vmul.f32 %v1940, 3.8918573e-05
      %v1953 = vadd.f32 %v1952, 0.001143296
      %v1954 = vmul.f32 %v1940, %v1953
      %v1955 = vadd.f32 %v1954, 0.014752088
      %v1956 = vmul.f32 %v1940, %v1955
      %v1957 = vadd.f32 %v1956, 0.112945676
      %v1958 = vmul.f32 %v1940, %v1957
      %v1959 = vadd.f32 %v1958, 0.4994258
      %v1960 = vmul.f32 %v1940, %v1959
      %v1961 = vadd.f32 %v1960, 1.0
      %v1962 = vrcp.pop %v1961
      %v1963 = vmul.f32 %v1961, %v1962
      %v1964 = vsub.f32 1.0, %v1963
      %v1965 = vmul.f32 %v1962, %v1964
      %v1966 = vadd.f32 %v1962, %v1965
      %vm1967 = vweird.f32 %v1961
      %vm1968 = vweird.f32 %v1962
      %vm1969 = vmor %vm1967, %vm1968
      %v1970 = vsel %vm1969, %v1962, %v1966
      %v1971 = vand.u32 2147483647, %v1961
      %vm1972 = vcmp.eq.f32.partialorder %v1971, 8.507059e+37
      %v1973 = vand.u32 %v1961, 2147483648
      %v1974 = vor.u32 1.1754944e-38, %v1973
      %v1975 = vsel %vm1972, %v1974, %v1970
      %v1976 = vmul.f32 %v1951, %v1975
      %v1977 = vmin.f32 %v1976, 1.0
      %v1978 = vmax.f32 %v1977, -1.0
      %v1979 = vmul.f32 %v1869, %v1869
      %v1980 = vmin.f32 16.0, %v1979
      %v1981 = vmul.f32 %v1980, 2.1237322e-06
      %v1982 = vadd.f32 %v1981, 0.00028619796
      %v1983 = vmul.f32 %v1980, %v1982
      %v1984 = vadd.f32 %v1983, 0.0036580483
      %v1985 = vmul.f32 %v1980, %v1984
      %v1986 = vadd.f32 %v1985, 0.05243302
      %v1987 = vmul.f32 %v1980, %v1986
      %v1988 = vadd.f32 %v1987, 0.18741608
      %v1989 = vmul.f32 %v1980, %v1988
      %v1990 = vadd.f32 %v1989, 1.1283791
      %v1991 = vmul.f32 %v1869, %v1990
      %v1992 = vmul.f32 %v1980, 3.8918573e-05
      %v1993 = vadd.f32 %v1992, 0.001143296
      %v1994 = vmul.f32 %v1980, %v1993
      %v1995 = vadd.f32 %v1994, 0.014752088
      %v1996 = vmul.f32 %v1980, %v1995
      %v1997 = vadd.f32 %v1996, 0.112945676
      %v1998 = vmul.f32 %v1980, %v1997
      %v1999 = vadd.f32 %v1998, 0.4994258
      %v2000 = vmul.f32 %v1980, %v1999
      %v2001 = vadd.f32 %v2000, 1.0
      %v2002 = vrcp.pop %v2001
      %v2003 = vmul.f32 %v2001, %v2002
      %v2004 = vsub.f32 1.0, %v2003
      %v2005 = vmul.f32 %v2002, %v2004
      %v2006 = vadd.f32 %v2002, %v2005
      %vm2007 = vweird.f32 %v2001
      %vm2008 = vweird.f32 %v2002
      %vm2009 = vmor %vm2007, %vm2008
      %v2010 = vsel %vm2009, %v2002, %v2006
      %v2011 = vand.u32 2147483647, %v2001
      %vm2012 = vcmp.eq.f32.partialorder %v2011, 8.507059e+37
      %v2013 = vand.u32 %v2001, 2147483648
      %v2014 = vor.u32 1.1754944e-38, %v2013
      %v2015 = vsel %vm2012, %v2014, %v2010
      %v2016 = vmul.f32 %v1991, %v2015
      %v2017 = vmin.f32 %v2016, 1.0
      %v2018 = vmax.f32 %v2017, -1.0
      %v2019 = vmul.f32 %v1870, %v1870
      %v2020 = vmin.f32 16.0, %v2019
      %v2021 = vmul.f32 %v2020, 2.1237322e-06
      %v2022 = vadd.f32 %v2021, 0.00028619796
      %v2023 = vmul.f32 %v2020, %v2022
      %v2024 = vadd.f32 %v2023, 0.0036580483
      %v2025 = vmul.f32 %v2020, %v2024
      %v2026 = vadd.f32 %v2025, 0.05243302
      %v2027 = vmul.f32 %v2020, %v2026
      %v2028 = vadd.f32 %v2027, 0.18741608
      %v2029 = vmul.f32 %v2020, %v2028
      %v2030 = vadd.f32 %v2029, 1.1283791
      %v2031 = vmul.f32 %v1870, %v2030
      %v2032 = vmul.f32 %v2020, 3.8918573e-05
      %v2033 = vadd.f32 %v2032, 0.001143296
      %v2034 = vmul.f32 %v2020, %v2033
      %v2035 = vadd.f32 %v2034, 0.014752088
      %v2036 = vmul.f32 %v2020, %v2035
      %v2037 = vadd.f32 %v2036, 0.112945676
      %v2038 = vmul.f32 %v2020, %v2037
      %v2039 = vadd.f32 %v2038, 0.4994258
      %v2040 = vmul.f32 %v2020, %v2039
      %v2041 = vadd.f32 %v2040, 1.0
      %v2042 = vrcp.pop %v2041
      %v2043 = vmul.f32 %v2041, %v2042
      %v2044 = vsub.f32 1.0, %v2043
      %v2045 = vmul.f32 %v2042, %v2044
      %v2046 = vadd.f32 %v2042, %v2045
      %vm2047 = vweird.f32 %v2041
      %vm2048 = vweird.f32 %v2042
      %vm2049 = vmor %vm2047, %vm2048
      %v2050 = vsel %vm2049, %v2042, %v2046
      %v2051 = vand.u32 2147483647, %v2041
      %vm2052 = vcmp.eq.f32.partialorder %v2051, 8.507059e+37
      %v2053 = vand.u32 %v2041, 2147483648
      %v2054 = vor.u32 1.1754944e-38, %v2053
      %v2055 = vsel %vm2052, %v2054, %v2050
      %v2056 = vmul.f32 %v2031, %v2055
      %v2057 = vmin.f32 %v2056, 1.0
      %v2058 = vmax.f32 %v2057, -1.0
      %v2059 = vmul.f32 %v1871, %v1871
      %v2060 = vmin.f32 16.0, %v2059
      %v2061 = vmul.f32 %v2060, 2.1237322e-06
      %v2062 = vadd.f32 %v2061, 0.00028619796
      %v2063 = vmul.f32 %v2060, %v2062
      %v2064 = vadd.f32 %v2063, 0.0036580483
      %v2065 = vmul.f32 %v2060, %v2064
      %v2066 = vadd.f32 %v2065, 0.05243302
      %v2067 = vmul.f32 %v2060, %v2066
      %v2068 = vadd.f32 %v2067, 0.18741608
      %v2069 = vmul.f32 %v2060, %v2068
      %v2070 = vadd.f32 %v2069, 1.1283791
      %v2071 = vmul.f32 %v1871, %v2070
      %v2072 = vmul.f32 %v2060, 3.8918573e-05
      %v2073 = vadd.f32 %v2072, 0.001143296
      %v2074 = vmul.f32 %v2060, %v2073
      %v2075 = vadd.f32 %v2074, 0.014752088
      %v2076 = vmul.f32 %v2060, %v2075
      %v2077 = vadd.f32 %v2076, 0.112945676
      %v2078 = vmul.f32 %v2060, %v2077
      %v2079 = vadd.f32 %v2078, 0.4994258
      %v2080 = vmul.f32 %v2060, %v2079
      %v2081 = vadd.f32 %v2080, 1.0
      %v2082 = vrcp.pop %v2081
      %v2083 = vmul.f32 %v2081, %v2082
      %v2084 = vsub.f32 1.0, %v2083
      %v2085 = vmul.f32 %v2082, %v2084
      %v2086 = vadd.f32 %v2082, %v2085
      %vm2087 = vweird.f32 %v2081
      %vm2088 = vweird.f32 %v2082
      %vm2089 = vmor %vm2087, %vm2088
      %v2090 = vsel %vm2089, %v2082, %v2086
      %v2091 = vand.u32 2147483647, %v2081
      %vm2092 = vcmp.eq.f32.partialorder %v2091, 8.507059e+37
      %v2093 = vand.u32 %v2081, 2147483648
      %v2094 = vor.u32 1.1754944e-38, %v2093
      %v2095 = vsel %vm2092, %v2094, %v2090
      %v2096 = vmul.f32 %v2071, %v2095
      %v2097 = vmin.f32 %v2096, 1.0
      %v2098 = vmax.f32 %v2097, -1.0
      %v2099 = vmul.f32 %v1872, %v1872
      %v2100 = vmin.f32 16.0, %v2099
      %v2101 = vmul.f32 %v2100, 2.1237322e-06
      %v2102 = vadd.f32 %v2101, 0.00028619796
      %v2103 = vmul.f32 %v2100, %v2102
      %v2104 = vadd.f32 %v2103, 0.0036580483
      %v2105 = vmul.f32 %v2100, %v2104
      %v2106 = vadd.f32 %v2105, 0.05243302
      %v2107 = vmul.f32 %v2100, %v2106
      %v2108 = vadd.f32 %v2107, 0.18741608
      %v2109 = vmul.f32 %v2100, %v2108
      %v2110 = vadd.f32 %v2109, 1.1283791
      %v2111 = vmul.f32 %v1872, %v2110
      %v2112 = vmul.f32 %v2100, 3.8918573e-05
      %v2113 = vadd.f32 %v2112, 0.001143296
      %v2114 = vmul.f32 %v2100, %v2113
      %v2115 = vadd.f32 %v2114, 0.014752088
      %v2116 = vmul.f32 %v2100, %v2115
      %v2117 = vadd.f32 %v2116, 0.112945676
      %v2118 = vmul.f32 %v2100, %v2117
      %v2119 = vadd.f32 %v2118, 0.4994258
      %v2120 = vmul.f32 %v2100, %v2119
      %v2121 = vadd.f32 %v2120, 1.0
      %v2122 = vrcp.pop %v2121
      %v2123 = vmul.f32 %v2121, %v2122
      %v2124 = vsub.f32 1.0, %v2123
      %v2125 = vmul.f32 %v2122, %v2124
      %v2126 = vadd.f32 %v2122, %v2125
      %vm2127 = vweird.f32 %v2121
      %vm2128 = vweird.f32 %v2122
      %vm2129 = vmor %vm2127, %vm2128
      %v2130 = vsel %vm2129, %v2122, %v2126
      %v2131 = vand.u32 2147483647, %v2121
      %vm2132 = vcmp.eq.f32.partialorder %v2131, 8.507059e+37
      %v2133 = vand.u32 %v2121, 2147483648
      %v2134 = vor.u32 1.1754944e-38, %v2133
      %v2135 = vsel %vm2132, %v2134, %v2130
      %v2136 = vmul.f32 %v2111, %v2135
      %v2137 = vmin.f32 %v2136, 1.0
      %v2138 = vmax.f32 %v2137, -1.0
      %v2139 = vmul.f32 %v1873, %v1873
      %v2140 = vmin.f32 16.0, %v2139
      %v2141 = vmul.f32 %v2140, 2.1237322e-06
      %v2142 = vadd.f32 %v2141, 0.00028619796
      %v2143 = vmul.f32 %v2140, %v2142
      %v2144 = vadd.f32 %v2143, 0.0036580483
      %v2145 = vmul.f32 %v2140, %v2144
      %v2146 = vadd.f32 %v2145, 0.05243302
      %v2147 = vmul.f32 %v2140, %v2146
      %v2148 = vadd.f32 %v2147, 0.18741608
      %v2149 = vmul.f32 %v2140, %v2148
      %v2150 = vadd.f32 %v2149, 1.1283791
      %v2151 = vmul.f32 %v1873, %v2150
      %v2152 = vmul.f32 %v2140, 3.8918573e-05
      %v2153 = vadd.f32 %v2152, 0.001143296
      %v2154 = vmul.f32 %v2140, %v2153
      %v2155 = vadd.f32 %v2154, 0.014752088
      %v2156 = vmul.f32 %v2140, %v2155
      %v2157 = vadd.f32 %v2156, 0.112945676
      %v2158 = vmul.f32 %v2140, %v2157
      %v2159 = vadd.f32 %v2158, 0.4994258
      %v2160 = vmul.f32 %v2140, %v2159
      %v2161 = vadd.f32 %v2160, 1.0
      %v2162 = vrcp.pop %v2161
      %v2163 = vmul.f32 %v2161, %v2162
      %v2164 = vsub.f32 1.0, %v2163
      %v2165 = vmul.f32 %v2162, %v2164
      %v2166 = vadd.f32 %v2162, %v2165
      %vm2167 = vweird.f32 %v2161
      %vm2168 = vweird.f32 %v2162
      %vm2169 = vmor %vm2167, %vm2168
      %v2170 = vsel %vm2169, %v2162, %v2166
      %v2171 = vand.u32 2147483647, %v2161
      %vm2172 = vcmp.eq.f32.partialorder %v2171, 8.507059e+37
      %v2173 = vand.u32 %v2161, 2147483648
      %v2174 = vor.u32 1.1754944e-38, %v2173
      %v2175 = vsel %vm2172, %v2174, %v2170
      %v2176 = vmul.f32 %v2151, %v2175
      %v2177 = vmin.f32 %v2176, 1.0
      %v2178 = vmax.f32 %v2177, -1.0
      %v2179 = vmul.f32 %v1874, %v1874
      %v2180 = vmin.f32 16.0, %v2179
      %v2181 = vmul.f32 %v2180, 2.1237322e-06
      %v2182 = vadd.f32 %v2181, 0.00028619796
      %v2183 = vmul.f32 %v2180, %v2182
      %v2184 = vadd.f32 %v2183, 0.0036580483
      %v2185 = vmul.f32 %v2180, %v2184
      %v2186 = vadd.f32 %v2185, 0.05243302
      %v2187 = vmul.f32 %v2180, %v2186
      %v2188 = vadd.f32 %v2187, 0.18741608
      %v2189 = vmul.f32 %v2180, %v2188
      %v2190 = vadd.f32 %v2189, 1.1283791
      %v2191 = vmul.f32 %v1874, %v2190
      %v2192 = vmul.f32 %v2180, 3.8918573e-05
      %v2193 = vadd.f32 %v2192, 0.001143296
      %v2194 = vmul.f32 %v2180, %v2193
      %v2195 = vadd.f32 %v2194, 0.014752088
      %v2196 = vmul.f32 %v2180, %v2195
      %v2197 = vadd.f32 %v2196, 0.112945676
      %v2198 = vmul.f32 %v2180, %v2197
      %v2199 = vadd.f32 %v2198, 0.4994258
      %v2200 = vmul.f32 %v2180, %v2199
      %v2201 = vadd.f32 %v2200, 1.0
      %v2202 = vrcp.pop %v2201
      %v2203 = vmul.f32 %v2201, %v2202
      %v2204 = vsub.f32 1.0, %v2203
      %v2205 = vmul.f32 %v2202, %v2204
      %v2206 = vadd.f32 %v2202, %v2205
      %vm2207 = vweird.f32 %v2201
      %vm2208 = vweird.f32 %v2202
      %vm2209 = vmor %vm2207, %vm2208
      %v2210 = vsel %vm2209, %v2202, %v2206
      %v2211 = vand.u32 2147483647, %v2201
      %vm2212 = vcmp.eq.f32.partialorder %v2211, 8.507059e+37
      %v2213 = vand.u32 %v2201, 2147483648
      %v2214 = vor.u32 1.1754944e-38, %v2213
      %v2215 = vsel %vm2212, %v2214, %v2210
      %v2216 = vmul.f32 %v2191, %v2215
      %v2217 = vmin.f32 %v2216, 1.0
      %v2218 = vmax.f32 %v2217, -1.0
      %v2219 = vmul.f32 %v1875, %v1875
      %v2220 = vmin.f32 16.0, %v2219
      %v2221 = vmul.f32 %v2220, 2.1237322e-06
      %v2222 = vadd.f32 %v2221, 0.00028619796
      %v2223 = vmul.f32 %v2220, %v2222
      %v2224 = vadd.f32 %v2223, 0.0036580483
      %v2225 = vmul.f32 %v2220, %v2224
      %v2226 = vadd.f32 %v2225, 0.05243302
      %v2227 = vmul.f32 %v2220, %v2226
      %v2228 = vadd.f32 %v2227, 0.18741608
      %v2229 = vmul.f32 %v2220, %v2228
      %v2230 = vadd.f32 %v2229, 1.1283791
      %v2231 = vmul.f32 %v1875, %v2230
      %v2232 = vmul.f32 %v2220, 3.8918573e-05
      %v2233 = vadd.f32 %v2232, 0.001143296
      %v2234 = vmul.f32 %v2220, %v2233
      %v2235 = vadd.f32 %v2234, 0.014752088
      %v2236 = vmul.f32 %v2220, %v2235
      %v2237 = vadd.f32 %v2236, 0.112945676
      %v2238 = vmul.f32 %v2220, %v2237
      %v2239 = vadd.f32 %v2238, 0.4994258
      %v2240 = vmul.f32 %v2220, %v2239
      %v2241 = vadd.f32 %v2240, 1.0
      %v2242 = vrcp.pop %v2241
      %v2243 = vmul.f32 %v2241, %v2242
      %v2244 = vsub.f32 1.0, %v2243
      %v2245 = vmul.f32 %v2242, %v2244
      %v2246 = vadd.f32 %v2242, %v2245
      %vm2247 = vweird.f32 %v2241
      %vm2248 = vweird.f32 %v2242
      %vm2249 = vmor %vm2247, %vm2248
      %v2250 = vsel %vm2249, %v2242, %v2246
      %v2251 = vand.u32 2147483647, %v2241
      %vm2252 = vcmp.eq.f32.partialorder %v2251, 8.507059e+37
      %v2253 = vand.u32 %v2241, 2147483648
      %v2254 = vor.u32 1.1754944e-38, %v2253
      %v2255 = vsel %vm2252, %v2254, %v2250
      %v2256 = vmul.f32 %v2231, %v2255
      %v2257 = vmin.f32 %v2256, 1.0
      %v2258 = vmax.f32 %v2257, -1.0
      %v2259 = vmul.f32 %v1876, %v1876
      %v2260 = vmin.f32 16.0, %v2259
      %v2261 = vmul.f32 %v2260, 2.1237322e-06
      %v2262 = vadd.f32 %v2261, 0.00028619796
      %v2263 = vmul.f32 %v2260, %v2262
      %v2264 = vadd.f32 %v2263, 0.0036580483
      %v2265 = vmul.f32 %v2260, %v2264
      %v2266 = vadd.f32 %v2265, 0.05243302
      %v2267 = vmul.f32 %v2260, %v2266
      %v2268 = vadd.f32 %v2267, 0.18741608
      %v2269 = vmul.f32 %v2260, %v2268
      %v2270 = vadd.f32 %v2269, 1.1283791
      %v2271 = vmul.f32 %v1876, %v2270
      %v2272 = vmul.f32 %v2260, 3.8918573e-05
      %v2273 = vadd.f32 %v2272, 0.001143296
      %v2274 = vmul.f32 %v2260, %v2273
      %v2275 = vadd.f32 %v2274, 0.014752088
      %v2276 = vmul.f32 %v2260, %v2275
      %v2277 = vadd.f32 %v2276, 0.112945676
      %v2278 = vmul.f32 %v2260, %v2277
      %v2279 = vadd.f32 %v2278, 0.4994258
      %v2280 = vmul.f32 %v2260, %v2279
      %v2281 = vadd.f32 %v2280, 1.0
      %v2282 = vrcp.pop %v2281
      %v2283 = vmul.f32 %v2281, %v2282
      %v2284 = vsub.f32 1.0, %v2283
      %v2285 = vmul.f32 %v2282, %v2284
      %v2286 = vadd.f32 %v2282, %v2285
      %vm2287 = vweird.f32 %v2281
      %vm2288 = vweird.f32 %v2282
      %vm2289 = vmor %vm2287, %vm2288
      %v2290 = vsel %vm2289, %v2282, %v2286
      %v2291 = vand.u32 2147483647, %v2281
      %vm2292 = vcmp.eq.f32.partialorder %v2291, 8.507059e+37
      %v2293 = vand.u32 %v2281, 2147483648
      %v2294 = vor.u32 1.1754944e-38, %v2293
      %v2295 = vsel %vm2292, %v2294, %v2290
      %v2296 = vmul.f32 %v2271, %v2295
      %v2297 = vmin.f32 %v2296, 1.0
      %v2298 = vmax.f32 %v2297, -1.0
      %v2299 = vmul.f32 %v1877, %v1877
      %v2300 = vmin.f32 16.0, %v2299
      %v2301 = vmul.f32 %v2300, 2.1237322e-06
      %v2302 = vadd.f32 %v2301, 0.00028619796
      %v2303 = vmul.f32 %v2300, %v2302
      %v2304 = vadd.f32 %v2303, 0.0036580483
      %v2305 = vmul.f32 %v2300, %v2304
      %v2306 = vadd.f32 %v2305, 0.05243302
      %v2307 = vmul.f32 %v2300, %v2306
      %v2308 = vadd.f32 %v2307, 0.18741608
      %v2309 = vmul.f32 %v2300, %v2308
      %v2310 = vadd.f32 %v2309, 1.1283791
      %v2311 = vmul.f32 %v1877, %v2310
      %v2312 = vmul.f32 %v2300, 3.8918573e-05
      %v2313 = vadd.f32 %v2312, 0.001143296
      %v2314 = vmul.f32 %v2300, %v2313
      %v2315 = vadd.f32 %v2314, 0.014752088
      %v2316 = vmul.f32 %v2300, %v2315
      %v2317 = vadd.f32 %v2316, 0.112945676
      %v2318 = vmul.f32 %v2300, %v2317
      %v2319 = vadd.f32 %v2318, 0.4994258
      %v2320 = vmul.f32 %v2300, %v2319
      %v2321 = vadd.f32 %v2320, 1.0
      %v2322 = vrcp.pop %v2321
      %v2323 = vmul.f32 %v2321, %v2322
      %v2324 = vsub.f32 1.0, %v2323
      %v2325 = vmul.f32 %v2322, %v2324
      %v2326 = vadd.f32 %v2322, %v2325
      %vm2327 = vweird.f32 %v2321
      %vm2328 = vweird.f32 %v2322
      %vm2329 = vmor %vm2327, %vm2328
      %v2330 = vsel %vm2329, %v2322, %v2326
      %v2331 = vand.u32 2147483647, %v2321
      %vm2332 = vcmp.eq.f32.partialorder %v2331, 8.507059e+37
      %v2333 = vand.u32 %v2321, 2147483648
      %v2334 = vor.u32 1.1754944e-38, %v2333
      %v2335 = vsel %vm2332, %v2334, %v2330
      %v2336 = vmul.f32 %v2311, %v2335
      %v2337 = vmin.f32 %v2336, 1.0
      %v2338 = vmax.f32 %v2337, -1.0
      %v2339 = vmul.f32 %v1878, %v1878
      %v2340 = vmin.f32 16.0, %v2339
      %v2341 = vmul.f32 %v2340, 2.1237322e-06
      %v2342 = vadd.f32 %v2341, 0.00028619796
      %v2343 = vmul.f32 %v2340, %v2342
      %v2344 = vadd.f32 %v2343, 0.0036580483
      %v2345 = vmul.f32 %v2340, %v2344
      %v2346 = vadd.f32 %v2345, 0.05243302
      %v2347 = vmul.f32 %v2340, %v2346
      %v2348 = vadd.f32 %v2347, 0.18741608
      %v2349 = vmul.f32 %v2340, %v2348
      %v2350 = vadd.f32 %v2349, 1.1283791
      %v2351 = vmul.f32 %v1878, %v2350
      %v2352 = vmul.f32 %v2340, 3.8918573e-05
      %v2353 = vadd.f32 %v2352, 0.001143296
      %v2354 = vmul.f32 %v2340, %v2353
      %v2355 = vadd.f32 %v2354, 0.014752088
      %v2356 = vmul.f32 %v2340, %v2355
      %v2357 = vadd.f32 %v2356, 0.112945676
      %v2358 = vmul.f32 %v2340, %v2357
      %v2359 = vadd.f32 %v2358, 0.4994258
      %v2360 = vmul.f32 %v2340, %v2359
      %v2361 = vadd.f32 %v2360, 1.0
      %v2362 = vrcp.pop %v2361
      %v2363 = vmul.f32 %v2361, %v2362
      %v2364 = vsub.f32 1.0, %v2363
      %v2365 = vmul.f32 %v2362, %v2364
      %v2366 = vadd.f32 %v2362, %v2365
      %vm2367 = vweird.f32 %v2361
      %vm2368 = vweird.f32 %v2362
      %vm2369 = vmor %vm2367, %vm2368
      %v2370 = vsel %vm2369, %v2362, %v2366
      %v2371 = vand.u32 2147483647, %v2361
      %vm2372 = vcmp.eq.f32.partialorder %v2371, 8.507059e+37
      %v2373 = vand.u32 %v2361, 2147483648
      %v2374 = vor.u32 1.1754944e-38, %v2373
      %v2375 = vsel %vm2372, %v2374, %v2370
      %v2376 = vmul.f32 %v2351, %v2375
      %v2377 = vmin.f32 %v2376, 1.0
      %v2378 = vmax.f32 %v2377, -1.0
      %v2379 = vmul.f32 %v1879, %v1879
      %v2380 = vmin.f32 16.0, %v2379
      %v2381 = vmul.f32 %v2380, 2.1237322e-06
      %v2382 = vadd.f32 %v2381, 0.00028619796
      %v2383 = vmul.f32 %v2380, %v2382
      %v2384 = vadd.f32 %v2383, 0.0036580483
      %v2385 = vmul.f32 %v2380, %v2384
      %v2386 = vadd.f32 %v2385, 0.05243302
      %v2387 = vmul.f32 %v2380, %v2386
      %v2388 = vadd.f32 %v2387, 0.18741608
      %v2389 = vmul.f32 %v2380, %v2388
      %v2390 = vadd.f32 %v2389, 1.1283791
      %v2391 = vmul.f32 %v1879, %v2390
      %v2392 = vmul.f32 %v2380, 3.8918573e-05
      %v2393 = vadd.f32 %v2392, 0.001143296
      %v2394 = vmul.f32 %v2380, %v2393
      %v2395 = vadd.f32 %v2394, 0.014752088
      %v2396 = vmul.f32 %v2380, %v2395
      %v2397 = vadd.f32 %v2396, 0.112945676
      %v2398 = vmul.f32 %v2380, %v2397
      %v2399 = vadd.f32 %v2398, 0.4994258
      %v2400 = vmul.f32 %v2380, %v2399
      %v2401 = vadd.f32 %v2400, 1.0
      %v2402 = vrcp.pop %v2401
      %v2403 = vmul.f32 %v2401, %v2402
      %v2404 = vsub.f32 1.0, %v2403
      %v2405 = vmul.f32 %v2402, %v2404
      %v2406 = vadd.f32 %v2402, %v2405
      %vm2407 = vweird.f32 %v2401
      %vm2408 = vweird.f32 %v2402
      %vm2409 = vmor %vm2407, %vm2408
      %v2410 = vsel %vm2409, %v2402, %v2406
      %v2411 = vand.u32 2147483647, %v2401
      %vm2412 = vcmp.eq.f32.partialorder %v2411, 8.507059e+37
      %v2413 = vand.u32 %v2401, 2147483648
      %v2414 = vor.u32 1.1754944e-38, %v2413
      %v2415 = vsel %vm2412, %v2414, %v2410
      %v2416 = vmul.f32 %v2391, %v2415
      %v2417 = vmin.f32 %v2416, 1.0
      %v2418 = vmax.f32 %v2417, -1.0
      %v2419 = vmul.f32 %v1880, %v1880
      %v2420 = vmin.f32 16.0, %v2419
      %v2421 = vmul.f32 %v2420, 2.1237322e-06
      %v2422 = vadd.f32 %v2421, 0.00028619796
      %v2423 = vmul.f32 %v2420, %v2422
      %v2424 = vadd.f32 %v2423, 0.0036580483
      %v2425 = vmul.f32 %v2420, %v2424
      %v2426 = vadd.f32 %v2425, 0.05243302
      %v2427 = vmul.f32 %v2420, %v2426
      %v2428 = vadd.f32 %v2427, 0.18741608
      %v2429 = vmul.f32 %v2420, %v2428
      %v2430 = vadd.f32 %v2429, 1.1283791
      %v2431 = vmul.f32 %v1880, %v2430
      %v2432 = vmul.f32 %v2420, 3.8918573e-05
      %v2433 = vadd.f32 %v2432, 0.001143296
      %v2434 = vmul.f32 %v2420, %v2433
      %v2435 = vadd.f32 %v2434, 0.014752088
      %v2436 = vmul.f32 %v2420, %v2435
      %v2437 = vadd.f32 %v2436, 0.112945676
      %v2438 = vmul.f32 %v2420, %v2437
      %v2439 = vadd.f32 %v2438, 0.4994258
      %v2440 = vmul.f32 %v2420, %v2439
      %v2441 = vadd.f32 %v2440, 1.0
      %v2442 = vrcp.pop %v2441
      %v2443 = vmul.f32 %v2441, %v2442
      %v2444 = vsub.f32 1.0, %v2443
      %v2445 = vmul.f32 %v2442, %v2444
      %v2446 = vadd.f32 %v2442, %v2445
      %vm2447 = vweird.f32 %v2441
      %vm2448 = vweird.f32 %v2442
      %vm2449 = vmor %vm2447, %vm2448
      %v2450 = vsel %vm2449, %v2442, %v2446
      %v2451 = vand.u32 2147483647, %v2441
      %vm2452 = vcmp.eq.f32.partialorder %v2451, 8.507059e+37
      %v2453 = vand.u32 %v2441, 2147483648
      %v2454 = vor.u32 1.1754944e-38, %v2453
      %v2455 = vsel %vm2452, %v2454, %v2450
      %v2456 = vmul.f32 %v2431, %v2455
      %v2457 = vmin.f32 %v2456, 1.0
      %v2458 = vmax.f32 %v2457, -1.0
      %v2459 = vmul.f32 %v1881, %v1881
      %v2460 = vmin.f32 16.0, %v2459
      %v2461 = vmul.f32 %v2460, 2.1237322e-06
      %v2462 = vadd.f32 %v2461, 0.00028619796
      %v2463 = vmul.f32 %v2460, %v2462
      %v2464 = vadd.f32 %v2463, 0.0036580483
      %v2465 = vmul.f32 %v2460, %v2464
      %v2466 = vadd.f32 %v2465, 0.05243302
      %v2467 = vmul.f32 %v2460, %v2466
      %v2468 = vadd.f32 %v2467, 0.18741608
      %v2469 = vmul.f32 %v2460, %v2468
      %v2470 = vadd.f32 %v2469, 1.1283791
      %v2471 = vmul.f32 %v1881, %v2470
      %v2472 = vmul.f32 %v2460, 3.8918573e-05
      %v2473 = vadd.f32 %v2472, 0.001143296
      %v2474 = vmul.f32 %v2460, %v2473
      %v2475 = vadd.f32 %v2474, 0.014752088
      %v2476 = vmul.f32 %v2460, %v2475
      %v2477 = vadd.f32 %v2476, 0.112945676
      %v2478 = vmul.f32 %v2460, %v2477
      %v2479 = vadd.f32 %v2478, 0.4994258
      %v2480 = vmul.f32 %v2460, %v2479
      %v2481 = vadd.f32 %v2480, 1.0
      %v2482 = vrcp.pop %v2481
      %v2483 = vmul.f32 %v2481, %v2482
      %v2484 = vsub.f32 1.0, %v2483
      %v2485 = vmul.f32 %v2482, %v2484
      %v2486 = vadd.f32 %v2482, %v2485
      %vm2487 = vweird.f32 %v2481
      %vm2488 = vweird.f32 %v2482
      %vm2489 = vmor %vm2487, %vm2488
      %v2490 = vsel %vm2489, %v2482, %v2486
      %v2491 = vand.u32 2147483647, %v2481
      %vm2492 = vcmp.eq.f32.partialorder %v2491, 8.507059e+37
      %v2493 = vand.u32 %v2481, 2147483648
      %v2494 = vor.u32 1.1754944e-38, %v2493
      %v2495 = vsel %vm2492, %v2494, %v2490
      %v2496 = vmul.f32 %v2471, %v2495
      %v2497 = vmin.f32 %v2496, 1.0
      %v2498 = vmax.f32 %v2497, -1.0
      %v2499 = vmul.f32 %v1882, %v1882
      %v2500 = vmin.f32 16.0, %v2499
      %v2501 = vmul.f32 %v2500, 2.1237322e-06
      %v2502 = vadd.f32 %v2501, 0.00028619796
      %v2503 = vmul.f32 %v2500, %v2502
      %v2504 = vadd.f32 %v2503, 0.0036580483
      %v2505 = vmul.f32 %v2500, %v2504
      %v2506 = vadd.f32 %v2505, 0.05243302
      %v2507 = vmul.f32 %v2500, %v2506
      %v2508 = vadd.f32 %v2507, 0.18741608
      %v2509 = vmul.f32 %v2500, %v2508
      %v2510 = vadd.f32 %v2509, 1.1283791
      %v2511 = vmul.f32 %v1882, %v2510
      %v2512 = vmul.f32 %v2500, 3.8918573e-05
      %v2513 = vadd.f32 %v2512, 0.001143296
      %v2514 = vmul.f32 %v2500, %v2513
      %v2515 = vadd.f32 %v2514, 0.014752088
      %v2516 = vmul.f32 %v2500, %v2515
      %v2517 = vadd.f32 %v2516, 0.112945676
      %v2518 = vmul.f32 %v2500, %v2517
      %v2519 = vadd.f32 %v2518, 0.4994258
      %v2520 = vmul.f32 %v2500, %v2519
      %v2521 = vadd.f32 %v2520, 1.0
      %v2522 = vrcp.pop %v2521
      %v2523 = vmul.f32 %v2521, %v2522
      %v2524 = vsub.f32 1.0, %v2523
      %v2525 = vmul.f32 %v2522, %v2524
      %v2526 = vadd.f32 %v2522, %v2525
      %vm2527 = vweird.f32 %v2521
      %vm2528 = vweird.f32 %v2522
      %vm2529 = vmor %vm2527, %vm2528
      %v2530 = vsel %vm2529, %v2522, %v2526
      %v2531 = vand.u32 2147483647, %v2521
      %vm2532 = vcmp.eq.f32.partialorder %v2531, 8.507059e+37
      %v2533 = vand.u32 %v2521, 2147483648
      %v2534 = vor.u32 1.1754944e-38, %v2533
      %v2535 = vsel %vm2532, %v2534, %v2530
      %v2536 = vmul.f32 %v2511, %v2535
      %v2537 = vmin.f32 %v2536, 1.0
      %v2538 = vmax.f32 %v2537, -1.0
      %v2539 = vmul.f32 %v1883, %v1883
      %v2540 = vmin.f32 16.0, %v2539
      %v2541 = vmul.f32 %v2540, 2.1237322e-06
      %v2542 = vadd.f32 %v2541, 0.00028619796
      %v2543 = vmul.f32 %v2540, %v2542
      %v2544 = vadd.f32 %v2543, 0.0036580483
      %v2545 = vmul.f32 %v2540, %v2544
      %v2546 = vadd.f32 %v2545, 0.05243302
      %v2547 = vmul.f32 %v2540, %v2546
      %v2548 = vadd.f32 %v2547, 0.18741608
      %v2549 = vmul.f32 %v2540, %v2548
      %v2550 = vadd.f32 %v2549, 1.1283791
      %v2551 = vmul.f32 %v1883, %v2550
      %v2552 = vmul.f32 %v2540, 3.8918573e-05
      %v2553 = vadd.f32 %v2552, 0.001143296
      %v2554 = vmul.f32 %v2540, %v2553
      %v2555 = vadd.f32 %v2554, 0.014752088
      %v2556 = vmul.f32 %v2540, %v2555
      %v2557 = vadd.f32 %v2556, 0.112945676
      %v2558 = vmul.f32 %v2540, %v2557
      %v2559 = vadd.f32 %v2558, 0.4994258
      %v2560 = vmul.f32 %v2540, %v2559
      %v2561 = vadd.f32 %v2560, 1.0
      %v2562 = vrcp.pop %v2561
      %v2563 = vmul.f32 %v2561, %v2562
      %v2564 = vsub.f32 1.0, %v2563
      %v2565 = vmul.f32 %v2562, %v2564
      %v2566 = vadd.f32 %v2562, %v2565
      %vm2567 = vweird.f32 %v2561
      %vm2568 = vweird.f32 %v2562
      %vm2569 = vmor %vm2567, %vm2568
      %v2570 = vsel %vm2569, %v2562, %v2566
      %v2571 = vand.u32 2147483647, %v2561
      %vm2572 = vcmp.eq.f32.partialorder %v2571, 8.507059e+37
      %v2573 = vand.u32 %v2561, 2147483648
      %v2574 = vor.u32 1.1754944e-38, %v2573
      %v2575 = vsel %vm2572, %v2574, %v2570
      %v2576 = vmul.f32 %v2551, %v2575
      %v2577 = vmin.f32 %v2576, 1.0
      %v2578 = vmax.f32 %v2577, -1.0
      %v2579 = vmul.f32 %v1884, %v1884
      %v2580 = vmin.f32 16.0, %v2579
      %v2581 = vmul.f32 %v2580, 2.1237322e-06
      %v2582 = vadd.f32 %v2581, 0.00028619796
      %v2583 = vmul.f32 %v2580, %v2582
      %v2584 = vadd.f32 %v2583, 0.0036580483
      %v2585 = vmul.f32 %v2580, %v2584
      %v2586 = vadd.f32 %v2585, 0.05243302
      %v2587 = vmul.f32 %v2580, %v2586
      %v2588 = vadd.f32 %v2587, 0.18741608
      %v2589 = vmul.f32 %v2580, %v2588
      %v2590 = vadd.f32 %v2589, 1.1283791
      %v2591 = vmul.f32 %v1884, %v2590
      %v2592 = vmul.f32 %v2580, 3.8918573e-05
      %v2593 = vadd.f32 %v2592, 0.001143296
      %v2594 = vmul.f32 %v2580, %v2593
      %v2595 = vadd.f32 %v2594, 0.014752088
      %v2596 = vmul.f32 %v2580, %v2595
      %v2597 = vadd.f32 %v2596, 0.112945676
      %v2598 = vmul.f32 %v2580, %v2597
      %v2599 = vadd.f32 %v2598, 0.4994258
      %v2600 = vmul.f32 %v2580, %v2599
      %v2601 = vadd.f32 %v2600, 1.0
      %v2602 = vrcp.pop %v2601
      %v2603 = vmul.f32 %v2601, %v2602
      %v2604 = vsub.f32 1.0, %v2603
      %v2605 = vmul.f32 %v2602, %v2604
      %v2606 = vadd.f32 %v2602, %v2605
      %vm2607 = vweird.f32 %v2601
      %vm2608 = vweird.f32 %v2602
      %vm2609 = vmor %vm2607, %vm2608
      %v2610 = vsel %vm2609, %v2602, %v2606
      %v2611 = vand.u32 2147483647, %v2601
      %vm2612 = vcmp.eq.f32.partialorder %v2611, 8.507059e+37
      %v2613 = vand.u32 %v2601, 2147483648
      %v2614 = vor.u32 1.1754944e-38, %v2613
      %v2615 = vsel %vm2612, %v2614, %v2610
      %v2616 = vmul.f32 %v2591, %v2615
      %v2617 = vmin.f32 %v2616, 1.0
      %v2618 = vmax.f32 %v2617, -1.0
      %v2619 = vmul.f32 %v1885, %v1885
      %v2620 = vmin.f32 16.0, %v2619
      %v2621 = vmul.f32 %v2620, 2.1237322e-06
      %v2622 = vadd.f32 %v2621, 0.00028619796
      %v2623 = vmul.f32 %v2620, %v2622
      %v2624 = vadd.f32 %v2623, 0.0036580483
      %v2625 = vmul.f32 %v2620, %v2624
      %v2626 = vadd.f32 %v2625, 0.05243302
      %v2627 = vmul.f32 %v2620, %v2626
      %v2628 = vadd.f32 %v2627, 0.18741608
      %v2629 = vmul.f32 %v2620, %v2628
      %v2630 = vadd.f32 %v2629, 1.1283791
      %v2631 = vmul.f32 %v1885, %v2630
      %v2632 = vmul.f32 %v2620, 3.8918573e-05
      %v2633 = vadd.f32 %v2632, 0.001143296
      %v2634 = vmul.f32 %v2620, %v2633
      %v2635 = vadd.f32 %v2634, 0.014752088
      %v2636 = vmul.f32 %v2620, %v2635
      %v2637 = vadd.f32 %v2636, 0.112945676
      %v2638 = vmul.f32 %v2620, %v2637
      %v2639 = vadd.f32 %v2638, 0.4994258
      %v2640 = vmul.f32 %v2620, %v2639
      %v2641 = vadd.f32 %v2640, 1.0
      %v2642 = vrcp.pop %v2641
      %v2643 = vmul.f32 %v2641, %v2642
      %v2644 = vsub.f32 1.0, %v2643
      %v2645 = vmul.f32 %v2642, %v2644
      %v2646 = vadd.f32 %v2642, %v2645
      %vm2647 = vweird.f32 %v2641
      %vm2648 = vweird.f32 %v2642
      %vm2649 = vmor %vm2647, %vm2648
      %v2650 = vsel %vm2649, %v2642, %v2646
      %v2651 = vand.u32 2147483647, %v2641
      %vm2652 = vcmp.eq.f32.partialorder %v2651, 8.507059e+37
      %v2653 = vand.u32 %v2641, 2147483648
      %v2654 = vor.u32 1.1754944e-38, %v2653
      %v2655 = vsel %vm2652, %v2654, %v2650
      %v2656 = vmul.f32 %v2631, %v2655
      %v2657 = vmin.f32 %v2656, 1.0
      %v2658 = vmax.f32 %v2657, -1.0
      %v2659 = vmul.f32 %v1886, %v1886
      %v2660 = vmin.f32 16.0, %v2659
      %v2661 = vmul.f32 %v2660, 2.1237322e-06
      %v2662 = vadd.f32 %v2661, 0.00028619796
      %v2663 = vmul.f32 %v2660, %v2662
      %v2664 = vadd.f32 %v2663, 0.0036580483
      %v2665 = vmul.f32 %v2660, %v2664
      %v2666 = vadd.f32 %v2665, 0.05243302
      %v2667 = vmul.f32 %v2660, %v2666
      %v2668 = vadd.f32 %v2667, 0.18741608
      %v2669 = vmul.f32 %v2660, %v2668
      %v2670 = vadd.f32 %v2669, 1.1283791
      %v2671 = vmul.f32 %v1886, %v2670
      %v2672 = vmul.f32 %v2660, 3.8918573e-05
      %v2673 = vadd.f32 %v2672, 0.001143296
      %v2674 = vmul.f32 %v2660, %v2673
      %v2675 = vadd.f32 %v2674, 0.014752088
      %v2676 = vmul.f32 %v2660, %v2675
      %v2677 = vadd.f32 %v2676, 0.112945676
      %v2678 = vmul.f32 %v2660, %v2677
      %v2679 = vadd.f32 %v2678, 0.4994258
      %v2680 = vmul.f32 %v2660, %v2679
      %v2681 = vadd.f32 %v2680, 1.0
      %v2682 = vrcp.pop %v2681
      %v2683 = vmul.f32 %v2681, %v2682
      %v2684 = vsub.f32 1.0, %v2683
      %v2685 = vmul.f32 %v2682, %v2684
      %v2686 = vadd.f32 %v2682, %v2685
      %vm2687 = vweird.f32 %v2681
      %vm2688 = vweird.f32 %v2682
      %vm2689 = vmor %vm2687, %vm2688
      %v2690 = vsel %vm2689, %v2682, %v2686
      %v2691 = vand.u32 2147483647, %v2681
      %vm2692 = vcmp.eq.f32.partialorder %v2691, 8.507059e+37
      %v2693 = vand.u32 %v2681, 2147483648
      %v2694 = vor.u32 1.1754944e-38, %v2693
      %v2695 = vsel %vm2692, %v2694, %v2690
      %v2696 = vmul.f32 %v2671, %v2695
      %v2697 = vmin.f32 %v2696, 1.0
      %v2698 = vmax.f32 %v2697, -1.0
      %v2699 = vmul.f32 %v1887, %v1887
      %v2700 = vmin.f32 16.0, %v2699
      %v2701 = vmul.f32 %v2700, 2.1237322e-06
      %v2702 = vadd.f32 %v2701, 0.00028619796
      %v2703 = vmul.f32 %v2700, %v2702
      %v2704 = vadd.f32 %v2703, 0.0036580483
      %v2705 = vmul.f32 %v2700, %v2704
      %v2706 = vadd.f32 %v2705, 0.05243302
      %v2707 = vmul.f32 %v2700, %v2706
      %v2708 = vadd.f32 %v2707, 0.18741608
      %v2709 = vmul.f32 %v2700, %v2708
      %v2710 = vadd.f32 %v2709, 1.1283791
      %v2711 = vmul.f32 %v1887, %v2710
      %v2712 = vmul.f32 %v2700, 3.8918573e-05
      %v2713 = vadd.f32 %v2712, 0.001143296
      %v2714 = vmul.f32 %v2700, %v2713
      %v2715 = vadd.f32 %v2714, 0.014752088
      %v2716 = vmul.f32 %v2700, %v2715
      %v2717 = vadd.f32 %v2716, 0.112945676
      %v2718 = vmul.f32 %v2700, %v2717
      %v2719 = vadd.f32 %v2718, 0.4994258
      %v2720 = vmul.f32 %v2700, %v2719
      %v2721 = vadd.f32 %v2720, 1.0
      %v2722 = vrcp.pop %v2721
      %v2723 = vmul.f32 %v2721, %v2722
      %v2724 = vsub.f32 1.0, %v2723
      %v2725 = vmul.f32 %v2722, %v2724
      %v2726 = vadd.f32 %v2722, %v2725
      %vm2727 = vweird.f32 %v2721
      %vm2728 = vweird.f32 %v2722
      %vm2729 = vmor %vm2727, %vm2728
      %v2730 = vsel %vm2729, %v2722, %v2726
      %v2731 = vand.u32 2147483647, %v2721
      %vm2732 = vcmp.eq.f32.partialorder %v2731, 8.507059e+37
      %v2733 = vand.u32 %v2721, 2147483648
      %v2734 = vor.u32 1.1754944e-38, %v2733
      %v2735 = vsel %vm2732, %v2734, %v2730
      %v2736 = vmul.f32 %v2711, %v2735
      %v2737 = vmin.f32 %v2736, 1.0
      %v2738 = vmax.f32 %v2737, -1.0
      %v2739 = vmul.f32 %v1888, %v1888
      %v2740 = vmin.f32 16.0, %v2739
      %v2741 = vmul.f32 %v2740, 2.1237322e-06
      %v2742 = vadd.f32 %v2741, 0.00028619796
      %v2743 = vmul.f32 %v2740, %v2742
      %v2744 = vadd.f32 %v2743, 0.0036580483
      %v2745 = vmul.f32 %v2740, %v2744
      %v2746 = vadd.f32 %v2745, 0.05243302
      %v2747 = vmul.f32 %v2740, %v2746
      %v2748 = vadd.f32 %v2747, 0.18741608
      %v2749 = vmul.f32 %v2740, %v2748
      %v2750 = vadd.f32 %v2749, 1.1283791
      %v2751 = vmul.f32 %v1888, %v2750
      %v2752 = vmul.f32 %v2740, 3.8918573e-05
      %v2753 = vadd.f32 %v2752, 0.001143296
      %v2754 = vmul.f32 %v2740, %v2753
      %v2755 = vadd.f32 %v2754, 0.014752088
      %v2756 = vmul.f32 %v2740, %v2755
      %v2757 = vadd.f32 %v2756, 0.112945676
      %v2758 = vmul.f32 %v2740, %v2757
      %v2759 = vadd.f32 %v2758, 0.4994258
      %v2760 = vmul.f32 %v2740, %v2759
      %v2761 = vadd.f32 %v2760, 1.0
      %v2762 = vrcp.pop %v2761
      %v2763 = vmul.f32 %v2761, %v2762
      %v2764 = vsub.f32 1.0, %v2763
      %v2765 = vmul.f32 %v2762, %v2764
      %v2766 = vadd.f32 %v2762, %v2765
      %vm2767 = vweird.f32 %v2761
      %vm2768 = vweird.f32 %v2762
      %vm2769 = vmor %vm2767, %vm2768
      %v2770 = vsel %vm2769, %v2762, %v2766
      %v2771 = vand.u32 2147483647, %v2761
      %vm2772 = vcmp.eq.f32.partialorder %v2771, 8.507059e+37
      %v2773 = vand.u32 %v2761, 2147483648
      %v2774 = vor.u32 1.1754944e-38, %v2773
      %v2775 = vsel %vm2772, %v2774, %v2770
      %v2776 = vmul.f32 %v2751, %v2775
      %v2777 = vmin.f32 %v2776, 1.0
      %v2778 = vmax.f32 %v2777, -1.0
      %v2779 = vmul.f32 %v1889, %v1889
      %v2780 = vmin.f32 16.0, %v2779
      %v2781 = vmul.f32 %v2780, 2.1237322e-06
      %v2782 = vadd.f32 %v2781, 0.00028619796
      %v2783 = vmul.f32 %v2780, %v2782
      %v2784 = vadd.f32 %v2783, 0.0036580483
      %v2785 = vmul.f32 %v2780, %v2784
      %v2786 = vadd.f32 %v2785, 0.05243302
      %v2787 = vmul.f32 %v2780, %v2786
      %v2788 = vadd.f32 %v2787, 0.18741608
      %v2789 = vmul.f32 %v2780, %v2788
      %v2790 = vadd.f32 %v2789, 1.1283791
      %v2791 = vmul.f32 %v1889, %v2790
      %v2792 = vmul.f32 %v2780, 3.8918573e-05
      %v2793 = vadd.f32 %v2792, 0.001143296
      %v2794 = vmul.f32 %v2780, %v2793
      %v2795 = vadd.f32 %v2794, 0.014752088
      %v2796 = vmul.f32 %v2780, %v2795
      %v2797 = vadd.f32 %v2796, 0.112945676
      %v2798 = vmul.f32 %v2780, %v2797
      %v2799 = vadd.f32 %v2798, 0.4994258
      %v2800 = vmul.f32 %v2780, %v2799
      %v2801 = vadd.f32 %v2800, 1.0
      %v2802 = vrcp.pop %v2801
      %v2803 = vmul.f32 %v2801, %v2802
      %v2804 = vsub.f32 1.0, %v2803
      %v2805 = vmul.f32 %v2802, %v2804
      %v2806 = vadd.f32 %v2802, %v2805
      %vm2807 = vweird.f32 %v2801
      %vm2808 = vweird.f32 %v2802
      %vm2809 = vmor %vm2807, %vm2808
      %v2810 = vsel %vm2809, %v2802, %v2806
      %v2811 = vand.u32 2147483647, %v2801
      %vm2812 = vcmp.eq.f32.partialorder %v2811, 8.507059e+37
      %v2813 = vand.u32 %v2801, 2147483648
      %v2814 = vor.u32 1.1754944e-38, %v2813
      %v2815 = vsel %vm2812, %v2814, %v2810
      %v2816 = vmul.f32 %v2791, %v2815
      %v2817 = vmin.f32 %v2816, 1.0
      %v2818 = vmax.f32 %v2817, -1.0
      %v2819 = vmul.f32 %v1890, %v1890
      %v2820 = vmin.f32 16.0, %v2819
      %v2821 = vmul.f32 %v2820, 2.1237322e-06
      %v2822 = vadd.f32 %v2821, 0.00028619796
      %v2823 = vmul.f32 %v2820, %v2822
      %v2824 = vadd.f32 %v2823, 0.0036580483
      %v2825 = vmul.f32 %v2820, %v2824
      %v2826 = vadd.f32 %v2825, 0.05243302
      %v2827 = vmul.f32 %v2820, %v2826
      %v2828 = vadd.f32 %v2827, 0.18741608
      %v2829 = vmul.f32 %v2820, %v2828
      %v2830 = vadd.f32 %v2829, 1.1283791
      %v2831 = vmul.f32 %v1890, %v2830
      %v2832 = vmul.f32 %v2820, 3.8918573e-05
      %v2833 = vadd.f32 %v2832, 0.001143296
      %v2834 = vmul.f32 %v2820, %v2833
      %v2835 = vadd.f32 %v2834, 0.014752088
      %v2836 = vmul.f32 %v2820, %v2835
      %v2837 = vadd.f32 %v2836, 0.112945676
      %v2838 = vmul.f32 %v2820, %v2837
      %v2839 = vadd.f32 %v2838, 0.4994258
      %v2840 = vmul.f32 %v2820, %v2839
      %v2841 = vadd.f32 %v2840, 1.0
      %v2842 = vrcp.pop %v2841
      %v2843 = vmul.f32 %v2841, %v2842
      %v2844 = vsub.f32 1.0, %v2843
      %v2845 = vmul.f32 %v2842, %v2844
      %v2846 = vadd.f32 %v2842, %v2845
      %vm2847 = vweird.f32 %v2841
      %vm2848 = vweird.f32 %v2842
      %vm2849 = vmor %vm2847, %vm2848
      %v2850 = vsel %vm2849, %v2842, %v2846
      %v2851 = vand.u32 2147483647, %v2841
      %vm2852 = vcmp.eq.f32.partialorder %v2851, 8.507059e+37
      %v2853 = vand.u32 %v2841, 2147483648
      %v2854 = vor.u32 1.1754944e-38, %v2853
      %v2855 = vsel %vm2852, %v2854, %v2850
      %v2856 = vmul.f32 %v2831, %v2855
      %v2857 = vmin.f32 %v2856, 1.0
      %v2858 = vmax.f32 %v2857, -1.0
      %v2859 = vmul.f32 %v1891, %v1891
      %v2860 = vmin.f32 16.0, %v2859
      %v2861 = vmul.f32 %v2860, 2.1237322e-06
      %v2862 = vadd.f32 %v2861, 0.00028619796
      %v2863 = vmul.f32 %v2860, %v2862
      %v2864 = vadd.f32 %v2863, 0.0036580483
      %v2865 = vmul.f32 %v2860, %v2864
      %v2866 = vadd.f32 %v2865, 0.05243302
      %v2867 = vmul.f32 %v2860, %v2866
      %v2868 = vadd.f32 %v2867, 0.18741608
      %v2869 = vmul.f32 %v2860, %v2868
      %v2870 = vadd.f32 %v2869, 1.1283791
      %v2871 = vmul.f32 %v1891, %v2870
      %v2872 = vmul.f32 %v2860, 3.8918573e-05
      %v2873 = vadd.f32 %v2872, 0.001143296
      %v2874 = vmul.f32 %v2860, %v2873
      %v2875 = vadd.f32 %v2874, 0.014752088
      %v2876 = vmul.f32 %v2860, %v2875
      %v2877 = vadd.f32 %v2876, 0.112945676
      %v2878 = vmul.f32 %v2860, %v2877
      %v2879 = vadd.f32 %v2878, 0.4994258
      %v2880 = vmul.f32 %v2860, %v2879
      %v2881 = vadd.f32 %v2880, 1.0
      %v2882 = vrcp.pop %v2881
      %v2883 = vmul.f32 %v2881, %v2882
      %v2884 = vsub.f32 1.0, %v2883
      %v2885 = vmul.f32 %v2882, %v2884
      %v2886 = vadd.f32 %v2882, %v2885
      %vm2887 = vweird.f32 %v2881
      %vm2888 = vweird.f32 %v2882
      %vm2889 = vmor %vm2887, %vm2888
      %v2890 = vsel %vm2889, %v2882, %v2886
      %v2891 = vand.u32 2147483647, %v2881
      %vm2892 = vcmp.eq.f32.partialorder %v2891, 8.507059e+37
      %v2893 = vand.u32 %v2881, 2147483648
      %v2894 = vor.u32 1.1754944e-38, %v2893
      %v2895 = vsel %vm2892, %v2894, %v2890
      %v2896 = vmul.f32 %v2871, %v2895
      %v2897 = vmin.f32 %v2896, 1.0
      %v2898 = vmax.f32 %v2897, -1.0
      %v2899 = vmul.f32 %v1892, %v1892
      %v2900 = vmin.f32 16.0, %v2899
      %v2901 = vmul.f32 %v2900, 2.1237322e-06
      %v2902 = vadd.f32 %v2901, 0.00028619796
      %v2903 = vmul.f32 %v2900, %v2902
      %v2904 = vadd.f32 %v2903, 0.0036580483
      %v2905 = vmul.f32 %v2900, %v2904
      %v2906 = vadd.f32 %v2905, 0.05243302
      %v2907 = vmul.f32 %v2900, %v2906
      %v2908 = vadd.f32 %v2907, 0.18741608
      %v2909 = vmul.f32 %v2900, %v2908
      %v2910 = vadd.f32 %v2909, 1.1283791
      %v2911 = vmul.f32 %v1892, %v2910
      %v2912 = vmul.f32 %v2900, 3.8918573e-05
      %v2913 = vadd.f32 %v2912, 0.001143296
      %v2914 = vmul.f32 %v2900, %v2913
      %v2915 = vadd.f32 %v2914, 0.014752088
      %v2916 = vmul.f32 %v2900, %v2915
      %v2917 = vadd.f32 %v2916, 0.112945676
      %v2918 = vmul.f32 %v2900, %v2917
      %v2919 = vadd.f32 %v2918, 0.4994258
      %v2920 = vmul.f32 %v2900, %v2919
      %v2921 = vadd.f32 %v2920, 1.0
      %v2922 = vrcp.pop %v2921
      %v2923 = vmul.f32 %v2921, %v2922
      %v2924 = vsub.f32 1.0, %v2923
      %v2925 = vmul.f32 %v2922, %v2924
      %v2926 = vadd.f32 %v2922, %v2925
      %vm2927 = vweird.f32 %v2921
      %vm2928 = vweird.f32 %v2922
      %vm2929 = vmor %vm2927, %vm2928
      %v2930 = vsel %vm2929, %v2922, %v2926
      %v2931 = vand.u32 2147483647, %v2921
      %vm2932 = vcmp.eq.f32.partialorder %v2931, 8.507059e+37
      %v2933 = vand.u32 %v2921, 2147483648
      %v2934 = vor.u32 1.1754944e-38, %v2933
      %v2935 = vsel %vm2932, %v2934, %v2930
      %v2936 = vmul.f32 %v2911, %v2935
      %v2937 = vmin.f32 %v2936, 1.0
      %v2938 = vmax.f32 %v2937, -1.0
      %v2939 = vmul.f32 %v1893, %v1893
      %v2940 = vmin.f32 16.0, %v2939
      %v2941 = vmul.f32 %v2940, 2.1237322e-06
      %v2942 = vadd.f32 %v2941, 0.00028619796
      %v2943 = vmul.f32 %v2940, %v2942
      %v2944 = vadd.f32 %v2943, 0.0036580483
      %v2945 = vmul.f32 %v2940, %v2944
      %v2946 = vadd.f32 %v2945, 0.05243302
      %v2947 = vmul.f32 %v2940, %v2946
      %v2948 = vadd.f32 %v2947, 0.18741608
      %v2949 = vmul.f32 %v2940, %v2948
      %v2950 = vadd.f32 %v2949, 1.1283791
      %v2951 = vmul.f32 %v1893, %v2950
      %v2952 = vmul.f32 %v2940, 3.8918573e-05
      %v2953 = vadd.f32 %v2952, 0.001143296
      %v2954 = vmul.f32 %v2940, %v2953
      %v2955 = vadd.f32 %v2954, 0.014752088
      %v2956 = vmul.f32 %v2940, %v2955
      %v2957 = vadd.f32 %v2956, 0.112945676
      %v2958 = vmul.f32 %v2940, %v2957
      %v2959 = vadd.f32 %v2958, 0.4994258
      %v2960 = vmul.f32 %v2940, %v2959
      %v2961 = vadd.f32 %v2960, 1.0
      %v2962 = vrcp.pop %v2961
      %v2963 = vmul.f32 %v2961, %v2962
      %v2964 = vsub.f32 1.0, %v2963
      %v2965 = vmul.f32 %v2962, %v2964
      %v2966 = vadd.f32 %v2962, %v2965
      %vm2967 = vweird.f32 %v2961
      %vm2968 = vweird.f32 %v2962
      %vm2969 = vmor %vm2967, %vm2968
      %v2970 = vsel %vm2969, %v2962, %v2966
      %v2971 = vand.u32 2147483647, %v2961
      %vm2972 = vcmp.eq.f32.partialorder %v2971, 8.507059e+37
      %v2973 = vand.u32 %v2961, 2147483648
      %v2974 = vor.u32 1.1754944e-38, %v2973
      %v2975 = vsel %vm2972, %v2974, %v2970
      %v2976 = vmul.f32 %v2951, %v2975
      %v2977 = vmin.f32 %v2976, 1.0
      %v2978 = vmax.f32 %v2977, -1.0
      %v2979 = vmul.f32 %v1894, %v1894
      %v2980 = vmin.f32 16.0, %v2979
      %v2981 = vmul.f32 %v2980, 2.1237322e-06
      %v2982 = vadd.f32 %v2981, 0.00028619796
      %v2983 = vmul.f32 %v2980, %v2982
      %v2984 = vadd.f32 %v2983, 0.0036580483
      %v2985 = vmul.f32 %v2980, %v2984
      %v2986 = vadd.f32 %v2985, 0.05243302
      %v2987 = vmul.f32 %v2980, %v2986
      %v2988 = vadd.f32 %v2987, 0.18741608
      %v2989 = vmul.f32 %v2980, %v2988
      %v2990 = vadd.f32 %v2989, 1.1283791
      %v2991 = vmul.f32 %v1894, %v2990
      %v2992 = vmul.f32 %v2980, 3.8918573e-05
      %v2993 = vadd.f32 %v2992, 0.001143296
      %v2994 = vmul.f32 %v2980, %v2993
      %v2995 = vadd.f32 %v2994, 0.014752088
      %v2996 = vmul.f32 %v2980, %v2995
      %v2997 = vadd.f32 %v2996, 0.112945676
      %v2998 = vmul.f32 %v2980, %v2997
      %v2999 = vadd.f32 %v2998, 0.4994258
      %v3000 = vmul.f32 %v2980, %v2999
      %v3001 = vadd.f32 %v3000, 1.0
      %v3002 = vrcp.pop %v3001
      %v3003 = vmul.f32 %v3001, %v3002
      %v3004 = vsub.f32 1.0, %v3003
      %v3005 = vmul.f32 %v3002, %v3004
      %v3006 = vadd.f32 %v3002, %v3005
      %vm3007 = vweird.f32 %v3001
      %vm3008 = vweird.f32 %v3002
      %vm3009 = vmor %vm3007, %vm3008
      %v3010 = vsel %vm3009, %v3002, %v3006
      %v3011 = vand.u32 2147483647, %v3001
      %vm3012 = vcmp.eq.f32.partialorder %v3011, 8.507059e+37
      %v3013 = vand.u32 %v3001, 2147483648
      %v3014 = vor.u32 1.1754944e-38, %v3013
      %v3015 = vsel %vm3012, %v3014, %v3010
      %v3016 = vmul.f32 %v2991, %v3015
      %v3017 = vmin.f32 %v3016, 1.0
      %v3018 = vmax.f32 %v3017, -1.0
      %v3019 = vmul.f32 %v1895, %v1895
      %v3020 = vmin.f32 16.0, %v3019
      %v3021 = vmul.f32 %v3020, 2.1237322e-06
      %v3022 = vadd.f32 %v3021, 0.00028619796
      %v3023 = vmul.f32 %v3020, %v3022
      %v3024 = vadd.f32 %v3023, 0.0036580483
      %v3025 = vmul.f32 %v3020, %v3024
      %v3026 = vadd.f32 %v3025, 0.05243302
      %v3027 = vmul.f32 %v3020, %v3026
      %v3028 = vadd.f32 %v3027, 0.18741608
      %v3029 = vmul.f32 %v3020, %v3028
      %v3030 = vadd.f32 %v3029, 1.1283791
      %v3031 = vmul.f32 %v1895, %v3030
      %v3032 = vmul.f32 %v3020, 3.8918573e-05
      %v3033 = vadd.f32 %v3032, 0.001143296
      %v3034 = vmul.f32 %v3020, %v3033
      %v3035 = vadd.f32 %v3034, 0.014752088
      %v3036 = vmul.f32 %v3020, %v3035
      %v3037 = vadd.f32 %v3036, 0.112945676
      %v3038 = vmul.f32 %v3020, %v3037
      %v3039 = vadd.f32 %v3038, 0.4994258
      %v3040 = vmul.f32 %v3020, %v3039
      %v3041 = vadd.f32 %v3040, 1.0
      %v3042 = vrcp.pop %v3041
      %v3043 = vmul.f32 %v3041, %v3042
      %v3044 = vsub.f32 1.0, %v3043
      %v3045 = vmul.f32 %v3042, %v3044
      %v3046 = vadd.f32 %v3042, %v3045
      %vm3047 = vweird.f32 %v3041
      %vm3048 = vweird.f32 %v3042
      %vm3049 = vmor %vm3047, %vm3048
      %v3050 = vsel %vm3049, %v3042, %v3046
      %v3051 = vand.u32 2147483647, %v3041
      %vm3052 = vcmp.eq.f32.partialorder %v3051, 8.507059e+37
      %v3053 = vand.u32 %v3041, 2147483648
      %v3054 = vor.u32 1.1754944e-38, %v3053
      %v3055 = vsel %vm3052, %v3054, %v3050
      %v3056 = vmul.f32 %v3031, %v3055
      %v3057 = vmin.f32 %v3056, 1.0
      %v3058 = vmax.f32 %v3057, -1.0
      %v3059 = vmul.f32 %v1896, %v1896
      %v3060 = vmin.f32 16.0, %v3059
      %v3061 = vmul.f32 %v3060, 2.1237322e-06
      %v3062 = vadd.f32 %v3061, 0.00028619796
      %v3063 = vmul.f32 %v3060, %v3062
      %v3064 = vadd.f32 %v3063, 0.0036580483
      %v3065 = vmul.f32 %v3060, %v3064
      %v3066 = vadd.f32 %v3065, 0.05243302
      %v3067 = vmul.f32 %v3060, %v3066
      %v3068 = vadd.f32 %v3067, 0.18741608
      %v3069 = vmul.f32 %v3060, %v3068
      %v3070 = vadd.f32 %v3069, 1.1283791
      %v3071 = vmul.f32 %v1896, %v3070
      %v3072 = vmul.f32 %v3060, 3.8918573e-05
      %v3073 = vadd.f32 %v3072, 0.001143296
      %v3074 = vmul.f32 %v3060, %v3073
      %v3075 = vadd.f32 %v3074, 0.014752088
      %v3076 = vmul.f32 %v3060, %v3075
      %v3077 = vadd.f32 %v3076, 0.112945676
      %v3078 = vmul.f32 %v3060, %v3077
      %v3079 = vadd.f32 %v3078, 0.4994258
      %v3080 = vmul.f32 %v3060, %v3079
      %v3081 = vadd.f32 %v3080, 1.0
      %v3082 = vrcp.pop %v3081
      %v3083 = vmul.f32 %v3081, %v3082
      %v3084 = vsub.f32 1.0, %v3083
      %v3085 = vmul.f32 %v3082, %v3084
      %v3086 = vadd.f32 %v3082, %v3085
      %vm3087 = vweird.f32 %v3081
      %vm3088 = vweird.f32 %v3082
      %vm3089 = vmor %vm3087, %vm3088
      %v3090 = vsel %vm3089, %v3082, %v3086
      %v3091 = vand.u32 2147483647, %v3081
      %vm3092 = vcmp.eq.f32.partialorder %v3091, 8.507059e+37
      %v3093 = vand.u32 %v3081, 2147483648
      %v3094 = vor.u32 1.1754944e-38, %v3093
      %v3095 = vsel %vm3092, %v3094, %v3090
      %v3096 = vmul.f32 %v3071, %v3095
      %v3097 = vmin.f32 %v3096, 1.0
      %v3098 = vmax.f32 %v3097, -1.0
      %v3099 = vmul.f32 %v1897, %v1897
      %v3100 = vmin.f32 16.0, %v3099
      %v3101 = vmul.f32 %v3100, 2.1237322e-06
      %v3102 = vadd.f32 %v3101, 0.00028619796
      %v3103 = vmul.f32 %v3100, %v3102
      %v3104 = vadd.f32 %v3103, 0.0036580483
      %v3105 = vmul.f32 %v3100, %v3104
      %v3106 = vadd.f32 %v3105, 0.05243302
      %v3107 = vmul.f32 %v3100, %v3106
      %v3108 = vadd.f32 %v3107, 0.18741608
      %v3109 = vmul.f32 %v3100, %v3108
      %v3110 = vadd.f32 %v3109, 1.1283791
      %v3111 = vmul.f32 %v1897, %v3110
      %v3112 = vmul.f32 %v3100, 3.8918573e-05
      %v3113 = vadd.f32 %v3112, 0.001143296
      %v3114 = vmul.f32 %v3100, %v3113
      %v3115 = vadd.f32 %v3114, 0.014752088
      %v3116 = vmul.f32 %v3100, %v3115
      %v3117 = vadd.f32 %v3116, 0.112945676
      %v3118 = vmul.f32 %v3100, %v3117
      %v3119 = vadd.f32 %v3118, 0.4994258
      %v3120 = vmul.f32 %v3100, %v3119
      %v3121 = vadd.f32 %v3120, 1.0
      %v3122 = vrcp.pop %v3121
      %v3123 = vmul.f32 %v3121, %v3122
      %v3124 = vsub.f32 1.0, %v3123
      %v3125 = vmul.f32 %v3122, %v3124
      %v3126 = vadd.f32 %v3122, %v3125
      %vm3127 = vweird.f32 %v3121
      %vm3128 = vweird.f32 %v3122
      %vm3129 = vmor %vm3127, %vm3128
      %v3130 = vsel %vm3129, %v3122, %v3126
      %v3131 = vand.u32 2147483647, %v3121
      %vm3132 = vcmp.eq.f32.partialorder %v3131, 8.507059e+37
      %v3133 = vand.u32 %v3121, 2147483648
      %v3134 = vor.u32 1.1754944e-38, %v3133
      %v3135 = vsel %vm3132, %v3134, %v3130
      %v3136 = vmul.f32 %v3111, %v3135
      %v3137 = vmin.f32 %v3136, 1.0
      %v3138 = vmax.f32 %v3137, -1.0
      %v3139 = vmul.f32 %v1898, %v1898
      %v3140 = vmin.f32 16.0, %v3139
      %v3141 = vmul.f32 %v3140, 2.1237322e-06
      %v3142 = vadd.f32 %v3141, 0.00028619796
      %v3143 = vmul.f32 %v3140, %v3142
      %v3144 = vadd.f32 %v3143, 0.0036580483
      %v3145 = vmul.f32 %v3140, %v3144
      %v3146 = vadd.f32 %v3145, 0.05243302
      %v3147 = vmul.f32 %v3140, %v3146
      %v3148 = vadd.f32 %v3147, 0.18741608
      %v3149 = vmul.f32 %v3140, %v3148
      %v3150 = vadd.f32 %v3149, 1.1283791
      %v3151 = vmul.f32 %v1898, %v3150
      %v3152 = vmul.f32 %v3140, 3.8918573e-05
      %v3153 = vadd.f32 %v3152, 0.001143296
      %v3154 = vmul.f32 %v3140, %v3153
      %v3155 = vadd.f32 %v3154, 0.014752088
      %v3156 = vmul.f32 %v3140, %v3155
      %v3157 = vadd.f32 %v3156, 0.112945676
      %v3158 = vmul.f32 %v3140, %v3157
      %v3159 = vadd.f32 %v3158, 0.4994258
      %v3160 = vmul.f32 %v3140, %v3159
      %v3161 = vadd.f32 %v3160, 1.0
      %v3162 = vrcp.pop %v3161
      %v3163 = vmul.f32 %v3161, %v3162
      %v3164 = vsub.f32 1.0, %v3163
      %v3165 = vmul.f32 %v3162, %v3164
      %v3166 = vadd.f32 %v3162, %v3165
      %vm3167 = vweird.f32 %v3161
      %vm3168 = vweird.f32 %v3162
      %vm3169 = vmor %vm3167, %vm3168
      %v3170 = vsel %vm3169, %v3162, %v3166
      %v3171 = vand.u32 2147483647, %v3161
      %vm3172 = vcmp.eq.f32.partialorder %v3171, 8.507059e+37
      %v3173 = vand.u32 %v3161, 2147483648
      %v3174 = vor.u32 1.1754944e-38, %v3173
      %v3175 = vsel %vm3172, %v3174, %v3170
      %v3176 = vmul.f32 %v3151, %v3175
      %v3177 = vmin.f32 %v3176, 1.0
      %v3178 = vmax.f32 %v3177, -1.0
      %v3179 = vadd.f32 %v1938, 1.0
      %v3180 = vadd.f32 %v1978, 1.0
      %v3181 = vadd.f32 %v2018, 1.0
      %v3182 = vadd.f32 %v2058, 1.0
      %v3183 = vadd.f32 %v2098, 1.0
      %v3184 = vadd.f32 %v2138, 1.0
      %v3185 = vadd.f32 %v2178, 1.0
      %v3186 = vadd.f32 %v2218, 1.0
      %v3187 = vadd.f32 %v2258, 1.0
      %v3188 = vadd.f32 %v2298, 1.0
      %v3189 = vadd.f32 %v2338, 1.0
      %v3190 = vadd.f32 %v2378, 1.0
      %v3191 = vadd.f32 %v2418, 1.0
      %v3192 = vadd.f32 %v2458, 1.0
      %v3193 = vadd.f32 %v2498, 1.0
      %v3194 = vadd.f32 %v2538, 1.0
      %v3195 = vadd.f32 %v2578, 1.0
      %v3196 = vadd.f32 %v2618, 1.0
      %v3197 = vadd.f32 %v2658, 1.0
      %v3198 = vadd.f32 %v2698, 1.0
      %v3199 = vadd.f32 %v2738, 1.0
      %v3200 = vadd.f32 %v2778, 1.0
      %v3201 = vadd.f32 %v2818, 1.0
      %v3202 = vadd.f32 %v2858, 1.0
      %v3203 = vadd.f32 %v2898, 1.0
      %v3204 = vadd.f32 %v2938, 1.0
      %v3205 = vadd.f32 %v2978, 1.0
      %v3206 = vadd.f32 %v3018, 1.0
      %v3207 = vadd.f32 %v3058, 1.0
      %v3208 = vadd.f32 %v3098, 1.0
      %v3209 = vadd.f32 %v3138, 1.0
      %v3210 = vadd.f32 %v3178, 1.0
      %v3211 = vmul.f32 %v1835, %v3179
      %v3212 = vmul.f32 %v1836, %v3180
      %v3213 = vmul.f32 %v1837, %v3181
      %v3214 = vmul.f32 %v1838, %v3182
      %v3215 = vmul.f32 %v1839, %v3183
      %v3216 = vmul.f32 %v1840, %v3184
      %v3217 = vmul.f32 %v1841, %v3185
      %v3218 = vmul.f32 %v1842, %v3186
      %v3219 = vmul.f32 %v1843, %v3187
      %v3220 = vmul.f32 %v1844, %v3188
      %v3221 = vmul.f32 %v1845, %v3189
      %v3222 = vmul.f32 %v1846, %v3190
      %v3223 = vmul.f32 %v1847, %v3191
      %v3224 = vmul.f32 %v1848, %v3192
      %v3225 = vmul.f32 %v1849, %v3193
      %v3226 = vmul.f32 %v1850, %v3194
      %v3227 = vmul.f32 %v1851, %v3195
      %v3228 = vmul.f32 %v1852, %v3196
      %v3229 = vmul.f32 %v1853, %v3197
      %v3230 = vmul.f32 %v1854, %v3198
      %v3231 = vmul.f32 %v1855, %v3199
      %v3232 = vmul.f32 %v1856, %v3200
      %v3233 = vmul.f32 %v1857, %v3201
      %v3234 = vmul.f32 %v1858, %v3202
      %v3235 = vmul.f32 %v1859, %v3203
      %v3236 = vmul.f32 %v1860, %v3204
      %v3237 = vmul.f32 %v1861, %v3205
      %v3238 = vmul.f32 %v1862, %v3206
      %v3239 = vmul.f32 %v1863, %v3207
      %v3240 = vmul.f32 %v1864, %v3208
      %v3241 = vmul.f32 %v1865, %v3209
      %v3242 = vmul.f32 %v1866, %v3210
      %v3243 = vpack.c.bf16 %v3212, %v3211
      %v3244 = vpack.c.bf16 %v3214, %v3213
      %v3245 = vpack.c.bf16 %v3216, %v3215
      %v3246 = vpack.c.bf16 %v3218, %v3217
      %v3247 = vpack.c.bf16 %v3220, %v3219
      %v3248 = vpack.c.bf16 %v3222, %v3221
      %v3249 = vpack.c.bf16 %v3224, %v3223
      %v3250 = vpack.c.bf16 %v3226, %v3225
      %v3251 = vpack.c.bf16 %v3228, %v3227
      %v3252 = vpack.c.bf16 %v3230, %v3229
      %v3253 = vpack.c.bf16 %v3232, %v3231
      %v3254 = vpack.c.bf16 %v3234, %v3233
      %v3255 = vpack.c.bf16 %v3236, %v3235
      %v3256 = vpack.c.bf16 %v3238, %v3237
      %v3257 = vpack.c.bf16 %v3240, %v3239
      %v3258 = vpack.c.bf16 %v3242, %v3241
      %v3259 = vld [vmem:[%s8] sm:$0xf]
      %v3260 = vld [vmem:[%s8 + $0x4] sm:$0xf]
      %v3261 = vld [vmem:[%s8 + $0x8] sm:$0xf]
      %v3262 = vld [vmem:[%s8 + $0xc] sm:$0xf]
      %v3263 = vld [vmem:[%s9] sm:$0x1]
      %v3265 = vperm.slane %v3263, 0
      %v3271 = vunpack.c.l.b16 %v3259
      %v3272 = vunpack.c.l.b16 %v3260
      %v3273 = vunpack.c.l.b16 %v3261
      %v3274 = vunpack.c.l.b16 %v3262
      %v3275 = vpack.c.b16 %v3272, %v3271
      %v3276 = vpack.c.b16 %v3274, %v3273
      %vm3279 = vcmask 261120
      %v3281 = vsel %vm3279, %v3243, 0
      %v3284 = vsel %vm3279, %v3244, 0
      %v3287 = vsel %vm3279, %v3245, 0
      %v3290 = vsel %vm3279, %v3246, 0
      %v3293 = vsel %vm3279, %v3247, 0
      %v3296 = vsel %vm3279, %v3248, 0
      %v3299 = vsel %vm3279, %v3249, 0
      %v3302 = vsel %vm3279, %v3250, 0
      %v3305 = vsel %vm3279, %v3251, 0
      %v3308 = vsel %vm3279, %v3252, 0
      %v3311 = vsel %vm3279, %v3253, 0
      %v3314 = vsel %vm3279, %v3254, 0
      %v3317 = vsel %vm3279, %v3255, 0
      %v3320 = vsel %vm3279, %v3256, 0
      %v3323 = vsel %vm3279, %v3257, 0
      %v3326 = vsel %vm3279, %v3258, 0
      %3328 = vmatpush.bf16.msra.mxu0 0
      %3329 = vmatpush.bf16.msra.mxu0 0
      %3330 = vmatpush.bf16.msra.mxu0 0
      %3331 = vmatpush.bf16.msra.mxu0 0
      %3332 = vmatpush.bf16.msra.mxu0 0
      %3333 = vmatpush.bf16.msra.mxu0 0
      %3334 = vmatpush.bf16.msra.mxu0 %v3276
      %3335 = vmatpush.bf16.msra.mxu0 %v3275
      %3336 = vmatmul.bf16.gmra.mxu0 %v3281
      %v3337 = vpop.f32.mrf.mxu0
      %v3338 = vadd.f32 %v3265, %v3337
      %v3339 = vpop.f32.mrf.mxu0
      %v3340 = vadd.f32 %v3265, %v3339
      %3341 = vmatmul.bf16.gmra.mxu0 %v3284
      %v3342 = vpop.f32.mrf.mxu0
      %v3343 = vadd.f32 %v3265, %v3342
      %v3344 = vpop.f32.mrf.mxu0
      %v3345 = vadd.f32 %v3265, %v3344
      %3346 = vmatmul.bf16.gmra.mxu0 %v3287
      %v3347 = vpop.f32.mrf.mxu0
      %v3348 = vadd.f32 %v3265, %v3347
      %v3349 = vpop.f32.mrf.mxu0
      %v3350 = vadd.f32 %v3265, %v3349
      %3351 = vmatmul.bf16.gmra.mxu0 %v3290
      %v3352 = vpop.f32.mrf.mxu0
      %v3353 = vadd.f32 %v3265, %v3352
      %v3354 = vpop.f32.mrf.mxu0
      %v3355 = vadd.f32 %v3265, %v3354
      %3356 = vmatmul.bf16.gmra.mxu0 %v3293
      %v3357 = vpop.f32.mrf.mxu0
      %v3358 = vadd.f32 %v3265, %v3357
      %v3359 = vpop.f32.mrf.mxu0
      %v3360 = vadd.f32 %v3265, %v3359
      %3361 = vmatmul.bf16.gmra.mxu0 %v3296
      %v3362 = vpop.f32.mrf.mxu0
      %v3363 = vadd.f32 %v3265, %v3362
      %v3364 = vpop.f32.mrf.mxu0
      %v3365 = vadd.f32 %v3265, %v3364
      %3366 = vmatmul.bf16.gmra.mxu0 %v3299
      %v3367 = vpop.f32.mrf.mxu0
      %v3368 = vadd.f32 %v3265, %v3367
      %v3369 = vpop.f32.mrf.mxu0
      %v3370 = vadd.f32 %v3265, %v3369
      %3371 = vmatmul.bf16.gmra.mxu0 %v3302
      %v3372 = vpop.f32.mrf.mxu0
      %v3373 = vadd.f32 %v3265, %v3372
      %v3374 = vpop.f32.mrf.mxu0
      %v3375 = vadd.f32 %v3265, %v3374
      %3376 = vmatmul.bf16.gmra.mxu0 %v3305
      %v3377 = vpop.f32.mrf.mxu0
      %v3378 = vadd.f32 %v3265, %v3377
      %v3379 = vpop.f32.mrf.mxu0
      %v3380 = vadd.f32 %v3265, %v3379
      %3381 = vmatmul.bf16.gmra.mxu0 %v3308
      %v3382 = vpop.f32.mrf.mxu0
      %v3383 = vadd.f32 %v3265, %v3382
      %v3384 = vpop.f32.mrf.mxu0
      %v3385 = vadd.f32 %v3265, %v3384
      %3386 = vmatmul.bf16.gmra.mxu0 %v3311
      %v3387 = vpop.f32.mrf.mxu0
      %v3388 = vadd.f32 %v3265, %v3387
      %v3389 = vpop.f32.mrf.mxu0
      %v3390 = vadd.f32 %v3265, %v3389
      %3391 = vmatmul.bf16.gmra.mxu0 %v3314
      %v3392 = vpop.f32.mrf.mxu0
      %v3393 = vadd.f32 %v3265, %v3392
      %v3394 = vpop.f32.mrf.mxu0
      %v3395 = vadd.f32 %v3265, %v3394
      %3396 = vmatmul.bf16.gmra.mxu0 %v3317
      %v3397 = vpop.f32.mrf.mxu0
      %v3398 = vadd.f32 %v3265, %v3397
      %v3399 = vpop.f32.mrf.mxu0
      %v3400 = vadd.f32 %v3265, %v3399
      %3401 = vmatmul.bf16.gmra.mxu0 %v3320
      %v3402 = vpop.f32.mrf.mxu0
      %v3403 = vadd.f32 %v3265, %v3402
      %v3404 = vpop.f32.mrf.mxu0
      %v3405 = vadd.f32 %v3265, %v3404
      %3406 = vmatmul.bf16.gmra.mxu0 %v3323
      %v3407 = vpop.f32.mrf.mxu0
      %v3408 = vadd.f32 %v3265, %v3407
      %v3409 = vpop.f32.mrf.mxu0
      %v3410 = vadd.f32 %v3265, %v3409
      %3411 = vmatmul.bf16.gmra.mxu0 %v3326
      %v3412 = vpop.f32.mrf.mxu0
      %v3413 = vadd.f32 %v3265, %v3412
      %v3414 = vpop.f32.mrf.mxu0
      %v3415 = vadd.f32 %v3265, %v3414
      %3416 = vdwg.mxu0
      %v3417 = vld [vmem:[%s10] sm:$0x1]
      %v3419 = vperm.slane %v3417, 0
      %v3421 = vmul.f32 %v3338, %v3419
      %v3422 = vmul.f32 %v3340, %v3419
      %v3423 = vmul.f32 %v3343, %v3419
      %v3424 = vmul.f32 %v3345, %v3419
      %v3425 = vmul.f32 %v3348, %v3419
      %v3426 = vmul.f32 %v3350, %v3419
      %v3427 = vmul.f32 %v3353, %v3419
      %v3428 = vmul.f32 %v3355, %v3419
      %v3429 = vmul.f32 %v3358, %v3419
      %v3430 = vmul.f32 %v3360, %v3419
      %v3431 = vmul.f32 %v3363, %v3419
      %v3432 = vmul.f32 %v3365, %v3419
      %v3433 = vmul.f32 %v3368, %v3419
      %v3434 = vmul.f32 %v3370, %v3419
      %v3435 = vmul.f32 %v3373, %v3419
      %v3436 = vmul.f32 %v3375, %v3419
      %v3437 = vmul.f32 %v3378, %v3419
      %v3438 = vmul.f32 %v3380, %v3419
      %v3439 = vmul.f32 %v3383, %v3419
      %v3440 = vmul.f32 %v3385, %v3419
      %v3441 = vmul.f32 %v3388, %v3419
      %v3442 = vmul.f32 %v3390, %v3419
      %v3443 = vmul.f32 %v3393, %v3419
      %v3444 = vmul.f32 %v3395, %v3419
      %v3445 = vmul.f32 %v3398, %v3419
      %v3446 = vmul.f32 %v3400, %v3419
      %v3447 = vmul.f32 %v3403, %v3419
      %v3448 = vmul.f32 %v3405, %v3419
      %v3449 = vmul.f32 %v3408, %v3419
      %v3450 = vmul.f32 %v3410, %v3419
      %v3451 = vmul.f32 %v3413, %v3419
      %v3452 = vmul.f32 %v3415, %v3419
      %v3453 = vld [vmem:[%s438] sm:$0xff]
      %v3454 = vld [vmem:[%s438 + $0x8] sm:$0xff]
      %v3455 = vld [vmem:[%s438 + $0x10] sm:$0xff]
      %v3456 = vld [vmem:[%s438 + $0x18] sm:$0xff]
      %v3457 = vld [vmem:[%s438 + $0x20] sm:$0xff]
      %v3458 = vld [vmem:[%s438 + $0x28] sm:$0xff]
      %v3459 = vld [vmem:[%s438 + $0x30] sm:$0xff]
      %v3460 = vld [vmem:[%s438 + $0x38] sm:$0xff]
      %v3461 = vld [vmem:[%s438 + $0x40] sm:$0xff]
      %v3462 = vld [vmem:[%s438 + $0x48] sm:$0xff]
      %v3463 = vld [vmem:[%s438 + $0x50] sm:$0xff]
      %v3464 = vld [vmem:[%s438 + $0x58] sm:$0xff]
      %v3465 = vld [vmem:[%s438 + $0x60] sm:$0xff]
      %v3466 = vld [vmem:[%s438 + $0x68] sm:$0xff]
      %v3467 = vld [vmem:[%s438 + $0x70] sm:$0xff]
      %v3468 = vld [vmem:[%s438 + $0x78] sm:$0xff]
      %v3469 = vld [vmem:[%s438 + $0x80] sm:$0xff]
      %v3470 = vld [vmem:[%s438 + $0x88] sm:$0xff]
      %v3471 = vld [vmem:[%s438 + $0x90] sm:$0xff]
      %v3472 = vld [vmem:[%s438 + $0x98] sm:$0xff]
      %v3473 = vld [vmem:[%s438 + $0xa0] sm:$0xff]
      %v3474 = vld [vmem:[%s438 + $0xa8] sm:$0xff]
      %v3475 = vld [vmem:[%s438 + $0xb0] sm:$0xff]
      %v3476 = vld [vmem:[%s438 + $0xb8] sm:$0xff]
      %v3477 = vld [vmem:[%s438 + $0xc0] sm:$0xff]
      %v3478 = vld [vmem:[%s438 + $0xc8] sm:$0xff]
      %v3479 = vld [vmem:[%s438 + $0xd0] sm:$0xff]
      %v3480 = vld [vmem:[%s438 + $0xd8] sm:$0xff]
      %v3481 = vld [vmem:[%s438 + $0xe0] sm:$0xff]
      %v3482 = vld [vmem:[%s438 + $0xe8] sm:$0xff]
      %v3483 = vld [vmem:[%s438 + $0xf0] sm:$0xff]
      %v3484 = vld [vmem:[%s438 + $0xf8] sm:$0xff]
      %v3485 = vadd.f32 %v3453, %v3421
      %v3486 = vadd.f32 %v3454, %v3422
      %v3487 = vadd.f32 %v3455, %v3423
      %v3488 = vadd.f32 %v3456, %v3424
      %v3489 = vadd.f32 %v3457, %v3425
      %v3490 = vadd.f32 %v3458, %v3426
      %v3491 = vadd.f32 %v3459, %v3427
      %v3492 = vadd.f32 %v3460, %v3428
      %v3493 = vadd.f32 %v3461, %v3429
      %v3494 = vadd.f32 %v3462, %v3430
      %v3495 = vadd.f32 %v3463, %v3431
      %v3496 = vadd.f32 %v3464, %v3432
      %v3497 = vadd.f32 %v3465, %v3433
      %v3498 = vadd.f32 %v3466, %v3434
      %v3499 = vadd.f32 %v3467, %v3435
      %v3500 = vadd.f32 %v3468, %v3436
      %v3501 = vadd.f32 %v3469, %v3437
      %v3502 = vadd.f32 %v3470, %v3438
      %v3503 = vadd.f32 %v3471, %v3439
      %v3504 = vadd.f32 %v3472, %v3440
      %v3505 = vadd.f32 %v3473, %v3441
      %v3506 = vadd.f32 %v3474, %v3442
      %v3507 = vadd.f32 %v3475, %v3443
      %v3508 = vadd.f32 %v3476, %v3444
      %v3509 = vadd.f32 %v3477, %v3445
      %v3510 = vadd.f32 %v3478, %v3446
      %v3511 = vadd.f32 %v3479, %v3447
      %v3512 = vadd.f32 %v3480, %v3448
      %v3513 = vadd.f32 %v3481, %v3449
      %v3514 = vadd.f32 %v3482, %v3450
      %v3515 = vadd.f32 %v3483, %v3451
      %v3516 = vadd.f32 %v3484, %v3452
      %3517 = vst.msk [vmem:[%s456] sm:$0xff] %vm459, %v3485
      %3518 = vst.msk [vmem:[%s456 + $0x8] sm:$0xff] %vm459, %v3486
      %3519 = vst.msk [vmem:[%s456 + $0x10] sm:$0xff] %vm459, %v3487
      %3520 = vst.msk [vmem:[%s456 + $0x18] sm:$0xff] %vm459, %v3488
      %3521 = vst.msk [vmem:[%s456 + $0x20] sm:$0xff] %vm459, %v3489
      %3522 = vst.msk [vmem:[%s456 + $0x28] sm:$0xff] %vm459, %v3490
      %3523 = vst.msk [vmem:[%s456 + $0x30] sm:$0xff] %vm459, %v3491
      %3524 = vst.msk [vmem:[%s456 + $0x38] sm:$0xff] %vm459, %v3492
      %3525 = vst.msk [vmem:[%s456 + $0x40] sm:$0xff] %vm459, %v3493
      %3526 = vst.msk [vmem:[%s456 + $0x48] sm:$0xff] %vm459, %v3494
      %3527 = vst.msk [vmem:[%s456 + $0x50] sm:$0xff] %vm459, %v3495
      %3528 = vst.msk [vmem:[%s456 + $0x58] sm:$0xff] %vm459, %v3496
      %3529 = vst.msk [vmem:[%s456 + $0x60] sm:$0xff] %vm459, %v3497
      %3530 = vst.msk [vmem:[%s456 + $0x68] sm:$0xff] %vm459, %v3498
      %3531 = vst.msk [vmem:[%s456 + $0x70] sm:$0xff] %vm459, %v3499
      %3532 = vst.msk [vmem:[%s456 + $0x78] sm:$0xff] %vm459, %v3500
      %3533 = vst.msk [vmem:[%s456 + $0x80] sm:$0xff] %vm459, %v3501
      %3534 = vst.msk [vmem:[%s456 + $0x88] sm:$0xff] %vm459, %v3502
      %3535 = vst.msk [vmem:[%s456 + $0x90] sm:$0xff] %vm459, %v3503
      %3536 = vst.msk [vmem:[%s456 + $0x98] sm:$0xff] %vm459, %v3504
      %3537 = vst.msk [vmem:[%s456 + $0xa0] sm:$0xff] %vm459, %v3505
      %3538 = vst.msk [vmem:[%s456 + $0xa8] sm:$0xff] %vm459, %v3506
      %3539 = vst.msk [vmem:[%s456 + $0xb0] sm:$0xff] %vm459, %v3507
      %3540 = vst.msk [vmem:[%s456 + $0xb8] sm:$0xff] %vm459, %v3508
      %3541 = vst.msk [vmem:[%s456 + $0xc0] sm:$0xff] %vm459, %v3509
      %3542 = vst.msk [vmem:[%s456 + $0xc8] sm:$0xff] %vm459, %v3510
      %3543 = vst.msk [vmem:[%s456 + $0xd0] sm:$0xff] %vm459, %v3511
      %3544 = vst.msk [vmem:[%s456 + $0xd8] sm:$0xff] %vm459, %v3512
      %3545 = vst.msk [vmem:[%s456 + $0xe0] sm:$0xff] %vm459, %v3513
      %3546 = vst.msk [vmem:[%s456 + $0xe8] sm:$0xff] %vm459, %v3514
      %3547 = vst.msk [vmem:[%s456 + $0xf0] sm:$0xff] %vm459, %v3515
      %3548 = vst.msk [vmem:[%s456 + $0xf8] sm:$0xff] %vm459, %v3516
      %s3549 = smul.u32 16, %s27
      %p3550 = scmp.lt.s32.totalorder %s26, 1
      %s3551 = scalar_select %p3550, %s26, 1
      %p3552 = scmp.lt.s32.totalorder %s3549, 15
      %s3553 = scalar_select %p3552, %s3549, 15
      %s3554 = smul.addr %s3553, 2
      %s3555 = smul.addr %s3551, 32
      %s3556 = sadd.s32 %s3554, %s3555
      %s3557 = smul.addr %s3556, 8
      %s3558 = scalar_lea.vmem %s11, %s3557
      // Predicated region
      $region72: #{tpu_custom_call.1} parent=63 // pred_check
        %p3559 = pneg %p299
      $region73: #{tpu_custom_call.1} parent=63 // pred_check_branch
        %3561 = sbr.rel (%p3559) target = $region75
      $region74: #{tpu_custom_call.1} parent=63 // pred_region
        %s3562 = smul.u32 16, %s27
      $region75: #{tpu_custom_call.1} parent=63 // pred_fallthru
        _
    $region64: #{tpu_custom_call.1} parent=5 // pred_fallthru
      _
    %p3563 = scmp.le.s32.totalorder 2, %s17
    // Predicated region
    $region76: #{tpu_custom_call.1} parent=5 // pred_check
      %p3564 = pneg %p3563
    $region77: #{tpu_custom_call.1} parent=5 // pred_check_branch
      %3566 = sbr.rel (%p3564) target = $region79
    $region78: #{tpu_custom_call.1} parent=5 // pred_region
      %s3567 = ssub.s32 %s17, 2
      // Predicated region
      $region80: #{tpu_custom_call.1} parent=78 // pred_check
        %p3568 = pneg %p305
      $region81: #{tpu_custom_call.1} parent=78 // pred_check_branch
        %3570 = sbr.rel (%p3568) target = $region83
      $region82: #{tpu_custom_call.1} parent=78 // pred_region
        %s3571 = smul.u32 16, %s29
        %p3572 = scmp.lt.s32.totalorder %s28, 1
        %s3573 = scalar_select %p3572, %s28, 1
        %p3574 = scmp.lt.s32.totalorder %s3571, 15
        %s3575 = scalar_select %p3574, %s3571, 15
        %s3576 = smul.addr %s3575, 2
        %s3577 = smul.addr %s3573, 32
        %s3578 = sadd.s32 %s3576, %s3577
        %s3579 = smul.addr %s3578, 8
        %s3580 = scalar_lea.vmem %s11, %s3579
      $region83: #{tpu_custom_call.1} parent=78 // pred_fallthru
        _
    $region79: #{tpu_custom_call.1} parent=5 // pred_fallthru
      _
  $region6: #{tpu_custom_call.1} parent=0 // loop_footer
    %s21 = sadd.s32 1, %s17
  $region7: #{tpu_custom_call.1} parent=0 // loop_footer_branch
    %16 = sbr.rel target = $region3
  $region8: #{tpu_custom_call.1} parent=0 // loop_exit
    _

</llo_original>
